<compile_context>
chip_gen: v7x
topology: tpu7x:2x2x1
jax: 0.10.0
libtpu: 0.0.40
codegen_flags: <defaults>
</compile_context>

<pallas_src>
import jax
import jax.numpy as jnp
from jax import lax
from jax.experimental import pallas as pl
from jax.experimental.pallas import tpu as pltpu

EPS = 1e-5        # PyTorch BatchNorm default eps
IN_FEATURES = 26
HIDDEN = 1024
OUT_FEATURES = 2
OUT_PAD = 128     # lane-dense padded output width (true out features = 2)


def _fused_mlp_kernel(x_ref,                   # VMEM (TM, 26)  f32
                      w1_ref, b1_ref,          # VMEM (26, 1024) bf16, (1, 1024) f32
                      w2_ref, b2_ref,          # VMEM (1024, 1024) bf16, (1, 1024) f32
                      w3_ref, b3_ref,          # VMEM (1024, 128) bf16, (1, 128) f32
                      o_ref):                  # VMEM (TM, 128) f32
    # linear1 (+ folded BN1): bf16 MXU inputs, f32 accumulation, f32 bias add.
    h = jnp.dot(x_ref[...].astype(jnp.bfloat16), w1_ref[...],
                preferred_element_type=jnp.float32) + b1_ref[...]
    # dropout1: identity in eval mode.

    # linear2 (+ folded BN2)
    h = jnp.dot(h.astype(jnp.bfloat16), w2_ref[...],
                preferred_element_type=jnp.float32) + b2_ref[...]
    # dropout2: identity in eval mode.

    # out + ReLU (lane-padded to 128; pad columns are all-zero, sliced off in wrapper)
    out = jnp.dot(h.astype(jnp.bfloat16), w3_ref[...],
                  preferred_element_type=jnp.float32) + b3_ref[...]
    o_ref[...] = jnp.maximum(out, 0.0)


def fold_and_pack_params(params):
    """One-off plain-JAX preprocessing: fold eval-mode BN1/BN2 into the Linear
    weights/biases, cast weights to bf16, and zero-pad the (1024, 2) output layer
    to (1024, 128) for a lane-dense store."""
    bn, w1, b1, w2, b2, w3, b3 = params
    g1, be1, rm1, rv1, g2, be2, rm2, rv2 = (bn[i] for i in range(8))
    s1 = g1 * lax.rsqrt(rv1 + EPS)
    s2 = g2 * lax.rsqrt(rv2 + EPS)
    w1f = w1 * s1
    b1f = (b1 - rm1) * s1 + be1
    w2f = w2 * s2
    b2f = (b2 - rm2) * s2 + be2
    w3p = jnp.zeros((HIDDEN, OUT_PAD), jnp.float32).at[:, :OUT_FEATURES].set(w3)
    b3p = jnp.zeros((1, OUT_PAD), jnp.float32).at[:, :OUT_FEATURES].set(b3)
    return (w1f.astype(jnp.bfloat16), b1f.astype(jnp.float32),
            w2f.astype(jnp.bfloat16), b2f.astype(jnp.float32),
            w3p.astype(jnp.bfloat16), b3p.astype(jnp.float32))


def _choose_tile_m(batch):
    # >=256 fills the v6e/v7x 256-wide MXU rows; multiples of 128 are enough on v5e.
    if batch >= 512:
        return 512
    if batch >= 256:
        return 256
    return max(8, -(-batch // 8) * 8)   # small batch: single tile, 8-sublane aligned


def testmodel2_forward(x, folded_params):
    """x: (B, 1, 26) float32 (PyTorch N, C, L layout). Returns (B, 2) float32."""
    w1, b1, w2, b2, w3p, b3p = folded_params
    B = x.shape[0]
    x2d = x.reshape(B, IN_FEATURES).astype(jnp.float32)

    tm = _choose_tile_m(B)
    b_pad = -(-B // tm) * tm
    if b_pad != B:
        x2d = jnp.pad(x2d, ((0, b_pad - B), (0, 0)))
    grid = (b_pad // tm,)

    const = lambda i: (0, 0)          # weights: same block every step -> VMEM-resident
    out = pl.pallas_call(
        _fused_mlp_kernel,
        out_shape=jax.ShapeDtypeStruct((b_pad, OUT_PAD), jnp.float32),
        grid_spec=pltpu.PrefetchScalarGridSpec(
            num_scalar_prefetch=0,
            grid=grid,
            in_specs=[
                pl.BlockSpec((tm, IN_FEATURES), lambda i: (i, 0)),
                pl.BlockSpec((IN_FEATURES, HIDDEN), const),
                pl.BlockSpec((1, HIDDEN), const),
                pl.BlockSpec((HIDDEN, HIDDEN), const),
                pl.BlockSpec((1, HIDDEN), const),
                pl.BlockSpec((HIDDEN, OUT_PAD), const),
                pl.BlockSpec((1, OUT_PAD), const),
            ],
            out_specs=pl.BlockSpec((tm, OUT_PAD), lambda i: (i, 0)),
        ),
        compiler_params=pltpu.CompilerParams(
            dimension_semantics=("parallel",),
            vmem_limit_bytes=32 << 20,
        ),
    )(x2d, w1, b1, w2, b2, w3p, b3p)
    return out[:B, :OUT_FEATURES]     # == output.view(B, -1) of the reference


def init_params(key):
    """Deterministic init mimicking nn.Linear default (uniform +-1/sqrt(fan_in))."""
    def linear_init(k, fan_in, fan_out):
        bound = 1.0 / (fan_in ** 0.5)
        kw, kb = jax.random.split(k)
        w = jax.random.uniform(kw, (fan_in, fan_out), jnp.float32, -bound, bound)
        b = jax.random.uniform(kb, (1, fan_out), jnp.float32, -bound, bound)
        return w, b

    k1, k2, k3 = jax.random.split(key, 3)
    w1, b1 = linear_init(k1, IN_FEATURES, HIDDEN)
    w2, b2 = linear_init(k2, HIDDEN, HIDDEN)
    w3, b3 = linear_init(k3, HIDDEN, OUT_FEATURES)
    # BatchNorm1d(1) fresh init: gamma=1, beta=0, running_mean=0, running_var=1 (x2)
    bn_scalars = jnp.array([1.0, 0.0, 0.0, 1.0, 1.0, 0.0, 0.0, 1.0], dtype=jnp.float32)
    return bn_scalars, w1, b1, w2, b2, w3, b3


def reference_forward_f32(x, params):
    """Pure-JAX full-f32 reference of the original module in eval mode."""
    bn, w1, b1, w2, b2, w3, b3 = params
    h = x.reshape(x.shape[0], IN_FEATURES) @ w1 + b1
    h = (h - bn[2]) * (bn[0] / jnp.sqrt(bn[3] + EPS)) + bn[1]
    h = h @ w2 + b2
    h = (h - bn[6]) * (bn[4] / jnp.sqrt(bn[7] + EPS)) + bn[5]
    return jnp.maximum(h @ w3 + b3, 0.0)


def reference_forward_matched(x, folded_params):
    """Same folded / bf16-weight math in plain JAX (precision-matched check)."""
    w1, b1, w2, b2, w3p, b3p = folded_params
    B = x.shape[0]
    h = jnp.dot(x.reshape(B, IN_FEATURES).astype(jnp.bfloat16), w1,
                preferred_element_type=jnp.float32) + b1
    h = jnp.dot(h.astype(jnp.bfloat16), w2, preferred_element_type=jnp.float32) + b2
    out = jnp.dot(h.astype(jnp.bfloat16), w3p, preferred_element_type=jnp.float32) + b3p
    return jnp.maximum(out, 0.0)[:, :OUT_FEATURES]


if __name__ == "__main__":
    key = jax.random.PRNGKey(0)
    kp, kx = jax.random.split(key)
    params = init_params(kp)
    folded = fold_and_pack_params(params)

    # Input consistent with BatchNorm1d(1): (batch=8, channels=1, features=26)
    x = jax.random.normal(kx, (8, 1, 26), dtype=jnp.float32)

    fwd = jax.jit(testmodel2_forward)
    out = jax.block_until_ready(fwd(x, folded))

    assert out.shape == (8, 2), out.shape
    ref_matched = reference_forward_matched(x, folded)
    assert jnp.allclose(out, ref_matched, atol=1e-4, rtol=1e-4), \
        "mismatch vs precision-matched JAX reference"
    ref_f32 = reference_forward_f32(x, params)
    assert jnp.allclose(out, ref_f32, atol=2e-2, rtol=2e-2), \
        "mismatch vs full-f32 reference (bf16 weight drift too large)"

    print("KERNEL_OK")
</pallas_src>

<mosaic_0001>
module attributes {stable_mosaic.version = 11 : i64} {
  func.func @_fused_mlp_kernel(%arg0: i32, %arg1: memref<8x26xf32, #tpu.memory_space<vmem>>, %arg2: memref<26x1024xbf16, #tpu.memory_space<vmem>>, %arg3: memref<1x1024xf32, #tpu.memory_space<vmem>>, %arg4: memref<1024x1024xbf16, #tpu.memory_space<vmem>>, %arg5: memref<1x1024xf32, #tpu.memory_space<vmem>>, %arg6: memref<1024x128xbf16, #tpu.memory_space<vmem>>, %arg7: memref<1x128xf32, #tpu.memory_space<vmem>>, %arg8: memref<8x128xf32, #tpu.memory_space<vmem>>) attributes {dimension_semantics = [#tpu.dimension_semantics<parallel>], iteration_bounds = array<i64: 1>, scalar_prefetch = 0 : i64, scratch_operands = 0 : i64, tpu.core_type = #tpu.core_type<tc>, window_params = [{transform_indices = @transform_0, window_bounds = array<i64: 8, 26>}, {pipeline_mode = #tpu.pipeline_mode<synchronous>, transform_indices = @transform_1, window_bounds = array<i64: 26, 1024>}, {pipeline_mode = #tpu.pipeline_mode<synchronous>, transform_indices = @transform_2, window_bounds = array<i64: 1, 1024>}, {pipeline_mode = #tpu.pipeline_mode<synchronous>, transform_indices = @transform_3, window_bounds = array<i64: 1024, 1024>}, {pipeline_mode = #tpu.pipeline_mode<synchronous>, transform_indices = @transform_4, window_bounds = array<i64: 1, 1024>}, {pipeline_mode = #tpu.pipeline_mode<synchronous>, transform_indices = @transform_5, window_bounds = array<i64: 1024, 128>}, {pipeline_mode = #tpu.pipeline_mode<synchronous>, transform_indices = @transform_6, window_bounds = array<i64: 1, 128>}, {transform_indices = @transform_7, window_bounds = array<i64: 8, 128>}]} {
    %c0 = arith.constant 0 : index
    %c0_0 = arith.constant 0 : index
    %0 = vector.load %arg1[%c0, %c0_0] : memref<8x26xf32, #tpu.memory_space<vmem>>, vector<8x26xf32>
    %1 = arith.truncf %0 : vector<8x26xf32> to vector<8x26xbf16>
    %c0_1 = arith.constant 0 : index
    %c0_2 = arith.constant 0 : index
    %2 = vector.load %arg2[%c0_1, %c0_2] : memref<26x1024xbf16, #tpu.memory_space<vmem>>, vector<26x1024xbf16>
    %cst = arith.constant dense<0.000000e+00> : vector<8x1024xf32>
    %3 = tpu.matmul %1, %2, %cst {dimension_numbers = #tpu.dot_dimension_numbers<[1], [0], [0], [1], [0, 0, 1, 1], [], []>} : vector<8x26xbf16>, vector<26x1024xbf16>, vector<8x1024xf32> -> vector<8x1024xf32>
    %c0_3 = arith.constant 0 : index
    %c0_4 = arith.constant 0 : index
    %4 = vector.load %arg3[%c0_3, %c0_4] : memref<1x1024xf32, #tpu.memory_space<vmem>>, vector<1x1024xf32>
    %5 = vector.broadcast %4 : vector<1x1024xf32> to vector<8x1024xf32>
    %6 = arith.addf %3, %5 : vector<8x1024xf32>
    %7 = arith.truncf %6 : vector<8x1024xf32> to vector<8x1024xbf16>
    %c0_5 = arith.constant 0 : index
    %c0_6 = arith.constant 0 : index
    %8 = vector.load %arg4[%c0_5, %c0_6] : memref<1024x1024xbf16, #tpu.memory_space<vmem>>, vector<1024x1024xbf16>
    %cst_7 = arith.constant dense<0.000000e+00> : vector<8x1024xf32>
    %9 = tpu.matmul %7, %8, %cst_7 {dimension_numbers = #tpu.dot_dimension_numbers<[1], [0], [0], [1], [0, 0, 1, 1], [], []>} : vector<8x1024xbf16>, vector<1024x1024xbf16>, vector<8x1024xf32> -> vector<8x1024xf32>
    %c0_8 = arith.constant 0 : index
    %c0_9 = arith.constant 0 : index
    %10 = vector.load %arg5[%c0_8, %c0_9] : memref<1x1024xf32, #tpu.memory_space<vmem>>, vector<1x1024xf32>
    %11 = vector.broadcast %10 : vector<1x1024xf32> to vector<8x1024xf32>
    %12 = arith.addf %9, %11 : vector<8x1024xf32>
    %13 = arith.truncf %12 : vector<8x1024xf32> to vector<8x1024xbf16>
    %c0_10 = arith.constant 0 : index
    %c0_11 = arith.constant 0 : index
    %14 = vector.load %arg6[%c0_10, %c0_11] : memref<1024x128xbf16, #tpu.memory_space<vmem>>, vector<1024x128xbf16>
    %cst_12 = arith.constant dense<0.000000e+00> : vector<8x128xf32>
    %15 = tpu.matmul %13, %14, %cst_12 {dimension_numbers = #tpu.dot_dimension_numbers<[1], [0], [0], [1], [0, 0, 1, 1], [], []>} : vector<8x1024xbf16>, vector<1024x128xbf16>, vector<8x128xf32> -> vector<8x128xf32>
    %c0_13 = arith.constant 0 : index
    %c0_14 = arith.constant 0 : index
    %16 = vector.load %arg7[%c0_13, %c0_14] : memref<1x128xf32, #tpu.memory_space<vmem>>, vector<1x128xf32>
    %17 = vector.broadcast %16 : vector<1x128xf32> to vector<8x128xf32>
    %18 = arith.addf %15, %17 : vector<8x128xf32>
    %cst_15 = arith.constant 0.000000e+00 : f32
    %19 = vector.broadcast %cst_15 : f32 to vector<8x128xf32>
    %20 = arith.maximumf %18, %19 : vector<8x128xf32>
    %c0_16 = arith.constant 0 : index
    %c0_17 = arith.constant 0 : index
    %21 = vector.load %arg8[%c0_16, %c0_17] : memref<8x128xf32, #tpu.memory_space<vmem>>, vector<8x128xf32>
    tpu.vector_store %arg8[%c0_16, %c0_17], %20 {strides = array<i32>} : memref<8x128xf32, #tpu.memory_space<vmem>>, vector<8x128xf32>,
    return
  }
  func.func @transform_0(%arg0: i32) -> (i32, i32) {
    %c0_i32 = arith.constant 0 : i32
    %c0_i32_0 = arith.constant 0 : i32
    return %arg0, %c0_i32 : i32, i32
  }
  func.func @transform_1(%arg0: i32) -> (i32, i32) {
    %c0_i32 = arith.constant 0 : i32
    %c0_i32_0 = arith.constant 0 : i32
    %c0_i32_1 = arith.constant 0 : i32
    return %c0_i32, %c0_i32_0 : i32, i32
  }
  func.func @transform_2(%arg0: i32) -> (i32, i32) {
    %c0_i32 = arith.constant 0 : i32
    %c0_i32_0 = arith.constant 0 : i32
    %c0_i32_1 = arith.constant 0 : i32
    return %c0_i32, %c0_i32_0 : i32, i32
  }
  func.func @transform_3(%arg0: i32) -> (i32, i32) {
    %c0_i32 = arith.constant 0 : i32
    %c0_i32_0 = arith.constant 0 : i32
    %c0_i32_1 = arith.constant 0 : i32
    return %c0_i32, %c0_i32_0 : i32, i32
  }
  func.func @transform_4(%arg0: i32) -> (i32, i32) {
    %c0_i32 = arith.constant 0 : i32
    %c0_i32_0 = arith.constant 0 : i32
    %c0_i32_1 = arith.constant 0 : i32
    return %c0_i32, %c0_i32_0 : i32, i32
  }
  func.func @transform_5(%arg0: i32) -> (i32, i32) {
    %c0_i32 = arith.constant 0 : i32
    %c0_i32_0 = arith.constant 0 : i32
    %c0_i32_1 = arith.constant 0 : i32
    return %c0_i32, %c0_i32_0 : i32, i32
  }
  func.func @transform_6(%arg0: i32) -> (i32, i32) {
    %c0_i32 = arith.constant 0 : i32
    %c0_i32_0 = arith.constant 0 : i32
    %c0_i32_1 = arith.constant 0 : i32
    return %c0_i32, %c0_i32_0 : i32, i32
  }
  func.func @transform_7(%arg0: i32) -> (i32, i32) {
    %c0_i32 = arith.constant 0 : i32
    %c0_i32_0 = arith.constant 0 : i32
    return %arg0, %c0_i32 : i32, i32
  }
}

</mosaic_0001>

<llo_original>
// kernel: testmodel2_forward.1
$region0: #{testmodel2_forward.1}
  #allocation0 [shape = 'u32[]', space=smem, size = 0x4, offset = 0x4, fixed_abs, tag = 'smem constant byte address 0x4 - core index']
  #allocation1 [shape = 'u32[144,128]{1,0:T(1,128)}', space=vmem, size = 0x12000, scoped, tag = 'internal scratch']
  %s0 = inlined_call_operand.hbm [shape: f32[8,26], index: 0, kind: input, shape index: {}]
  %s1 = inlined_call_operand.hbm [shape: bf16[26,1024], index: 1, kind: input, shape index: {}]
  %s2 = inlined_call_operand.hbm [shape: f32[1,1024], index: 2, kind: input, shape index: {}]
  %s3 = inlined_call_operand.hbm [shape: bf16[1024,1024], index: 3, kind: input, shape index: {}]
  %s4 = inlined_call_operand.hbm [shape: f32[1,1024], index: 4, kind: input, shape index: {}]
  %s5 = inlined_call_operand.hbm [shape: bf16[1024,128], index: 5, kind: input, shape index: {}]
  %s6 = inlined_call_operand.hbm [shape: f32[1,128], index: 6, kind: input, shape index: {}]
  %s7 = inlined_call_operand.vmem [shape: f32[8,128], index: 7, kind: output, shape index: {}]
  %s8 = sld [smem:[#allocation0]]
  $region66: #{testmodel2_forward.1} parent=0
    _
  %s10 = ssub.s32 1, %s8
  %s11 = scalar_select 0, %s10, %s8
  $region1: #{testmodel2_forward.1} parent=0
    #allocation2 [shape = 'u8[4096]{0}', space=vmem, size = 0x1000, scoped, tag = 'input window, operand 0, single buffered']
    #allocation3 [shape = 's32[1]{0}', space=sflag, size = 0x4, scoped, tag = 'scoped memory for testmodel2_forward.1']
    #allocation4 [shape = 'u8[65536]{0}', space=vmem, size = 0x10000, scoped, tag = 'input window, operand 1, single buffered']
    #allocation5 [shape = 's32[1]{0}', space=sflag, size = 0x4, scoped, tag = 'scoped memory for testmodel2_forward.1']
    #allocation6 [shape = 'u8[4096]{0}', space=vmem, size = 0x1000, scoped, tag = 'input window, operand 2, single buffered']
    #allocation7 [shape = 'u8[2097152]{0}', space=vmem, size = 0x200000, scoped, tag = 'input window, operand 3, single buffered']
    #allocation8 [shape = 's32[1]{0}', space=sflag, size = 0x4, scoped, tag = 'scoped memory for testmodel2_forward.1']
    #allocation9 [shape = 'u8[4096]{0}', space=vmem, size = 0x1000, scoped, tag = 'input window, operand 4, single buffered']
    #allocation10 [shape = 'u8[262144]{0}', space=vmem, size = 0x40000, scoped, tag = 'input window, operand 5, single buffered']
    #allocation11 [shape = 's32[1]{0}', space=sflag, size = 0x4, scoped, tag = 'scoped memory for testmodel2_forward.1']
    #allocation12 [shape = 'u8[512]{0}', space=vmem, size = 0x400, scoped, tag = 'input window, operand 6, single buffered']
    %12 = vsyncpa [#allocation3], 0
    %13 = vsyncpa [#allocation5], 0
    %14 = vsyncpa [#allocation8], 0
    %15 = vsyncpa [#allocation11], 0
    // Predicated region
    $region2: #{testmodel2_forward.1} parent=1 // pred_check
      _
    $region3: #{testmodel2_forward.1} parent=1 // pred_check_branch
      %17 = sbr.rel (0) target = $region5
    $region4: #{testmodel2_forward.1} parent=1 // pred_region
      %s19 = ssub.s32 128, 128
      %20 = vsyncadd [#allocation3], %s19
      %s22 = sshll.u32 [#allocation2], 4
      %s23 = int_to_ptr.vmem [resolvable:$true] %s22
      %25 = dma.hbm_to_vmem [thread:$0]  %s0, 128, %s23, [#allocation3]
    $region5: #{testmodel2_forward.1} parent=1 // pred_fallthru
      _
    // Predicated region
    $region6: #{testmodel2_forward.1} parent=1 // pred_check
      _
    $region7: #{testmodel2_forward.1} parent=1 // pred_check_branch
      %27 = sbr.rel (0) target = $region9
    $region8: #{testmodel2_forward.1} parent=1 // pred_region
      %s29 = ssub.s32 2048, 2048
      %30 = vsyncadd [#allocation5], %s29
      %s31 = sshll.u32 [#allocation4], 4
      %s32 = int_to_ptr.vmem [resolvable:$true] %s31
      %37 = dma.hbm_to_vmem [thread:$0]  %s1, 2048, %s32, [#allocation5], 512, 512, 32
    $region9: #{testmodel2_forward.1} parent=1 // pred_fallthru
      _
    // Predicated region
    $region10: #{testmodel2_forward.1} parent=1 // pred_check
      _
    $region11: #{testmodel2_forward.1} parent=1 // pred_check_branch
      %39 = sbr.rel (0) target = $region13
    $region12: #{testmodel2_forward.1} parent=1 // pred_region
      %s41 = ssub.s32 128, 128
      %42 = vsyncadd [#allocation5], %s41
      %s44 = sshll.u32 [#allocation6], 4
      %s45 = int_to_ptr.vmem [resolvable:$true] %s44
      %47 = dma.hbm_to_vmem [thread:$0]  %s2, 128, %s45, [#allocation5]
    $region13: #{testmodel2_forward.1} parent=1 // pred_fallthru
      _
    // Predicated region
    $region14: #{testmodel2_forward.1} parent=1 // pred_check
      _
    $region15: #{testmodel2_forward.1} parent=1 // pred_check_branch
      %49 = sbr.rel (0) target = $region17
    $region16: #{testmodel2_forward.1} parent=1 // pred_region
      %s51 = ssub.s32 65536, 65536
      %52 = vsyncadd [#allocation8], %s51
      %s53 = sshll.u32 [#allocation7], 4
      %s54 = int_to_ptr.vmem [resolvable:$true] %s53
      %59 = dma.hbm_to_vmem [thread:$0]  %s3, 65536, %s54, [#allocation8], 512, 512, 32
    $region17: #{testmodel2_forward.1} parent=1 // pred_fallthru
      _
    // Predicated region
    $region18: #{testmodel2_forward.1} parent=1 // pred_check
      _
    $region19: #{testmodel2_forward.1} parent=1 // pred_check_branch
      %61 = sbr.rel (0) target = $region21
    $region20: #{testmodel2_forward.1} parent=1 // pred_region
      %s63 = ssub.s32 128, 128
      %64 = vsyncadd [#allocation8], %s63
      %s66 = sshll.u32 [#allocation9], 4
      %s67 = int_to_ptr.vmem [resolvable:$true] %s66
      %69 = dma.hbm_to_vmem [thread:$0]  %s4, 128, %s67, [#allocation8]
    $region21: #{testmodel2_forward.1} parent=1 // pred_fallthru
      _
    // Predicated region
    $region22: #{testmodel2_forward.1} parent=1 // pred_check
      _
    $region23: #{testmodel2_forward.1} parent=1 // pred_check_branch
      %71 = sbr.rel (0) target = $region25
    $region24: #{testmodel2_forward.1} parent=1 // pred_region
      %s73 = ssub.s32 8192, 8192
      %74 = vsyncadd [#allocation11], %s73
      %s75 = sshll.u32 [#allocation10], 4
      %s76 = int_to_ptr.vmem [resolvable:$true] %s75
      %81 = dma.hbm_to_vmem [thread:$0]  %s5, 8192, %s76, [#allocation11], 64, 64, 4
    $region25: #{testmodel2_forward.1} parent=1 // pred_fallthru
      _
    // Predicated region
    $region26: #{testmodel2_forward.1} parent=1 // pred_check
      _
    $region27: #{testmodel2_forward.1} parent=1 // pred_check_branch
      %83 = sbr.rel (0) target = $region29
    $region28: #{testmodel2_forward.1} parent=1 // pred_region
      %s85 = ssub.s32 16, 16
      %86 = vsyncadd [#allocation11], %s85
      %s88 = sshll.u32 [#allocation12], 4
      %s89 = int_to_ptr.vmem [resolvable:$true] %s88
      %91 = dma.hbm_to_vmem [thread:$0]  %s6, 16, %s89, [#allocation11]
    $region29: #{testmodel2_forward.1} parent=1 // pred_fallthru
      _
    // Predicated region
    $region30: #{testmodel2_forward.1} parent=1 // pred_check
      _
    $region31: #{testmodel2_forward.1} parent=1 // pred_check_branch
      %93 = sbr.rel (0) target = $region33
    $region32: #{testmodel2_forward.1} parent=1 // pred_region
      %94 = dma.done [#allocation3], 128
    $region33: #{testmodel2_forward.1} parent=1 // pred_fallthru
      _
    // Predicated region
    $region34: #{testmodel2_forward.1} parent=1 // pred_check
      _
    $region35: #{testmodel2_forward.1} parent=1 // pred_check_branch
      %96 = sbr.rel (0) target = $region37
    $region36: #{testmodel2_forward.1} parent=1 // pred_region
      %97 = dma.done [#allocation5], 2048
    $region37: #{testmodel2_forward.1} parent=1 // pred_fallthru
      _
    // Predicated region
    $region38: #{testmodel2_forward.1} parent=1 // pred_check
      _
    $region39: #{testmodel2_forward.1} parent=1 // pred_check_branch
      %99 = sbr.rel (0) target = $region41
    $region40: #{testmodel2_forward.1} parent=1 // pred_region
      %100 = dma.done [#allocation5], 128
    $region41: #{testmodel2_forward.1} parent=1 // pred_fallthru
      _
    // Predicated region
    $region42: #{testmodel2_forward.1} parent=1 // pred_check
      _
    $region43: #{testmodel2_forward.1} parent=1 // pred_check_branch
      %102 = sbr.rel (0) target = $region45
    $region44: #{testmodel2_forward.1} parent=1 // pred_region
      %103 = dma.done [#allocation8], 65536
    $region45: #{testmodel2_forward.1} parent=1 // pred_fallthru
      _
    // Predicated region
    $region46: #{testmodel2_forward.1} parent=1 // pred_check
      _
    $region47: #{testmodel2_forward.1} parent=1 // pred_check_branch
      %105 = sbr.rel (0) target = $region49
    $region48: #{testmodel2_forward.1} parent=1 // pred_region
      %106 = dma.done [#allocation8], 128
    $region49: #{testmodel2_forward.1} parent=1 // pred_fallthru
      _
    // Predicated region
    $region50: #{testmodel2_forward.1} parent=1 // pred_check
      _
    $region51: #{testmodel2_forward.1} parent=1 // pred_check_branch
      %108 = sbr.rel (0) target = $region53
    $region52: #{testmodel2_forward.1} parent=1 // pred_region
      %109 = dma.done [#allocation11], 8192
    $region53: #{testmodel2_forward.1} parent=1 // pred_fallthru
      _
    // Predicated region
    $region54: #{testmodel2_forward.1} parent=1 // pred_check
      _
    $region55: #{testmodel2_forward.1} parent=1 // pred_check_branch
      %111 = sbr.rel (0) target = $region57
    $region56: #{testmodel2_forward.1} parent=1 // pred_region
      %112 = dma.done [#allocation11], 16
    $region57: #{testmodel2_forward.1} parent=1 // pred_fallthru
      _
    %v114 = vld [vmem:[#allocation2] sm:$0xff]
    %v115 = vpack.c.bf16 %v114, %v114
    %v116 = vld [vmem:[#allocation4] sm:$0xff]
    %v117 = vld [vmem:[#allocation4 + $0x8] sm:$0xff]
    %v118 = vld [vmem:[#allocation4 + $0x10] sm:$0xff]
    %v119 = vld [vmem:[#allocation4 + $0x18] sm:$0xff]
    %v120 = vld [vmem:[#allocation4 + $0x20] sm:$0xff]
    %v121 = vld [vmem:[#allocation4 + $0x28] sm:$0xff]
    %v122 = vld [vmem:[#allocation4 + $0x30] sm:$0xff]
    %v123 = vld [vmem:[#allocation4 + $0x38] sm:$0xff]
    %v124 = vld [vmem:[#allocation4 + $0x40] sm:$0xff]
    %v125 = vld [vmem:[#allocation4 + $0x48] sm:$0xff]
    %v126 = vld [vmem:[#allocation4 + $0x50] sm:$0xff]
    %v127 = vld [vmem:[#allocation4 + $0x58] sm:$0xff]
    %v128 = vld [vmem:[#allocation4 + $0x60] sm:$0x11]
    %v129 = vld [vmem:[#allocation4 + $0x68] sm:$0x11]
    %v130 = vld [vmem:[#allocation4 + $0x70] sm:$0x11]
    %v131 = vld [vmem:[#allocation4 + $0x78] sm:$0x11]
    %v132 = vld [vmem:[#allocation6] sm:$0xff]
    %v134 = vlaneseq
    %v135 = vshrl.u32 %v134, 7
    %v136 = vsub.s32 0, %v135
    %v137 = vrot.slane %v132, %v136
    %v138 = vlaneseq
    %v139 = vshrl.u32 %v138, 7
    %v140 = vsub.s32 1, %v139
    %v141 = vrot.slane %v132, %v140
    %v142 = vlaneseq
    %v143 = vshrl.u32 %v142, 7
    %v144 = vsub.s32 2, %v143
    %v145 = vrot.slane %v132, %v144
    %v146 = vlaneseq
    %v147 = vshrl.u32 %v146, 7
    %v148 = vsub.s32 3, %v147
    %v149 = vrot.slane %v132, %v148
    %v150 = vlaneseq
    %v151 = vshrl.u32 %v150, 7
    %v152 = vsub.s32 4, %v151
    %v153 = vrot.slane %v132, %v152
    %v154 = vlaneseq
    %v155 = vshrl.u32 %v154, 7
    %v156 = vsub.s32 5, %v155
    %v157 = vrot.slane %v132, %v156
    %v158 = vlaneseq
    %v159 = vshrl.u32 %v158, 7
    %v160 = vsub.s32 6, %v159
    %v161 = vrot.slane %v132, %v160
    %v162 = vlaneseq
    %v163 = vshrl.u32 %v162, 7
    %v164 = vsub.s32 7, %v163
    %v165 = vrot.slane %v132, %v164
    %v190 = vunpack.c.l.b16 %v116
    %v191 = vunpack.c.h.b16 %v116
    %v192 = vunpack.c.l.b16 %v117
    %v193 = vunpack.c.h.b16 %v117
    %v194 = vunpack.c.l.b16 %v118
    %v195 = vunpack.c.h.b16 %v118
    %v196 = vunpack.c.l.b16 %v119
    %v197 = vunpack.c.h.b16 %v119
    %v198 = vunpack.c.l.b16 %v120
    %v199 = vunpack.c.h.b16 %v120
    %v200 = vunpack.c.l.b16 %v121
    %v201 = vunpack.c.h.b16 %v121
    %v202 = vunpack.c.l.b16 %v122
    %v203 = vunpack.c.h.b16 %v122
    %v204 = vunpack.c.l.b16 %v123
    %v205 = vunpack.c.h.b16 %v123
    %v206 = vunpack.c.l.b16 %v124
    %v207 = vunpack.c.h.b16 %v124
    %v208 = vunpack.c.l.b16 %v125
    %v209 = vunpack.c.h.b16 %v125
    %v210 = vunpack.c.l.b16 %v126
    %v211 = vunpack.c.h.b16 %v126
    %v212 = vunpack.c.l.b16 %v127
    %v213 = vunpack.c.h.b16 %v127
    %v214 = vunpack.c.l.b16 %v128
    %v215 = vunpack.c.h.b16 %v128
    %v216 = vunpack.c.l.b16 %v129
    %v217 = vunpack.c.h.b16 %v129
    %v218 = vunpack.c.l.b16 %v130
    %v219 = vunpack.c.h.b16 %v130
    %v220 = vunpack.c.l.b16 %v131
    %v221 = vunpack.c.h.b16 %v131
    %v222 = vpack.c.b16 %v198, %v190
    %v223 = vpack.c.b16 %v199, %v191
    %v224 = vpack.c.b16 %v200, %v192
    %v225 = vpack.c.b16 %v201, %v193
    %v226 = vpack.c.b16 %v202, %v194
    %v227 = vpack.c.b16 %v203, %v195
    %v228 = vpack.c.b16 %v204, %v196
    %v229 = vpack.c.b16 %v205, %v197
    %v230 = vpack.c.b16 %v214, %v206
    %v231 = vpack.c.b16 %v215, %v207
    %v232 = vpack.c.b16 %v216, %v208
    %v233 = vpack.c.b16 %v217, %v209
    %v234 = vpack.c.b16 %v218, %v210
    %v235 = vpack.c.b16 %v219, %v211
    %v236 = vpack.c.b16 %v220, %v212
    %v237 = vpack.c.b16 %v221, %v213
    %vm246 = vcmask 211968
    %v248 = vsel %vm246, %v115, 0
    %vm250 = vcmask 1044480
    %v252 = vsel %vm250, %v230, 0
    %v255 = vsel %vm250, %v231, 0
    %v258 = vsel %vm250, %v232, 0
    %v261 = vsel %vm250, %v233, 0
    %v264 = vsel %vm250, %v234, 0
    %v267 = vsel %vm250, %v235, 0
    %v270 = vsel %vm250, %v236, 0
    %v273 = vsel %vm250, %v237, 0
    %275 = vmatprep.subr.bf16.mxu0 %v223
    %276 = vmatpush1.bf16.msra.mxu0 %v222
    %277 = vmatprep.subr.bf16.mxu0 %v255
    %278 = vmatpush1.bf16.msra.mxu0 %v252
    %279 = vmatprep.subr.bf16.mxu0 0
    %280 = vmatpush1.bf16.msra.mxu0 0
    %281 = vmatprep.subr.bf16.mxu0 0
    %282 = vmatpush1.bf16.msra.mxu0 0
    %283 = vmatprep.subr.bf16.mxu0 0
    %284 = vmatpush1.bf16.msra.mxu0 0
    %285 = vmatprep.subr.bf16.mxu0 0
    %286 = vmatpush1.bf16.msra.mxu0 0
    %287 = vmatprep.subr.bf16.mxu0 0
    %288 = vmatpush1.bf16.msra.mxu0 0
    %289 = vmatprep.subr.bf16.mxu0 0
    %290 = vmatpush1.bf16.msra.mxu0 0
    %291 = vmatprep.subr.bf16.mxu0 0
    %292 = vmatpush1.bf16.msra.mxu0 0
    %293 = vmatprep.subr.bf16.mxu0 0
    %294 = vmatpush1.bf16.msra.mxu0 0
    %295 = vmatprep.subr.bf16.mxu0 0
    %296 = vmatpush1.bf16.msra.mxu0 0
    %297 = vmatprep.subr.bf16.mxu0 0
    %298 = vmatpush1.bf16.msra.mxu0 0
    %299 = vmatprep.subr.bf16.mxu0 0
    %300 = vmatpush1.bf16.msra.mxu0 0
    %301 = vmatprep.subr.bf16.mxu0 0
    %302 = vmatpush1.bf16.msra.mxu0 0
    %303 = vmatprep.subr.bf16.mxu0 0
    %304 = vmatpush1.bf16.msra.mxu0 0
    %305 = vmatprep.subr.bf16.mxu0 0
    %306 = vmatpush1.bf16.msra.mxu0 0
    %307 = vmatprep.mubr.bf16.mxu0 0
    %308 = vmatmul.mubr.bf16.gmra.mrb[0].mxu0 %v248
    %v309 = vpop.f32.mrb[0].mxu0
    %v310 = vadd.f32 %v137, %v309
    %v311 = vpop.f32.mrb[0].mxu0
    %v312 = vadd.f32 %v141, %v311
    %v313 = vpop.f32.mrb[0].mxu0
    %v314 = vpop.f32.mrb[0].mxu0
    %315 = vdwg.mxu0
    %316 = vmatprep.subr.bf16.mxu0 %v225
    %317 = vmatpush1.bf16.msra.mxu0 %v224
    %318 = vmatprep.subr.bf16.mxu0 %v261
    %319 = vmatpush1.bf16.msra.mxu0 %v258
    %320 = vmatprep.subr.bf16.mxu0 0
    %321 = vmatpush1.bf16.msra.mxu0 0
    %322 = vmatprep.subr.bf16.mxu0 0
    %323 = vmatpush1.bf16.msra.mxu0 0
    %324 = vmatprep.subr.bf16.mxu0 0
    %325 = vmatpush1.bf16.msra.mxu0 0
    %326 = vmatprep.subr.bf16.mxu0 0
    %327 = vmatpush1.bf16.msra.mxu0 0
    %328 = vmatprep.subr.bf16.mxu0 0
    %329 = vmatpush1.bf16.msra.mxu0 0
    %330 = vmatprep.subr.bf16.mxu0 0
    %331 = vmatpush1.bf16.msra.mxu0 0
    %332 = vmatprep.subr.bf16.mxu0 0
    %333 = vmatpush1.bf16.msra.mxu0 0
    %334 = vmatprep.subr.bf16.mxu0 0
    %335 = vmatpush1.bf16.msra.mxu0 0
    %336 = vmatprep.subr.bf16.mxu0 0
    %337 = vmatpush1.bf16.msra.mxu0 0
    %338 = vmatprep.subr.bf16.mxu0 0
    %339 = vmatpush1.bf16.msra.mxu0 0
    %340 = vmatprep.subr.bf16.mxu0 0
    %341 = vmatpush1.bf16.msra.mxu0 0
    %342 = vmatprep.subr.bf16.mxu0 0
    %343 = vmatpush1.bf16.msra.mxu0 0
    %344 = vmatprep.subr.bf16.mxu0 0
    %345 = vmatpush1.bf16.msra.mxu0 0
    %346 = vmatprep.subr.bf16.mxu0 0
    %347 = vmatpush1.bf16.msra.mxu0 0
    %348 = vmatprep.mubr.bf16.mxu0 0
    %349 = vmatmul.mubr.bf16.gmra.mrb[0].mxu0 %v248
    %v350 = vpop.f32.mrb[0].mxu0
    %v351 = vadd.f32 %v145, %v350
    %v352 = vpop.f32.mrb[0].mxu0
    %v353 = vadd.f32 %v149, %v352
    %v354 = vpop.f32.mrb[0].mxu0
    %v355 = vpop.f32.mrb[0].mxu0
    %356 = vdwg.mxu0
    %357 = vmatprep.subr.bf16.mxu0 %v227
    %358 = vmatpush1.bf16.msra.mxu0 %v226
    %359 = vmatprep.subr.bf16.mxu0 %v267
    %360 = vmatpush1.bf16.msra.mxu0 %v264
    %361 = vmatprep.subr.bf16.mxu0 0
    %362 = vmatpush1.bf16.msra.mxu0 0
    %363 = vmatprep.subr.bf16.mxu0 0
    %364 = vmatpush1.bf16.msra.mxu0 0
    %365 = vmatprep.subr.bf16.mxu0 0
    %366 = vmatpush1.bf16.msra.mxu0 0
    %367 = vmatprep.subr.bf16.mxu0 0
    %368 = vmatpush1.bf16.msra.mxu0 0
    %369 = vmatprep.subr.bf16.mxu0 0
    %370 = vmatpush1.bf16.msra.mxu0 0
    %371 = vmatprep.subr.bf16.mxu0 0
    %372 = vmatpush1.bf16.msra.mxu0 0
    %373 = vmatprep.subr.bf16.mxu0 0
    %374 = vmatpush1.bf16.msra.mxu0 0
    %375 = vmatprep.subr.bf16.mxu0 0
    %376 = vmatpush1.bf16.msra.mxu0 0
    %377 = vmatprep.subr.bf16.mxu0 0
    %378 = vmatpush1.bf16.msra.mxu0 0
    %379 = vmatprep.subr.bf16.mxu0 0
    %380 = vmatpush1.bf16.msra.mxu0 0
    %381 = vmatprep.subr.bf16.mxu0 0
    %382 = vmatpush1.bf16.msra.mxu0 0
    %383 = vmatprep.subr.bf16.mxu0 0
    %384 = vmatpush1.bf16.msra.mxu0 0
    %385 = vmatprep.subr.bf16.mxu0 0
    %386 = vmatpush1.bf16.msra.mxu0 0
    %387 = vmatprep.subr.bf16.mxu0 0
    %388 = vmatpush1.bf16.msra.mxu0 0
    %389 = vmatprep.mubr.bf16.mxu0 0
    %390 = vmatmul.mubr.bf16.gmra.mrb[0].mxu0 %v248
    %v391 = vpop.f32.mrb[0].mxu0
    %v392 = vadd.f32 %v153, %v391
    %v393 = vpop.f32.mrb[0].mxu0
    %v394 = vadd.f32 %v157, %v393
    %v395 = vpop.f32.mrb[0].mxu0
    %v396 = vpop.f32.mrb[0].mxu0
    %397 = vdwg.mxu0
    %398 = vmatprep.subr.bf16.mxu0 %v229
    %399 = vmatpush1.bf16.msra.mxu0 %v228
    %400 = vmatprep.subr.bf16.mxu0 %v273
    %401 = vmatpush1.bf16.msra.mxu0 %v270
    %402 = vmatprep.subr.bf16.mxu0 0
    %403 = vmatpush1.bf16.msra.mxu0 0
    %404 = vmatprep.subr.bf16.mxu0 0
    %405 = vmatpush1.bf16.msra.mxu0 0
    %406 = vmatprep.subr.bf16.mxu0 0
    %407 = vmatpush1.bf16.msra.mxu0 0
    %408 = vmatprep.subr.bf16.mxu0 0
    %409 = vmatpush1.bf16.msra.mxu0 0
    %410 = vmatprep.subr.bf16.mxu0 0
    %411 = vmatpush1.bf16.msra.mxu0 0
    %412 = vmatprep.subr.bf16.mxu0 0
    %413 = vmatpush1.bf16.msra.mxu0 0
    %414 = vmatprep.subr.bf16.mxu0 0
    %415 = vmatpush1.bf16.msra.mxu0 0
    %416 = vmatprep.subr.bf16.mxu0 0
    %417 = vmatpush1.bf16.msra.mxu0 0
    %418 = vmatprep.subr.bf16.mxu0 0
    %419 = vmatpush1.bf16.msra.mxu0 0
    %420 = vmatprep.subr.bf16.mxu0 0
    %421 = vmatpush1.bf16.msra.mxu0 0
    %422 = vmatprep.subr.bf16.mxu0 0
    %423 = vmatpush1.bf16.msra.mxu0 0
    %424 = vmatprep.subr.bf16.mxu0 0
    %425 = vmatpush1.bf16.msra.mxu0 0
    %426 = vmatprep.subr.bf16.mxu0 0
    %427 = vmatpush1.bf16.msra.mxu0 0
    %428 = vmatprep.subr.bf16.mxu0 0
    %429 = vmatpush1.bf16.msra.mxu0 0
    %430 = vmatprep.mubr.bf16.mxu0 0
    %431 = vmatmul.mubr.bf16.gmra.mrb[0].mxu0 %v248
    %v432 = vpop.f32.mrb[0].mxu0
    %v433 = vadd.f32 %v161, %v432
    %v434 = vpop.f32.mrb[0].mxu0
    %v435 = vadd.f32 %v165, %v434
    %v436 = vpop.f32.mrb[0].mxu0
    %v437 = vpop.f32.mrb[0].mxu0
    %438 = vdwg.mxu0
    %v439 = vpack.c.bf16 %v310, %v310
    %v440 = vpack.c.bf16 %v312, %v312
    %v441 = vpack.c.bf16 %v351, %v351
    %v442 = vpack.c.bf16 %v353, %v353
    %v443 = vpack.c.bf16 %v392, %v392
    %v444 = vpack.c.bf16 %v394, %v394
    %v445 = vpack.c.bf16 %v433, %v433
    %v446 = vpack.c.bf16 %v435, %v435
    %v447 = vld [vmem:[#allocation7] sm:$0xff]
    %v448 = vld [vmem:[#allocation7 + $0x8] sm:$0xff]
    %v449 = vld [vmem:[#allocation7 + $0x10] sm:$0xff]
    %v450 = vld [vmem:[#allocation7 + $0x18] sm:$0xff]
    %v451 = vld [vmem:[#allocation7 + $0x20] sm:$0xff]
    %v452 = vld [vmem:[#allocation7 + $0x28] sm:$0xff]
    %v453 = vld [vmem:[#allocation7 + $0x30] sm:$0xff]
    %v454 = vld [vmem:[#allocation7 + $0x38] sm:$0xff]
    %v455 = vld [vmem:[#allocation7 + $0x40] sm:$0xff]
    %v456 = vld [vmem:[#allocation7 + $0x48] sm:$0xff]
    %v457 = vld [vmem:[#allocation7 + $0x50] sm:$0xff]
    %v458 = vld [vmem:[#allocation7 + $0x58] sm:$0xff]
    %v459 = vld [vmem:[#allocation7 + $0x60] sm:$0xff]
    %v460 = vld [vmem:[#allocation7 + $0x68] sm:$0xff]
    %v461 = vld [vmem:[#allocation7 + $0x70] sm:$0xff]
    %v462 = vld [vmem:[#allocation7 + $0x78] sm:$0xff]
    %v463 = vld [vmem:[#allocation7 + $0x80] sm:$0xff]
    %v464 = vld [vmem:[#allocation7 + $0x88] sm:$0xff]
    %v465 = vld [vmem:[#allocation7 + $0x90] sm:$0xff]
    %v466 = vld [vmem:[#allocation7 + $0x98] sm:$0xff]
    %v467 = vld [vmem:[#allocation7 + $0xa0] sm:$0xff]
    %v468 = vld [vmem:[#allocation7 + $0xa8] sm:$0xff]
    %v469 = vld [vmem:[#allocation7 + $0xb0] sm:$0xff]
    %v470 = vld [vmem:[#allocation7 + $0xb8] sm:$0xff]
    %v471 = vld [vmem:[#allocation7 + $0xc0] sm:$0xff]
    %v472 = vld [vmem:[#allocation7 + $0xc8] sm:$0xff]
    %v473 = vld [vmem:[#allocation7 + $0xd0] sm:$0xff]
    %v474 = vld [vmem:[#allocation7 + $0xd8] sm:$0xff]
    %v475 = vld [vmem:[#allocation7 + $0xe0] sm:$0xff]
    %v476 = vld [vmem:[#allocation7 + $0xe8] sm:$0xff]
    %v477 = vld [vmem:[#allocation7 + $0xf0] sm:$0xff]
    %v478 = vld [vmem:[#allocation7 + $0xf8] sm:$0xff]
    %v479 = vld [vmem:[#allocation7 + $0x100] sm:$0xff]
    %v480 = vld [vmem:[#allocation7 + $0x108] sm:$0xff]
    %v481 = vld [vmem:[#allocation7 + $0x110] sm:$0xff]
    %v482 = vld [vmem:[#allocation7 + $0x118] sm:$0xff]
    %v483 = vld [vmem:[#allocation7 + $0x120] sm:$0xff]
    %v484 = vld [vmem:[#allocation7 + $0x128] sm:$0xff]
    %v485 = vld [vmem:[#allocation7 + $0x130] sm:$0xff]
    %v486 = vld [vmem:[#allocation7 + $0x138] sm:$0xff]
    %v487 = vld [vmem:[#allocation7 + $0x140] sm:$0xff]
    %v488 = vld [vmem:[#allocation7 + $0x148] sm:$0xff]
    %v489 = vld [vmem:[#allocation7 + $0x150] sm:$0xff]
    %v490 = vld [vmem:[#allocation7 + $0x158] sm:$0xff]
    %v491 = vld [vmem:[#allocation7 + $0x160] sm:$0xff]
    %v492 = vld [vmem:[#allocation7 + $0x168] sm:$0xff]
    %v493 = vld [vmem:[#allocation7 + $0x170] sm:$0xff]
    %v494 = vld [vmem:[#allocation7 + $0x178] sm:$0xff]
    %v495 = vld [vmem:[#allocation7 + $0x180] sm:$0xff]
    %v496 = vld [vmem:[#allocation7 + $0x188] sm:$0xff]
    %v497 = vld [vmem:[#allocation7 + $0x190] sm:$0xff]
    %v498 = vld [vmem:[#allocation7 + $0x198] sm:$0xff]
    %v499 = vld [vmem:[#allocation7 + $0x1a0] sm:$0xff]
    %v500 = vld [vmem:[#allocation7 + $0x1a8] sm:$0xff]
    %v501 = vld [vmem:[#allocation7 + $0x1b0] sm:$0xff]
    %v502 = vld [vmem:[#allocation7 + $0x1b8] sm:$0xff]
    %v503 = vld [vmem:[#allocation7 + $0x1c0] sm:$0xff]
    %v504 = vld [vmem:[#allocation7 + $0x1c8] sm:$0xff]
    %v505 = vld [vmem:[#allocation7 + $0x1d0] sm:$0xff]
    %v506 = vld [vmem:[#allocation7 + $0x1d8] sm:$0xff]
    %v507 = vld [vmem:[#allocation7 + $0x1e0] sm:$0xff]
    %v508 = vld [vmem:[#allocation7 + $0x1e8] sm:$0xff]
    %v509 = vld [vmem:[#allocation7 + $0x1f0] sm:$0xff]
    %v510 = vld [vmem:[#allocation7 + $0x1f8] sm:$0xff]
    %v511 = vld [vmem:[#allocation7 + $0x200] sm:$0xff]
    %v512 = vld [vmem:[#allocation7 + $0x208] sm:$0xff]
    %v513 = vld [vmem:[#allocation7 + $0x210] sm:$0xff]
    %v514 = vld [vmem:[#allocation7 + $0x218] sm:$0xff]
    %v515 = vld [vmem:[#allocation7 + $0x220] sm:$0xff]
    %v516 = vld [vmem:[#allocation7 + $0x228] sm:$0xff]
    %v517 = vld [vmem:[#allocation7 + $0x230] sm:$0xff]
    %v518 = vld [vmem:[#allocation7 + $0x238] sm:$0xff]
    %v519 = vld [vmem:[#allocation7 + $0x240] sm:$0xff]
    %v520 = vld [vmem:[#allocation7 + $0x248] sm:$0xff]
    %v521 = vld [vmem:[#allocation7 + $0x250] sm:$0xff]
    %v522 = vld [vmem:[#allocation7 + $0x258] sm:$0xff]
    %v523 = vld [vmem:[#allocation7 + $0x260] sm:$0xff]
    %v524 = vld [vmem:[#allocation7 + $0x268] sm:$0xff]
    %v525 = vld [vmem:[#allocation7 + $0x270] sm:$0xff]
    %v526 = vld [vmem:[#allocation7 + $0x278] sm:$0xff]
    %v527 = vld [vmem:[#allocation7 + $0x280] sm:$0xff]
    %v528 = vld [vmem:[#allocation7 + $0x288] sm:$0xff]
    %v529 = vld [vmem:[#allocation7 + $0x290] sm:$0xff]
    %v530 = vld [vmem:[#allocation7 + $0x298] sm:$0xff]
    %v531 = vld [vmem:[#allocation7 + $0x2a0] sm:$0xff]
    %v532 = vld [vmem:[#allocation7 + $0x2a8] sm:$0xff]
    %v533 = vld [vmem:[#allocation7 + $0x2b0] sm:$0xff]
    %v534 = vld [vmem:[#allocation7 + $0x2b8] sm:$0xff]
    %v535 = vld [vmem:[#allocation7 + $0x2c0] sm:$0xff]
    %v536 = vld [vmem:[#allocation7 + $0x2c8] sm:$0xff]
    %v537 = vld [vmem:[#allocation7 + $0x2d0] sm:$0xff]
    %v538 = vld [vmem:[#allocation7 + $0x2d8] sm:$0xff]
    %v539 = vld [vmem:[#allocation7 + $0x2e0] sm:$0xff]
    %v540 = vld [vmem:[#allocation7 + $0x2e8] sm:$0xff]
    %v541 = vld [vmem:[#allocation7 + $0x2f0] sm:$0xff]
    %v542 = vld [vmem:[#allocation7 + $0x2f8] sm:$0xff]
    %v543 = vld [vmem:[#allocation7 + $0x300] sm:$0xff]
    %v544 = vld [vmem:[#allocation7 + $0x308] sm:$0xff]
    %v545 = vld [vmem:[#allocation7 + $0x310] sm:$0xff]
    %v546 = vld [vmem:[#allocation7 + $0x318] sm:$0xff]
    %v547 = vld [vmem:[#allocation7 + $0x320] sm:$0xff]
    %v548 = vld [vmem:[#allocation7 + $0x328] sm:$0xff]
    %v549 = vld [vmem:[#allocation7 + $0x330] sm:$0xff]
    %v550 = vld [vmem:[#allocation7 + $0x338] sm:$0xff]
    %v551 = vld [vmem:[#allocation7 + $0x340] sm:$0xff]
    %v552 = vld [vmem:[#allocation7 + $0x348] sm:$0xff]
    %v553 = vld [vmem:[#allocation7 + $0x350] sm:$0xff]
    %v554 = vld [vmem:[#allocation7 + $0x358] sm:$0xff]
    %v555 = vld [vmem:[#allocation7 + $0x360] sm:$0xff]
    %v556 = vld [vmem:[#allocation7 + $0x368] sm:$0xff]
    %v557 = vld [vmem:[#allocation7 + $0x370] sm:$0xff]
    %v558 = vld [vmem:[#allocation7 + $0x378] sm:$0xff]
    %v559 = vld [vmem:[#allocation7 + $0x380] sm:$0xff]
    %v560 = vld [vmem:[#allocation7 + $0x388] sm:$0xff]
    %v561 = vld [vmem:[#allocation7 + $0x390] sm:$0xff]
    %v562 = vld [vmem:[#allocation7 + $0x398] sm:$0xff]
    %v563 = vld [vmem:[#allocation7 + $0x3a0] sm:$0xff]
    %v564 = vld [vmem:[#allocation7 + $0x3a8] sm:$0xff]
    %v565 = vld [vmem:[#allocation7 + $0x3b0] sm:$0xff]
    %v566 = vld [vmem:[#allocation7 + $0x3b8] sm:$0xff]
    %v567 = vld [vmem:[#allocation7 + $0x3c0] sm:$0xff]
    %v568 = vld [vmem:[#allocation7 + $0x3c8] sm:$0xff]
    %v569 = vld [vmem:[#allocation7 + $0x3d0] sm:$0xff]
    %v570 = vld [vmem:[#allocation7 + $0x3d8] sm:$0xff]
    %v571 = vld [vmem:[#allocation7 + $0x3e0] sm:$0xff]
    %v572 = vld [vmem:[#allocation7 + $0x3e8] sm:$0xff]
    %v573 = vld [vmem:[#allocation7 + $0x3f0] sm:$0xff]
    %v574 = vld [vmem:[#allocation7 + $0x3f8] sm:$0xff]
    %v575 = vld [vmem:[#allocation7 + $0x400] sm:$0xff]
    %v576 = vld [vmem:[#allocation7 + $0x408] sm:$0xff]
    %v577 = vld [vmem:[#allocation7 + $0x410] sm:$0xff]
    %v578 = vld [vmem:[#allocation7 + $0x418] sm:$0xff]
    %v579 = vld [vmem:[#allocation7 + $0x420] sm:$0xff]
    %v580 = vld [vmem:[#allocation7 + $0x428] sm:$0xff]
    %v581 = vld [vmem:[#allocation7 + $0x430] sm:$0xff]
    %v582 = vld [vmem:[#allocation7 + $0x438] sm:$0xff]
    %v583 = vld [vmem:[#allocation7 + $0x440] sm:$0xff]
    %v584 = vld [vmem:[#allocation7 + $0x448] sm:$0xff]
    %v585 = vld [vmem:[#allocation7 + $0x450] sm:$0xff]
    %v586 = vld [vmem:[#allocation7 + $0x458] sm:$0xff]
    %v587 = vld [vmem:[#allocation7 + $0x460] sm:$0xff]
    %v588 = vld [vmem:[#allocation7 + $0x468] sm:$0xff]
    %v589 = vld [vmem:[#allocation7 + $0x470] sm:$0xff]
    %v590 = vld [vmem:[#allocation7 + $0x478] sm:$0xff]
    %v591 = vld [vmem:[#allocation7 + $0x480] sm:$0xff]
    %v592 = vld [vmem:[#allocation7 + $0x488] sm:$0xff]
    %v593 = vld [vmem:[#allocation7 + $0x490] sm:$0xff]
    %v594 = vld [vmem:[#allocation7 + $0x498] sm:$0xff]
    %v595 = vld [vmem:[#allocation7 + $0x4a0] sm:$0xff]
    %v596 = vld [vmem:[#allocation7 + $0x4a8] sm:$0xff]
    %v597 = vld [vmem:[#allocation7 + $0x4b0] sm:$0xff]
    %v598 = vld [vmem:[#allocation7 + $0x4b8] sm:$0xff]
    %v599 = vld [vmem:[#allocation7 + $0x4c0] sm:$0xff]
    %v600 = vld [vmem:[#allocation7 + $0x4c8] sm:$0xff]
    %v601 = vld [vmem:[#allocation7 + $0x4d0] sm:$0xff]
    %v602 = vld [vmem:[#allocation7 + $0x4d8] sm:$0xff]
    %v603 = vld [vmem:[#allocation7 + $0x4e0] sm:$0xff]
    %v604 = vld [vmem:[#allocation7 + $0x4e8] sm:$0xff]
    %v605 = vld [vmem:[#allocation7 + $0x4f0] sm:$0xff]
    %v606 = vld [vmem:[#allocation7 + $0x4f8] sm:$0xff]
    %v607 = vld [vmem:[#allocation7 + $0x500] sm:$0xff]
    %v608 = vld [vmem:[#allocation7 + $0x508] sm:$0xff]
    %v609 = vld [vmem:[#allocation7 + $0x510] sm:$0xff]
    %v610 = vld [vmem:[#allocation7 + $0x518] sm:$0xff]
    %v611 = vld [vmem:[#allocation7 + $0x520] sm:$0xff]
    %v612 = vld [vmem:[#allocation7 + $0x528] sm:$0xff]
    %v613 = vld [vmem:[#allocation7 + $0x530] sm:$0xff]
    %v614 = vld [vmem:[#allocation7 + $0x538] sm:$0xff]
    %v615 = vld [vmem:[#allocation7 + $0x540] sm:$0xff]
    %v616 = vld [vmem:[#allocation7 + $0x548] sm:$0xff]
    %v617 = vld [vmem:[#allocation7 + $0x550] sm:$0xff]
    %v618 = vld [vmem:[#allocation7 + $0x558] sm:$0xff]
    %v619 = vld [vmem:[#allocation7 + $0x560] sm:$0xff]
    %v620 = vld [vmem:[#allocation7 + $0x568] sm:$0xff]
    %v621 = vld [vmem:[#allocation7 + $0x570] sm:$0xff]
    %v622 = vld [vmem:[#allocation7 + $0x578] sm:$0xff]
    %v623 = vld [vmem:[#allocation7 + $0x580] sm:$0xff]
    %v624 = vld [vmem:[#allocation7 + $0x588] sm:$0xff]
    %v625 = vld [vmem:[#allocation7 + $0x590] sm:$0xff]
    %v626 = vld [vmem:[#allocation7 + $0x598] sm:$0xff]
    %v627 = vld [vmem:[#allocation7 + $0x5a0] sm:$0xff]
    %v628 = vld [vmem:[#allocation7 + $0x5a8] sm:$0xff]
    %v629 = vld [vmem:[#allocation7 + $0x5b0] sm:$0xff]
    %v630 = vld [vmem:[#allocation7 + $0x5b8] sm:$0xff]
    %v631 = vld [vmem:[#allocation7 + $0x5c0] sm:$0xff]
    %v632 = vld [vmem:[#allocation7 + $0x5c8] sm:$0xff]
    %v633 = vld [vmem:[#allocation7 + $0x5d0] sm:$0xff]
    %v634 = vld [vmem:[#allocation7 + $0x5d8] sm:$0xff]
    %v635 = vld [vmem:[#allocation7 + $0x5e0] sm:$0xff]
    %v636 = vld [vmem:[#allocation7 + $0x5e8] sm:$0xff]
    %v637 = vld [vmem:[#allocation7 + $0x5f0] sm:$0xff]
    %v638 = vld [vmem:[#allocation7 + $0x5f8] sm:$0xff]
    %v639 = vld [vmem:[#allocation7 + $0x600] sm:$0xff]
    %v640 = vld [vmem:[#allocation7 + $0x608] sm:$0xff]
    %v641 = vld [vmem:[#allocation7 + $0x610] sm:$0xff]
    %v642 = vld [vmem:[#allocation7 + $0x618] sm:$0xff]
    %v643 = vld [vmem:[#allocation7 + $0x620] sm:$0xff]
    %v644 = vld [vmem:[#allocation7 + $0x628] sm:$0xff]
    %v645 = vld [vmem:[#allocation7 + $0x630] sm:$0xff]
    %v646 = vld [vmem:[#allocation7 + $0x638] sm:$0xff]
    %v647 = vld [vmem:[#allocation7 + $0x640] sm:$0xff]
    %v648 = vld [vmem:[#allocation7 + $0x648] sm:$0xff]
    %v649 = vld [vmem:[#allocation7 + $0x650] sm:$0xff]
    %v650 = vld [vmem:[#allocation7 + $0x658] sm:$0xff]
    %v651 = vld [vmem:[#allocation7 + $0x660] sm:$0xff]
    %v652 = vld [vmem:[#allocation7 + $0x668] sm:$0xff]
    %v653 = vld [vmem:[#allocation7 + $0x670] sm:$0xff]
    %v654 = vld [vmem:[#allocation7 + $0x678] sm:$0xff]
    %v655 = vld [vmem:[#allocation7 + $0x680] sm:$0xff]
    %v656 = vld [vmem:[#allocation7 + $0x688] sm:$0xff]
    %v657 = vld [vmem:[#allocation7 + $0x690] sm:$0xff]
    %v658 = vld [vmem:[#allocation7 + $0x698] sm:$0xff]
    %v659 = vld [vmem:[#allocation7 + $0x6a0] sm:$0xff]
    %v660 = vld [vmem:[#allocation7 + $0x6a8] sm:$0xff]
    %v661 = vld [vmem:[#allocation7 + $0x6b0] sm:$0xff]
    %v662 = vld [vmem:[#allocation7 + $0x6b8] sm:$0xff]
    %v663 = vld [vmem:[#allocation7 + $0x6c0] sm:$0xff]
    %v664 = vld [vmem:[#allocation7 + $0x6c8] sm:$0xff]
    %v665 = vld [vmem:[#allocation7 + $0x6d0] sm:$0xff]
    %v666 = vld [vmem:[#allocation7 + $0x6d8] sm:$0xff]
    %v667 = vld [vmem:[#allocation7 + $0x6e0] sm:$0xff]
    %v668 = vld [vmem:[#allocation7 + $0x6e8] sm:$0xff]
    %v669 = vld [vmem:[#allocation7 + $0x6f0] sm:$0xff]
    %v670 = vld [vmem:[#allocation7 + $0x6f8] sm:$0xff]
    %v671 = vld [vmem:[#allocation7 + $0x700] sm:$0xff]
    %v672 = vld [vmem:[#allocation7 + $0x708] sm:$0xff]
    %v673 = vld [vmem:[#allocation7 + $0x710] sm:$0xff]
    %v674 = vld [vmem:[#allocation7 + $0x718] sm:$0xff]
    %v675 = vld [vmem:[#allocation7 + $0x720] sm:$0xff]
    %v676 = vld [vmem:[#allocation7 + $0x728] sm:$0xff]
    %v677 = vld [vmem:[#allocation7 + $0x730] sm:$0xff]
    %v678 = vld [vmem:[#allocation7 + $0x738] sm:$0xff]
    %v679 = vld [vmem:[#allocation7 + $0x740] sm:$0xff]
    %v680 = vld [vmem:[#allocation7 + $0x748] sm:$0xff]
    %v681 = vld [vmem:[#allocation7 + $0x750] sm:$0xff]
    %v682 = vld [vmem:[#allocation7 + $0x758] sm:$0xff]
    %v683 = vld [vmem:[#allocation7 + $0x760] sm:$0xff]
    %v684 = vld [vmem:[#allocation7 + $0x768] sm:$0xff]
    %v685 = vld [vmem:[#allocation7 + $0x770] sm:$0xff]
    %v686 = vld [vmem:[#allocation7 + $0x778] sm:$0xff]
    %v687 = vld [vmem:[#allocation7 + $0x780] sm:$0xff]
    %v688 = vld [vmem:[#allocation7 + $0x788] sm:$0xff]
    %v689 = vld [vmem:[#allocation7 + $0x790] sm:$0xff]
    %v690 = vld [vmem:[#allocation7 + $0x798] sm:$0xff]
    %v691 = vld [vmem:[#allocation7 + $0x7a0] sm:$0xff]
    %v692 = vld [vmem:[#allocation7 + $0x7a8] sm:$0xff]
    %v693 = vld [vmem:[#allocation7 + $0x7b0] sm:$0xff]
    %v694 = vld [vmem:[#allocation7 + $0x7b8] sm:$0xff]
    %v695 = vld [vmem:[#allocation7 + $0x7c0] sm:$0xff]
    %v696 = vld [vmem:[#allocation7 + $0x7c8] sm:$0xff]
    %v697 = vld [vmem:[#allocation7 + $0x7d0] sm:$0xff]
    %v698 = vld [vmem:[#allocation7 + $0x7d8] sm:$0xff]
    %v699 = vld [vmem:[#allocation7 + $0x7e0] sm:$0xff]
    %v700 = vld [vmem:[#allocation7 + $0x7e8] sm:$0xff]
    %v701 = vld [vmem:[#allocation7 + $0x7f0] sm:$0xff]
    %v702 = vld [vmem:[#allocation7 + $0x7f8] sm:$0xff]
    %v703 = vld [vmem:[#allocation7 + $0x800] sm:$0xff]
    %v704 = vld [vmem:[#allocation7 + $0x808] sm:$0xff]
    %v705 = vld [vmem:[#allocation7 + $0x810] sm:$0xff]
    %v706 = vld [vmem:[#allocation7 + $0x818] sm:$0xff]
    %v707 = vld [vmem:[#allocation7 + $0x820] sm:$0xff]
    %v708 = vld [vmem:[#allocation7 + $0x828] sm:$0xff]
    %v709 = vld [vmem:[#allocation7 + $0x830] sm:$0xff]
    %v710 = vld [vmem:[#allocation7 + $0x838] sm:$0xff]
    %v711 = vld [vmem:[#allocation7 + $0x840] sm:$0xff]
    %v712 = vld [vmem:[#allocation7 + $0x848] sm:$0xff]
    %v713 = vld [vmem:[#allocation7 + $0x850] sm:$0xff]
    %v714 = vld [vmem:[#allocation7 + $0x858] sm:$0xff]
    %v715 = vld [vmem:[#allocation7 + $0x860] sm:$0xff]
    %v716 = vld [vmem:[#allocation7 + $0x868] sm:$0xff]
    %v717 = vld [vmem:[#allocation7 + $0x870] sm:$0xff]
    %v718 = vld [vmem:[#allocation7 + $0x878] sm:$0xff]
    %v719 = vld [vmem:[#allocation7 + $0x880] sm:$0xff]
    %v720 = vld [vmem:[#allocation7 + $0x888] sm:$0xff]
    %v721 = vld [vmem:[#allocation7 + $0x890] sm:$0xff]
    %v722 = vld [vmem:[#allocation7 + $0x898] sm:$0xff]
    %v723 = vld [vmem:[#allocation7 + $0x8a0] sm:$0xff]
    %v724 = vld [vmem:[#allocation7 + $0x8a8] sm:$0xff]
    %v725 = vld [vmem:[#allocation7 + $0x8b0] sm:$0xff]
    %v726 = vld [vmem:[#allocation7 + $0x8b8] sm:$0xff]
    %v727 = vld [vmem:[#allocation7 + $0x8c0] sm:$0xff]
    %v728 = vld [vmem:[#allocation7 + $0x8c8] sm:$0xff]
    %v729 = vld [vmem:[#allocation7 + $0x8d0] sm:$0xff]
    %v730 = vld [vmem:[#allocation7 + $0x8d8] sm:$0xff]
    %v731 = vld [vmem:[#allocation7 + $0x8e0] sm:$0xff]
    %v732 = vld [vmem:[#allocation7 + $0x8e8] sm:$0xff]
    %v733 = vld [vmem:[#allocation7 + $0x8f0] sm:$0xff]
    %v734 = vld [vmem:[#allocation7 + $0x8f8] sm:$0xff]
    %v735 = vld [vmem:[#allocation7 + $0x900] sm:$0xff]
    %v736 = vld [vmem:[#allocation7 + $0x908] sm:$0xff]
    %v737 = vld [vmem:[#allocation7 + $0x910] sm:$0xff]
    %v738 = vld [vmem:[#allocation7 + $0x918] sm:$0xff]
    %v739 = vld [vmem:[#allocation7 + $0x920] sm:$0xff]
    %v740 = vld [vmem:[#allocation7 + $0x928] sm:$0xff]
    %v741 = vld [vmem:[#allocation7 + $0x930] sm:$0xff]
    %v742 = vld [vmem:[#allocation7 + $0x938] sm:$0xff]
    %v743 = vld [vmem:[#allocation7 + $0x940] sm:$0xff]
    %v744 = vld [vmem:[#allocation7 + $0x948] sm:$0xff]
    %v745 = vld [vmem:[#allocation7 + $0x950] sm:$0xff]
    %v746 = vld [vmem:[#allocation7 + $0x958] sm:$0xff]
    %v747 = vld [vmem:[#allocation7 + $0x960] sm:$0xff]
    %v748 = vld [vmem:[#allocation7 + $0x968] sm:$0xff]
    %v749 = vld [vmem:[#allocation7 + $0x970] sm:$0xff]
    %v750 = vld [vmem:[#allocation7 + $0x978] sm:$0xff]
    %v751 = vld [vmem:[#allocation7 + $0x980] sm:$0xff]
    %v752 = vld [vmem:[#allocation7 + $0x988] sm:$0xff]
    %v753 = vld [vmem:[#allocation7 + $0x990] sm:$0xff]
    %v754 = vld [vmem:[#allocation7 + $0x998] sm:$0xff]
    %v755 = vld [vmem:[#allocation7 + $0x9a0] sm:$0xff]
    %v756 = vld [vmem:[#allocation7 + $0x9a8] sm:$0xff]
    %v757 = vld [vmem:[#allocation7 + $0x9b0] sm:$0xff]
    %v758 = vld [vmem:[#allocation7 + $0x9b8] sm:$0xff]
    %v759 = vld [vmem:[#allocation7 + $0x9c0] sm:$0xff]
    %v760 = vld [vmem:[#allocation7 + $0x9c8] sm:$0xff]
    %v761 = vld [vmem:[#allocation7 + $0x9d0] sm:$0xff]
    %v762 = vld [vmem:[#allocation7 + $0x9d8] sm:$0xff]
    %v763 = vld [vmem:[#allocation7 + $0x9e0] sm:$0xff]
    %v764 = vld [vmem:[#allocation7 + $0x9e8] sm:$0xff]
    %v765 = vld [vmem:[#allocation7 + $0x9f0] sm:$0xff]
    %v766 = vld [vmem:[#allocation7 + $0x9f8] sm:$0xff]
    %v767 = vld [vmem:[#allocation7 + $0xa00] sm:$0xff]
    %v768 = vld [vmem:[#allocation7 + $0xa08] sm:$0xff]
    %v769 = vld [vmem:[#allocation7 + $0xa10] sm:$0xff]
    %v770 = vld [vmem:[#allocation7 + $0xa18] sm:$0xff]
    %v771 = vld [vmem:[#allocation7 + $0xa20] sm:$0xff]
    %v772 = vld [vmem:[#allocation7 + $0xa28] sm:$0xff]
    %v773 = vld [vmem:[#allocation7 + $0xa30] sm:$0xff]
    %v774 = vld [vmem:[#allocation7 + $0xa38] sm:$0xff]
    %v775 = vld [vmem:[#allocation7 + $0xa40] sm:$0xff]
    %v776 = vld [vmem:[#allocation7 + $0xa48] sm:$0xff]
    %v777 = vld [vmem:[#allocation7 + $0xa50] sm:$0xff]
    %v778 = vld [vmem:[#allocation7 + $0xa58] sm:$0xff]
    %v779 = vld [vmem:[#allocation7 + $0xa60] sm:$0xff]
    %v780 = vld [vmem:[#allocation7 + $0xa68] sm:$0xff]
    %v781 = vld [vmem:[#allocation7 + $0xa70] sm:$0xff]
    %v782 = vld [vmem:[#allocation7 + $0xa78] sm:$0xff]
    %v783 = vld [vmem:[#allocation7 + $0xa80] sm:$0xff]
    %v784 = vld [vmem:[#allocation7 + $0xa88] sm:$0xff]
    %v785 = vld [vmem:[#allocation7 + $0xa90] sm:$0xff]
    %v786 = vld [vmem:[#allocation7 + $0xa98] sm:$0xff]
    %v787 = vld [vmem:[#allocation7 + $0xaa0] sm:$0xff]
    %v788 = vld [vmem:[#allocation7 + $0xaa8] sm:$0xff]
    %v789 = vld [vmem:[#allocation7 + $0xab0] sm:$0xff]
    %v790 = vld [vmem:[#allocation7 + $0xab8] sm:$0xff]
    %v791 = vld [vmem:[#allocation7 + $0xac0] sm:$0xff]
    %v792 = vld [vmem:[#allocation7 + $0xac8] sm:$0xff]
    %v793 = vld [vmem:[#allocation7 + $0xad0] sm:$0xff]
    %v794 = vld [vmem:[#allocation7 + $0xad8] sm:$0xff]
    %v795 = vld [vmem:[#allocation7 + $0xae0] sm:$0xff]
    %v796 = vld [vmem:[#allocation7 + $0xae8] sm:$0xff]
    %v797 = vld [vmem:[#allocation7 + $0xaf0] sm:$0xff]
    %v798 = vld [vmem:[#allocation7 + $0xaf8] sm:$0xff]
    %v799 = vld [vmem:[#allocation7 + $0xb00] sm:$0xff]
    %v800 = vld [vmem:[#allocation7 + $0xb08] sm:$0xff]
    %v801 = vld [vmem:[#allocation7 + $0xb10] sm:$0xff]
    %v802 = vld [vmem:[#allocation7 + $0xb18] sm:$0xff]
    %v803 = vld [vmem:[#allocation7 + $0xb20] sm:$0xff]
    %v804 = vld [vmem:[#allocation7 + $0xb28] sm:$0xff]
    %v805 = vld [vmem:[#allocation7 + $0xb30] sm:$0xff]
    %v806 = vld [vmem:[#allocation7 + $0xb38] sm:$0xff]
    %v807 = vld [vmem:[#allocation7 + $0xb40] sm:$0xff]
    %v808 = vld [vmem:[#allocation7 + $0xb48] sm:$0xff]
    %v809 = vld [vmem:[#allocation7 + $0xb50] sm:$0xff]
    %v810 = vld [vmem:[#allocation7 + $0xb58] sm:$0xff]
    %v811 = vld [vmem:[#allocation7 + $0xb60] sm:$0xff]
    %v812 = vld [vmem:[#allocation7 + $0xb68] sm:$0xff]
    %v813 = vld [vmem:[#allocation7 + $0xb70] sm:$0xff]
    %v814 = vld [vmem:[#allocation7 + $0xb78] sm:$0xff]
    %v815 = vld [vmem:[#allocation7 + $0xb80] sm:$0xff]
    %v816 = vld [vmem:[#allocation7 + $0xb88] sm:$0xff]
    %v817 = vld [vmem:[#allocation7 + $0xb90] sm:$0xff]
    %v818 = vld [vmem:[#allocation7 + $0xb98] sm:$0xff]
    %v819 = vld [vmem:[#allocation7 + $0xba0] sm:$0xff]
    %v820 = vld [vmem:[#allocation7 + $0xba8] sm:$0xff]
    %v821 = vld [vmem:[#allocation7 + $0xbb0] sm:$0xff]
    %v822 = vld [vmem:[#allocation7 + $0xbb8] sm:$0xff]
    %v823 = vld [vmem:[#allocation7 + $0xbc0] sm:$0xff]
    %v824 = vld [vmem:[#allocation7 + $0xbc8] sm:$0xff]
    %v825 = vld [vmem:[#allocation7 + $0xbd0] sm:$0xff]
    %v826 = vld [vmem:[#allocation7 + $0xbd8] sm:$0xff]
    %v827 = vld [vmem:[#allocation7 + $0xbe0] sm:$0xff]
    %v828 = vld [vmem:[#allocation7 + $0xbe8] sm:$0xff]
    %v829 = vld [vmem:[#allocation7 + $0xbf0] sm:$0xff]
    %v830 = vld [vmem:[#allocation7 + $0xbf8] sm:$0xff]
    %v831 = vld [vmem:[#allocation7 + $0xc00] sm:$0xff]
    %v832 = vld [vmem:[#allocation7 + $0xc08] sm:$0xff]
    %v833 = vld [vmem:[#allocation7 + $0xc10] sm:$0xff]
    %v834 = vld [vmem:[#allocation7 + $0xc18] sm:$0xff]
    %v835 = vld [vmem:[#allocation7 + $0xc20] sm:$0xff]
    %v836 = vld [vmem:[#allocation7 + $0xc28] sm:$0xff]
    %v837 = vld [vmem:[#allocation7 + $0xc30] sm:$0xff]
    %v838 = vld [vmem:[#allocation7 + $0xc38] sm:$0xff]
    %v839 = vld [vmem:[#allocation7 + $0xc40] sm:$0xff]
    %v840 = vld [vmem:[#allocation7 + $0xc48] sm:$0xff]
    %v841 = vld [vmem:[#allocation7 + $0xc50] sm:$0xff]
    %v842 = vld [vmem:[#allocation7 + $0xc58] sm:$0xff]
    %v843 = vld [vmem:[#allocation7 + $0xc60] sm:$0xff]
    %v844 = vld [vmem:[#allocation7 + $0xc68] sm:$0xff]
    %v845 = vld [vmem:[#allocation7 + $0xc70] sm:$0xff]
    %v846 = vld [vmem:[#allocation7 + $0xc78] sm:$0xff]
    %v847 = vld [vmem:[#allocation7 + $0xc80] sm:$0xff]
    %v848 = vld [vmem:[#allocation7 + $0xc88] sm:$0xff]
    %v849 = vld [vmem:[#allocation7 + $0xc90] sm:$0xff]
    %v850 = vld [vmem:[#allocation7 + $0xc98] sm:$0xff]
    %v851 = vld [vmem:[#allocation7 + $0xca0] sm:$0xff]
    %v852 = vld [vmem:[#allocation7 + $0xca8] sm:$0xff]
    %v853 = vld [vmem:[#allocation7 + $0xcb0] sm:$0xff]
    %v854 = vld [vmem:[#allocation7 + $0xcb8] sm:$0xff]
    %v855 = vld [vmem:[#allocation7 + $0xcc0] sm:$0xff]
    %v856 = vld [vmem:[#allocation7 + $0xcc8] sm:$0xff]
    %v857 = vld [vmem:[#allocation7 + $0xcd0] sm:$0xff]
    %v858 = vld [vmem:[#allocation7 + $0xcd8] sm:$0xff]
    %v859 = vld [vmem:[#allocation7 + $0xce0] sm:$0xff]
    %v860 = vld [vmem:[#allocation7 + $0xce8] sm:$0xff]
    %v861 = vld [vmem:[#allocation7 + $0xcf0] sm:$0xff]
    %v862 = vld [vmem:[#allocation7 + $0xcf8] sm:$0xff]
    %v863 = vld [vmem:[#allocation7 + $0xd00] sm:$0xff]
    %v864 = vld [vmem:[#allocation7 + $0xd08] sm:$0xff]
    %v865 = vld [vmem:[#allocation7 + $0xd10] sm:$0xff]
    %v866 = vld [vmem:[#allocation7 + $0xd18] sm:$0xff]
    %v867 = vld [vmem:[#allocation7 + $0xd20] sm:$0xff]
    %v868 = vld [vmem:[#allocation7 + $0xd28] sm:$0xff]
    %v869 = vld [vmem:[#allocation7 + $0xd30] sm:$0xff]
    %v870 = vld [vmem:[#allocation7 + $0xd38] sm:$0xff]
    %v871 = vld [vmem:[#allocation7 + $0xd40] sm:$0xff]
    %v872 = vld [vmem:[#allocation7 + $0xd48] sm:$0xff]
    %v873 = vld [vmem:[#allocation7 + $0xd50] sm:$0xff]
    %v874 = vld [vmem:[#allocation7 + $0xd58] sm:$0xff]
    %v875 = vld [vmem:[#allocation7 + $0xd60] sm:$0xff]
    %v876 = vld [vmem:[#allocation7 + $0xd68] sm:$0xff]
    %v877 = vld [vmem:[#allocation7 + $0xd70] sm:$0xff]
    %v878 = vld [vmem:[#allocation7 + $0xd78] sm:$0xff]
    %v879 = vld [vmem:[#allocation7 + $0xd80] sm:$0xff]
    %v880 = vld [vmem:[#allocation7 + $0xd88] sm:$0xff]
    %v881 = vld [vmem:[#allocation7 + $0xd90] sm:$0xff]
    %v882 = vld [vmem:[#allocation7 + $0xd98] sm:$0xff]
    %v883 = vld [vmem:[#allocation7 + $0xda0] sm:$0xff]
    %v884 = vld [vmem:[#allocation7 + $0xda8] sm:$0xff]
    %v885 = vld [vmem:[#allocation7 + $0xdb0] sm:$0xff]
    %v886 = vld [vmem:[#allocation7 + $0xdb8] sm:$0xff]
    %v887 = vld [vmem:[#allocation7 + $0xdc0] sm:$0xff]
    %v888 = vld [vmem:[#allocation7 + $0xdc8] sm:$0xff]
    %v889 = vld [vmem:[#allocation7 + $0xdd0] sm:$0xff]
    %v890 = vld [vmem:[#allocation7 + $0xdd8] sm:$0xff]
    %v891 = vld [vmem:[#allocation7 + $0xde0] sm:$0xff]
    %v892 = vld [vmem:[#allocation7 + $0xde8] sm:$0xff]
    %v893 = vld [vmem:[#allocation7 + $0xdf0] sm:$0xff]
    %v894 = vld [vmem:[#allocation7 + $0xdf8] sm:$0xff]
    %v895 = vld [vmem:[#allocation7 + $0xe00] sm:$0xff]
    %v896 = vld [vmem:[#allocation7 + $0xe08] sm:$0xff]
    %v897 = vld [vmem:[#allocation7 + $0xe10] sm:$0xff]
    %v898 = vld [vmem:[#allocation7 + $0xe18] sm:$0xff]
    %v899 = vld [vmem:[#allocation7 + $0xe20] sm:$0xff]
    %v900 = vld [vmem:[#allocation7 + $0xe28] sm:$0xff]
    %v901 = vld [vmem:[#allocation7 + $0xe30] sm:$0xff]
    %v902 = vld [vmem:[#allocation7 + $0xe38] sm:$0xff]
    %v903 = vld [vmem:[#allocation7 + $0xe40] sm:$0xff]
    %v904 = vld [vmem:[#allocation7 + $0xe48] sm:$0xff]
    %v905 = vld [vmem:[#allocation7 + $0xe50] sm:$0xff]
    %v906 = vld [vmem:[#allocation7 + $0xe58] sm:$0xff]
    %v907 = vld [vmem:[#allocation7 + $0xe60] sm:$0xff]
    %v908 = vld [vmem:[#allocation7 + $0xe68] sm:$0xff]
    %v909 = vld [vmem:[#allocation7 + $0xe70] sm:$0xff]
    %v910 = vld [vmem:[#allocation7 + $0xe78] sm:$0xff]
    %v911 = vld [vmem:[#allocation7 + $0xe80] sm:$0xff]
    %v912 = vld [vmem:[#allocation7 + $0xe88] sm:$0xff]
    %v913 = vld [vmem:[#allocation7 + $0xe90] sm:$0xff]
    %v914 = vld [vmem:[#allocation7 + $0xe98] sm:$0xff]
    %v915 = vld [vmem:[#allocation7 + $0xea0] sm:$0xff]
    %v916 = vld [vmem:[#allocation7 + $0xea8] sm:$0xff]
    %v917 = vld [vmem:[#allocation7 + $0xeb0] sm:$0xff]
    %v918 = vld [vmem:[#allocation7 + $0xeb8] sm:$0xff]
    %v919 = vld [vmem:[#allocation7 + $0xec0] sm:$0xff]
    %v920 = vld [vmem:[#allocation7 + $0xec8] sm:$0xff]
    %v921 = vld [vmem:[#allocation7 + $0xed0] sm:$0xff]
    %v922 = vld [vmem:[#allocation7 + $0xed8] sm:$0xff]
    %v923 = vld [vmem:[#allocation7 + $0xee0] sm:$0xff]
    %v924 = vld [vmem:[#allocation7 + $0xee8] sm:$0xff]
    %v925 = vld [vmem:[#allocation7 + $0xef0] sm:$0xff]
    %v926 = vld [vmem:[#allocation7 + $0xef8] sm:$0xff]
    %v927 = vld [vmem:[#allocation7 + $0xf00] sm:$0xff]
    %v928 = vld [vmem:[#allocation7 + $0xf08] sm:$0xff]
    %v929 = vld [vmem:[#allocation7 + $0xf10] sm:$0xff]
    %v930 = vld [vmem:[#allocation7 + $0xf18] sm:$0xff]
    %v931 = vld [vmem:[#allocation7 + $0xf20] sm:$0xff]
    %v932 = vld [vmem:[#allocation7 + $0xf28] sm:$0xff]
    %v933 = vld [vmem:[#allocation7 + $0xf30] sm:$0xff]
    %v934 = vld [vmem:[#allocation7 + $0xf38] sm:$0xff]
    %v935 = vld [vmem:[#allocation7 + $0xf40] sm:$0xff]
    %v936 = vld [vmem:[#allocation7 + $0xf48] sm:$0xff]
    %v937 = vld [vmem:[#allocation7 + $0xf50] sm:$0xff]
    %v938 = vld [vmem:[#allocation7 + $0xf58] sm:$0xff]
    %v939 = vld [vmem:[#allocation7 + $0xf60] sm:$0xff]
    %v940 = vld [vmem:[#allocation7 + $0xf68] sm:$0xff]
    %v941 = vld [vmem:[#allocation7 + $0xf70] sm:$0xff]
    %v942 = vld [vmem:[#allocation7 + $0xf78] sm:$0xff]
    %v943 = vld [vmem:[#allocation7 + $0xf80] sm:$0xff]
    %v944 = vld [vmem:[#allocation7 + $0xf88] sm:$0xff]
    %v945 = vld [vmem:[#allocation7 + $0xf90] sm:$0xff]
    %v946 = vld [vmem:[#allocation7 + $0xf98] sm:$0xff]
    %v947 = vld [vmem:[#allocation7 + $0xfa0] sm:$0xff]
    %v948 = vld [vmem:[#allocation7 + $0xfa8] sm:$0xff]
    %v949 = vld [vmem:[#allocation7 + $0xfb0] sm:$0xff]
    %v950 = vld [vmem:[#allocation7 + $0xfb8] sm:$0xff]
    %v951 = vld [vmem:[#allocation7 + $0xfc0] sm:$0xff]
    %v952 = vld [vmem:[#allocation7 + $0xfc8] sm:$0xff]
    %v953 = vld [vmem:[#allocation7 + $0xfd0] sm:$0xff]
    %v954 = vld [vmem:[#allocation7 + $0xfd8] sm:$0xff]
    %v955 = vld [vmem:[#allocation7 + $0xfe0] sm:$0xff]
    %v956 = vld [vmem:[#allocation7 + $0xfe8] sm:$0xff]
    %v957 = vld [vmem:[#allocation7 + $0xff0] sm:$0xff]
    %v958 = vld [vmem:[#allocation7 + $0xff8] sm:$0xff]
    %v959 = vld [vmem:[#allocation9] sm:$0xff]
    %v961 = vlaneseq
    %v962 = vshrl.u32 %v961, 7
    %v963 = vsub.s32 0, %v962
    %v964 = vrot.slane %v959, %v963
    %v965 = vlaneseq
    %v966 = vshrl.u32 %v965, 7
    %v967 = vsub.s32 1, %v966
    %v968 = vrot.slane %v959, %v967
    %v969 = vlaneseq
    %v970 = vshrl.u32 %v969, 7
    %v971 = vsub.s32 2, %v970
    %v972 = vrot.slane %v959, %v971
    %v973 = vlaneseq
    %v974 = vshrl.u32 %v973, 7
    %v975 = vsub.s32 3, %v974
    %v976 = vrot.slane %v959, %v975
    %v977 = vlaneseq
    %v978 = vshrl.u32 %v977, 7
    %v979 = vsub.s32 4, %v978
    %v980 = vrot.slane %v959, %v979
    %v981 = vlaneseq
    %v982 = vshrl.u32 %v981, 7
    %v983 = vsub.s32 5, %v982
    %v984 = vrot.slane %v959, %v983
    %v985 = vlaneseq
    %v986 = vshrl.u32 %v985, 7
    %v987 = vsub.s32 6, %v986
    %v988 = vrot.slane %v959, %v987
    %v989 = vlaneseq
    %v990 = vshrl.u32 %v989, 7
    %v991 = vsub.s32 7, %v990
    %v992 = vrot.slane %v959, %v991
    %v1513 = vunpack.c.l.b16 %v447
    %v1514 = vunpack.c.h.b16 %v447
    %v1515 = vunpack.c.l.b16 %v448
    %v1516 = vunpack.c.h.b16 %v448
    %v1517 = vunpack.c.l.b16 %v449
    %v1518 = vunpack.c.h.b16 %v449
    %v1519 = vunpack.c.l.b16 %v450
    %v1520 = vunpack.c.h.b16 %v450
    %v1521 = vunpack.c.l.b16 %v451
    %v1522 = vunpack.c.h.b16 %v451
    %v1523 = vunpack.c.l.b16 %v452
    %v1524 = vunpack.c.h.b16 %v452
    %v1525 = vunpack.c.l.b16 %v453
    %v1526 = vunpack.c.h.b16 %v453
    %v1527 = vunpack.c.l.b16 %v454
    %v1528 = vunpack.c.h.b16 %v454
    %v1529 = vunpack.c.l.b16 %v455
    %v1530 = vunpack.c.h.b16 %v455
    %v1531 = vunpack.c.l.b16 %v456
    %v1532 = vunpack.c.h.b16 %v456
    %v1533 = vunpack.c.l.b16 %v457
    %v1534 = vunpack.c.h.b16 %v457
    %v1535 = vunpack.c.l.b16 %v458
    %v1536 = vunpack.c.h.b16 %v458
    %v1537 = vunpack.c.l.b16 %v459
    %v1538 = vunpack.c.h.b16 %v459
    %v1539 = vunpack.c.l.b16 %v460
    %v1540 = vunpack.c.h.b16 %v460
    %v1541 = vunpack.c.l.b16 %v461
    %v1542 = vunpack.c.h.b16 %v461
    %v1543 = vunpack.c.l.b16 %v462
    %v1544 = vunpack.c.h.b16 %v462
    %v1545 = vunpack.c.l.b16 %v463
    %v1546 = vunpack.c.h.b16 %v463
    %v1547 = vunpack.c.l.b16 %v464
    %v1548 = vunpack.c.h.b16 %v464
    %v1549 = vunpack.c.l.b16 %v465
    %v1550 = vunpack.c.h.b16 %v465
    %v1551 = vunpack.c.l.b16 %v466
    %v1552 = vunpack.c.h.b16 %v466
    %v1553 = vunpack.c.l.b16 %v467
    %v1554 = vunpack.c.h.b16 %v467
    %v1555 = vunpack.c.l.b16 %v468
    %v1556 = vunpack.c.h.b16 %v468
    %v1557 = vunpack.c.l.b16 %v469
    %v1558 = vunpack.c.h.b16 %v469
    %v1559 = vunpack.c.l.b16 %v470
    %v1560 = vunpack.c.h.b16 %v470
    %v1561 = vunpack.c.l.b16 %v471
    %v1562 = vunpack.c.h.b16 %v471
    %v1563 = vunpack.c.l.b16 %v472
    %v1564 = vunpack.c.h.b16 %v472
    %v1565 = vunpack.c.l.b16 %v473
    %v1566 = vunpack.c.h.b16 %v473
    %v1567 = vunpack.c.l.b16 %v474
    %v1568 = vunpack.c.h.b16 %v474
    %v1569 = vunpack.c.l.b16 %v475
    %v1570 = vunpack.c.h.b16 %v475
    %v1571 = vunpack.c.l.b16 %v476
    %v1572 = vunpack.c.h.b16 %v476
    %v1573 = vunpack.c.l.b16 %v477
    %v1574 = vunpack.c.h.b16 %v477
    %v1575 = vunpack.c.l.b16 %v478
    %v1576 = vunpack.c.h.b16 %v478
    %v1577 = vunpack.c.l.b16 %v479
    %v1578 = vunpack.c.h.b16 %v479
    %v1579 = vunpack.c.l.b16 %v480
    %v1580 = vunpack.c.h.b16 %v480
    %v1581 = vunpack.c.l.b16 %v481
    %v1582 = vunpack.c.h.b16 %v481
    %v1583 = vunpack.c.l.b16 %v482
    %v1584 = vunpack.c.h.b16 %v482
    %v1585 = vunpack.c.l.b16 %v483
    %v1586 = vunpack.c.h.b16 %v483
    %v1587 = vunpack.c.l.b16 %v484
    %v1588 = vunpack.c.h.b16 %v484
    %v1589 = vunpack.c.l.b16 %v485
    %v1590 = vunpack.c.h.b16 %v485
    %v1591 = vunpack.c.l.b16 %v486
    %v1592 = vunpack.c.h.b16 %v486
    %v1593 = vunpack.c.l.b16 %v487
    %v1594 = vunpack.c.h.b16 %v487
    %v1595 = vunpack.c.l.b16 %v488
    %v1596 = vunpack.c.h.b16 %v488
    %v1597 = vunpack.c.l.b16 %v489
    %v1598 = vunpack.c.h.b16 %v489
    %v1599 = vunpack.c.l.b16 %v490
    %v1600 = vunpack.c.h.b16 %v490
    %v1601 = vunpack.c.l.b16 %v491
    %v1602 = vunpack.c.h.b16 %v491
    %v1603 = vunpack.c.l.b16 %v492
    %v1604 = vunpack.c.h.b16 %v492
    %v1605 = vunpack.c.l.b16 %v493
    %v1606 = vunpack.c.h.b16 %v493
    %v1607 = vunpack.c.l.b16 %v494
    %v1608 = vunpack.c.h.b16 %v494
    %v1609 = vunpack.c.l.b16 %v495
    %v1610 = vunpack.c.h.b16 %v495
    %v1611 = vunpack.c.l.b16 %v496
    %v1612 = vunpack.c.h.b16 %v496
    %v1613 = vunpack.c.l.b16 %v497
    %v1614 = vunpack.c.h.b16 %v497
    %v1615 = vunpack.c.l.b16 %v498
    %v1616 = vunpack.c.h.b16 %v498
    %v1617 = vunpack.c.l.b16 %v499
    %v1618 = vunpack.c.h.b16 %v499
    %v1619 = vunpack.c.l.b16 %v500
    %v1620 = vunpack.c.h.b16 %v500
    %v1621 = vunpack.c.l.b16 %v501
    %v1622 = vunpack.c.h.b16 %v501
    %v1623 = vunpack.c.l.b16 %v502
    %v1624 = vunpack.c.h.b16 %v502
    %v1625 = vunpack.c.l.b16 %v503
    %v1626 = vunpack.c.h.b16 %v503
    %v1627 = vunpack.c.l.b16 %v504
    %v1628 = vunpack.c.h.b16 %v504
    %v1629 = vunpack.c.l.b16 %v505
    %v1630 = vunpack.c.h.b16 %v505
    %v1631 = vunpack.c.l.b16 %v506
    %v1632 = vunpack.c.h.b16 %v506
    %v1633 = vunpack.c.l.b16 %v507
    %v1634 = vunpack.c.h.b16 %v507
    %v1635 = vunpack.c.l.b16 %v508
    %v1636 = vunpack.c.h.b16 %v508
    %v1637 = vunpack.c.l.b16 %v509
    %v1638 = vunpack.c.h.b16 %v509
    %v1639 = vunpack.c.l.b16 %v510
    %v1640 = vunpack.c.h.b16 %v510
    %v1641 = vunpack.c.l.b16 %v511
    %v1642 = vunpack.c.h.b16 %v511
    %v1643 = vunpack.c.l.b16 %v512
    %v1644 = vunpack.c.h.b16 %v512
    %v1645 = vunpack.c.l.b16 %v513
    %v1646 = vunpack.c.h.b16 %v513
    %v1647 = vunpack.c.l.b16 %v514
    %v1648 = vunpack.c.h.b16 %v514
    %v1649 = vunpack.c.l.b16 %v515
    %v1650 = vunpack.c.h.b16 %v515
    %v1651 = vunpack.c.l.b16 %v516
    %v1652 = vunpack.c.h.b16 %v516
    %v1653 = vunpack.c.l.b16 %v517
    %v1654 = vunpack.c.h.b16 %v517
    %v1655 = vunpack.c.l.b16 %v518
    %v1656 = vunpack.c.h.b16 %v518
    %v1657 = vunpack.c.l.b16 %v519
    %v1658 = vunpack.c.h.b16 %v519
    %v1659 = vunpack.c.l.b16 %v520
    %v1660 = vunpack.c.h.b16 %v520
    %v1661 = vunpack.c.l.b16 %v521
    %v1662 = vunpack.c.h.b16 %v521
    %v1663 = vunpack.c.l.b16 %v522
    %v1664 = vunpack.c.h.b16 %v522
    %v1665 = vunpack.c.l.b16 %v523
    %v1666 = vunpack.c.h.b16 %v523
    %v1667 = vunpack.c.l.b16 %v524
    %v1668 = vunpack.c.h.b16 %v524
    %v1669 = vunpack.c.l.b16 %v525
    %v1670 = vunpack.c.h.b16 %v525
    %v1671 = vunpack.c.l.b16 %v526
    %v1672 = vunpack.c.h.b16 %v526
    %v1673 = vunpack.c.l.b16 %v527
    %v1674 = vunpack.c.h.b16 %v527
    %v1675 = vunpack.c.l.b16 %v528
    %v1676 = vunpack.c.h.b16 %v528
    %v1677 = vunpack.c.l.b16 %v529
    %v1678 = vunpack.c.h.b16 %v529
    %v1679 = vunpack.c.l.b16 %v530
    %v1680 = vunpack.c.h.b16 %v530
    %v1681 = vunpack.c.l.b16 %v531
    %v1682 = vunpack.c.h.b16 %v531
    %v1683 = vunpack.c.l.b16 %v532
    %v1684 = vunpack.c.h.b16 %v532
    %v1685 = vunpack.c.l.b16 %v533
    %v1686 = vunpack.c.h.b16 %v533
    %v1687 = vunpack.c.l.b16 %v534
    %v1688 = vunpack.c.h.b16 %v534
    %v1689 = vunpack.c.l.b16 %v535
    %v1690 = vunpack.c.h.b16 %v535
    %v1691 = vunpack.c.l.b16 %v536
    %v1692 = vunpack.c.h.b16 %v536
    %v1693 = vunpack.c.l.b16 %v537
    %v1694 = vunpack.c.h.b16 %v537
    %v1695 = vunpack.c.l.b16 %v538
    %v1696 = vunpack.c.h.b16 %v538
    %v1697 = vunpack.c.l.b16 %v539
    %v1698 = vunpack.c.h.b16 %v539
    %v1699 = vunpack.c.l.b16 %v540
    %v1700 = vunpack.c.h.b16 %v540
    %v1701 = vunpack.c.l.b16 %v541
    %v1702 = vunpack.c.h.b16 %v541
    %v1703 = vunpack.c.l.b16 %v542
    %v1704 = vunpack.c.h.b16 %v542
    %v1705 = vunpack.c.l.b16 %v543
    %v1706 = vunpack.c.h.b16 %v543
    %v1707 = vunpack.c.l.b16 %v544
    %v1708 = vunpack.c.h.b16 %v544
    %v1709 = vunpack.c.l.b16 %v545
    %v1710 = vunpack.c.h.b16 %v545
    %v1711 = vunpack.c.l.b16 %v546
    %v1712 = vunpack.c.h.b16 %v546
    %v1713 = vunpack.c.l.b16 %v547
    %v1714 = vunpack.c.h.b16 %v547
    %v1715 = vunpack.c.l.b16 %v548
    %v1716 = vunpack.c.h.b16 %v548
    %v1717 = vunpack.c.l.b16 %v549
    %v1718 = vunpack.c.h.b16 %v549
    %v1719 = vunpack.c.l.b16 %v550
    %v1720 = vunpack.c.h.b16 %v550
    %v1721 = vunpack.c.l.b16 %v551
    %v1722 = vunpack.c.h.b16 %v551
    %v1723 = vunpack.c.l.b16 %v552
    %v1724 = vunpack.c.h.b16 %v552
    %v1725 = vunpack.c.l.b16 %v553
    %v1726 = vunpack.c.h.b16 %v553
    %v1727 = vunpack.c.l.b16 %v554
    %v1728 = vunpack.c.h.b16 %v554
    %v1729 = vunpack.c.l.b16 %v555
    %v1730 = vunpack.c.h.b16 %v555
    %v1731 = vunpack.c.l.b16 %v556
    %v1732 = vunpack.c.h.b16 %v556
    %v1733 = vunpack.c.l.b16 %v557
    %v1734 = vunpack.c.h.b16 %v557
    %v1735 = vunpack.c.l.b16 %v558
    %v1736 = vunpack.c.h.b16 %v558
    %v1737 = vunpack.c.l.b16 %v559
    %v1738 = vunpack.c.h.b16 %v559
    %v1739 = vunpack.c.l.b16 %v560
    %v1740 = vunpack.c.h.b16 %v560
    %v1741 = vunpack.c.l.b16 %v561
    %v1742 = vunpack.c.h.b16 %v561
    %v1743 = vunpack.c.l.b16 %v562
    %v1744 = vunpack.c.h.b16 %v562
    %v1745 = vunpack.c.l.b16 %v563
    %v1746 = vunpack.c.h.b16 %v563
    %v1747 = vunpack.c.l.b16 %v564
    %v1748 = vunpack.c.h.b16 %v564
    %v1749 = vunpack.c.l.b16 %v565
    %v1750 = vunpack.c.h.b16 %v565
    %v1751 = vunpack.c.l.b16 %v566
    %v1752 = vunpack.c.h.b16 %v566
    %v1753 = vunpack.c.l.b16 %v567
    %v1754 = vunpack.c.h.b16 %v567
    %v1755 = vunpack.c.l.b16 %v568
    %v1756 = vunpack.c.h.b16 %v568
    %v1757 = vunpack.c.l.b16 %v569
    %v1758 = vunpack.c.h.b16 %v569
    %v1759 = vunpack.c.l.b16 %v570
    %v1760 = vunpack.c.h.b16 %v570
    %v1761 = vunpack.c.l.b16 %v571
    %v1762 = vunpack.c.h.b16 %v571
    %v1763 = vunpack.c.l.b16 %v572
    %v1764 = vunpack.c.h.b16 %v572
    %v1765 = vunpack.c.l.b16 %v573
    %v1766 = vunpack.c.h.b16 %v573
    %v1767 = vunpack.c.l.b16 %v574
    %v1768 = vunpack.c.h.b16 %v574
    %v1769 = vunpack.c.l.b16 %v575
    %v1770 = vunpack.c.h.b16 %v575
    %v1771 = vunpack.c.l.b16 %v576
    %v1772 = vunpack.c.h.b16 %v576
    %v1773 = vunpack.c.l.b16 %v577
    %v1774 = vunpack.c.h.b16 %v577
    %v1775 = vunpack.c.l.b16 %v578
    %v1776 = vunpack.c.h.b16 %v578
    %v1777 = vunpack.c.l.b16 %v579
    %v1778 = vunpack.c.h.b16 %v579
    %v1779 = vunpack.c.l.b16 %v580
    %v1780 = vunpack.c.h.b16 %v580
    %v1781 = vunpack.c.l.b16 %v581
    %v1782 = vunpack.c.h.b16 %v581
    %v1783 = vunpack.c.l.b16 %v582
    %v1784 = vunpack.c.h.b16 %v582
    %v1785 = vunpack.c.l.b16 %v583
    %v1786 = vunpack.c.h.b16 %v583
    %v1787 = vunpack.c.l.b16 %v584
    %v1788 = vunpack.c.h.b16 %v584
    %v1789 = vunpack.c.l.b16 %v585
    %v1790 = vunpack.c.h.b16 %v585
    %v1791 = vunpack.c.l.b16 %v586
    %v1792 = vunpack.c.h.b16 %v586
    %v1793 = vunpack.c.l.b16 %v587
    %v1794 = vunpack.c.h.b16 %v587
    %v1795 = vunpack.c.l.b16 %v588
    %v1796 = vunpack.c.h.b16 %v588
    %v1797 = vunpack.c.l.b16 %v589
    %v1798 = vunpack.c.h.b16 %v589
    %v1799 = vunpack.c.l.b16 %v590
    %v1800 = vunpack.c.h.b16 %v590
    %v1801 = vunpack.c.l.b16 %v591
    %v1802 = vunpack.c.h.b16 %v591
    %v1803 = vunpack.c.l.b16 %v592
    %v1804 = vunpack.c.h.b16 %v592
    %v1805 = vunpack.c.l.b16 %v593
    %v1806 = vunpack.c.h.b16 %v593
    %v1807 = vunpack.c.l.b16 %v594
    %v1808 = vunpack.c.h.b16 %v594
    %v1809 = vunpack.c.l.b16 %v595
    %v1810 = vunpack.c.h.b16 %v595
    %v1811 = vunpack.c.l.b16 %v596
    %v1812 = vunpack.c.h.b16 %v596
    %v1813 = vunpack.c.l.b16 %v597
    %v1814 = vunpack.c.h.b16 %v597
    %v1815 = vunpack.c.l.b16 %v598
    %v1816 = vunpack.c.h.b16 %v598
    %v1817 = vunpack.c.l.b16 %v599
    %v1818 = vunpack.c.h.b16 %v599
    %v1819 = vunpack.c.l.b16 %v600
    %v1820 = vunpack.c.h.b16 %v600
    %v1821 = vunpack.c.l.b16 %v601
    %v1822 = vunpack.c.h.b16 %v601
    %v1823 = vunpack.c.l.b16 %v602
    %v1824 = vunpack.c.h.b16 %v602
    %v1825 = vunpack.c.l.b16 %v603
    %v1826 = vunpack.c.h.b16 %v603
    %v1827 = vunpack.c.l.b16 %v604
    %v1828 = vunpack.c.h.b16 %v604
    %v1829 = vunpack.c.l.b16 %v605
    %v1830 = vunpack.c.h.b16 %v605
    %v1831 = vunpack.c.l.b16 %v606
    %v1832 = vunpack.c.h.b16 %v606
    %v1833 = vunpack.c.l.b16 %v607
    %v1834 = vunpack.c.h.b16 %v607
    %v1835 = vunpack.c.l.b16 %v608
    %v1836 = vunpack.c.h.b16 %v608
    %v1837 = vunpack.c.l.b16 %v609
    %v1838 = vunpack.c.h.b16 %v609
    %v1839 = vunpack.c.l.b16 %v610
    %v1840 = vunpack.c.h.b16 %v610
    %v1841 = vunpack.c.l.b16 %v611
    %v1842 = vunpack.c.h.b16 %v611
    %v1843 = vunpack.c.l.b16 %v612
    %v1844 = vunpack.c.h.b16 %v612
    %v1845 = vunpack.c.l.b16 %v613
    %v1846 = vunpack.c.h.b16 %v613
    %v1847 = vunpack.c.l.b16 %v614
    %v1848 = vunpack.c.h.b16 %v614
    %v1849 = vunpack.c.l.b16 %v615
    %v1850 = vunpack.c.h.b16 %v615
    %v1851 = vunpack.c.l.b16 %v616
    %v1852 = vunpack.c.h.b16 %v616
    %v1853 = vunpack.c.l.b16 %v617
    %v1854 = vunpack.c.h.b16 %v617
    %v1855 = vunpack.c.l.b16 %v618
    %v1856 = vunpack.c.h.b16 %v618
    %v1857 = vunpack.c.l.b16 %v619
    %v1858 = vunpack.c.h.b16 %v619
    %v1859 = vunpack.c.l.b16 %v620
    %v1860 = vunpack.c.h.b16 %v620
    %v1861 = vunpack.c.l.b16 %v621
    %v1862 = vunpack.c.h.b16 %v621
    %v1863 = vunpack.c.l.b16 %v622
    %v1864 = vunpack.c.h.b16 %v622
    %v1865 = vunpack.c.l.b16 %v623
    %v1866 = vunpack.c.h.b16 %v623
    %v1867 = vunpack.c.l.b16 %v624
    %v1868 = vunpack.c.h.b16 %v624
    %v1869 = vunpack.c.l.b16 %v625
    %v1870 = vunpack.c.h.b16 %v625
    %v1871 = vunpack.c.l.b16 %v626
    %v1872 = vunpack.c.h.b16 %v626
    %v1873 = vunpack.c.l.b16 %v627
    %v1874 = vunpack.c.h.b16 %v627
    %v1875 = vunpack.c.l.b16 %v628
    %v1876 = vunpack.c.h.b16 %v628
    %v1877 = vunpack.c.l.b16 %v629
    %v1878 = vunpack.c.h.b16 %v629
    %v1879 = vunpack.c.l.b16 %v630
    %v1880 = vunpack.c.h.b16 %v630
    %v1881 = vunpack.c.l.b16 %v631
    %v1882 = vunpack.c.h.b16 %v631
    %v1883 = vunpack.c.l.b16 %v632
    %v1884 = vunpack.c.h.b16 %v632
    %v1885 = vunpack.c.l.b16 %v633
    %v1886 = vunpack.c.h.b16 %v633
    %v1887 = vunpack.c.l.b16 %v634
    %v1888 = vunpack.c.h.b16 %v634
    %v1889 = vunpack.c.l.b16 %v635
    %v1890 = vunpack.c.h.b16 %v635
    %v1891 = vunpack.c.l.b16 %v636
    %v1892 = vunpack.c.h.b16 %v636
    %v1893 = vunpack.c.l.b16 %v637
    %v1894 = vunpack.c.h.b16 %v637
    %v1895 = vunpack.c.l.b16 %v638
    %v1896 = vunpack.c.h.b16 %v638
    %v1897 = vunpack.c.l.b16 %v639
    %v1898 = vunpack.c.h.b16 %v639
    %v1899 = vunpack.c.l.b16 %v640
    %v1900 = vunpack.c.h.b16 %v640
    %v1901 = vunpack.c.l.b16 %v641
    %v1902 = vunpack.c.h.b16 %v641
    %v1903 = vunpack.c.l.b16 %v642
    %v1904 = vunpack.c.h.b16 %v642
    %v1905 = vunpack.c.l.b16 %v643
    %v1906 = vunpack.c.h.b16 %v643
    %v1907 = vunpack.c.l.b16 %v644
    %v1908 = vunpack.c.h.b16 %v644
    %v1909 = vunpack.c.l.b16 %v645
    %v1910 = vunpack.c.h.b16 %v645
    %v1911 = vunpack.c.l.b16 %v646
    %v1912 = vunpack.c.h.b16 %v646
    %v1913 = vunpack.c.l.b16 %v647
    %v1914 = vunpack.c.h.b16 %v647
    %v1915 = vunpack.c.l.b16 %v648
    %v1916 = vunpack.c.h.b16 %v648
    %v1917 = vunpack.c.l.b16 %v649
    %v1918 = vunpack.c.h.b16 %v649
    %v1919 = vunpack.c.l.b16 %v650
    %v1920 = vunpack.c.h.b16 %v650
    %v1921 = vunpack.c.l.b16 %v651
    %v1922 = vunpack.c.h.b16 %v651
    %v1923 = vunpack.c.l.b16 %v652
    %v1924 = vunpack.c.h.b16 %v652
    %v1925 = vunpack.c.l.b16 %v653
    %v1926 = vunpack.c.h.b16 %v653
    %v1927 = vunpack.c.l.b16 %v654
    %v1928 = vunpack.c.h.b16 %v654
    %v1929 = vunpack.c.l.b16 %v655
    %v1930 = vunpack.c.h.b16 %v655
    %v1931 = vunpack.c.l.b16 %v656
    %v1932 = vunpack.c.h.b16 %v656
    %v1933 = vunpack.c.l.b16 %v657
    %v1934 = vunpack.c.h.b16 %v657
    %v1935 = vunpack.c.l.b16 %v658
    %v1936 = vunpack.c.h.b16 %v658
    %v1937 = vunpack.c.l.b16 %v659
    %v1938 = vunpack.c.h.b16 %v659
    %v1939 = vunpack.c.l.b16 %v660
    %v1940 = vunpack.c.h.b16 %v660
    %v1941 = vunpack.c.l.b16 %v661
    %v1942 = vunpack.c.h.b16 %v661
    %v1943 = vunpack.c.l.b16 %v662
    %v1944 = vunpack.c.h.b16 %v662
    %v1945 = vunpack.c.l.b16 %v663
    %v1946 = vunpack.c.h.b16 %v663
    %v1947 = vunpack.c.l.b16 %v664
    %v1948 = vunpack.c.h.b16 %v664
    %v1949 = vunpack.c.l.b16 %v665
    %v1950 = vunpack.c.h.b16 %v665
    %v1951 = vunpack.c.l.b16 %v666
    %v1952 = vunpack.c.h.b16 %v666
    %v1953 = vunpack.c.l.b16 %v667
    %v1954 = vunpack.c.h.b16 %v667
    %v1955 = vunpack.c.l.b16 %v668
    %v1956 = vunpack.c.h.b16 %v668
    %v1957 = vunpack.c.l.b16 %v669
    %v1958 = vunpack.c.h.b16 %v669
    %v1959 = vunpack.c.l.b16 %v670
    %v1960 = vunpack.c.h.b16 %v670
    %v1961 = vunpack.c.l.b16 %v671
    %v1962 = vunpack.c.h.b16 %v671
    %v1963 = vunpack.c.l.b16 %v672
    %v1964 = vunpack.c.h.b16 %v672
    %v1965 = vunpack.c.l.b16 %v673
    %v1966 = vunpack.c.h.b16 %v673
    %v1967 = vunpack.c.l.b16 %v674
    %v1968 = vunpack.c.h.b16 %v674
    %v1969 = vunpack.c.l.b16 %v675
    %v1970 = vunpack.c.h.b16 %v675
    %v1971 = vunpack.c.l.b16 %v676
    %v1972 = vunpack.c.h.b16 %v676
    %v1973 = vunpack.c.l.b16 %v677
    %v1974 = vunpack.c.h.b16 %v677
    %v1975 = vunpack.c.l.b16 %v678
    %v1976 = vunpack.c.h.b16 %v678
    %v1977 = vunpack.c.l.b16 %v679
    %v1978 = vunpack.c.h.b16 %v679
    %v1979 = vunpack.c.l.b16 %v680
    %v1980 = vunpack.c.h.b16 %v680
    %v1981 = vunpack.c.l.b16 %v681
    %v1982 = vunpack.c.h.b16 %v681
    %v1983 = vunpack.c.l.b16 %v682
    %v1984 = vunpack.c.h.b16 %v682
    %v1985 = vunpack.c.l.b16 %v683
    %v1986 = vunpack.c.h.b16 %v683
    %v1987 = vunpack.c.l.b16 %v684
    %v1988 = vunpack.c.h.b16 %v684
    %v1989 = vunpack.c.l.b16 %v685
    %v1990 = vunpack.c.h.b16 %v685
    %v1991 = vunpack.c.l.b16 %v686
    %v1992 = vunpack.c.h.b16 %v686
    %v1993 = vunpack.c.l.b16 %v687
    %v1994 = vunpack.c.h.b16 %v687
    %v1995 = vunpack.c.l.b16 %v688
    %v1996 = vunpack.c.h.b16 %v688
    %v1997 = vunpack.c.l.b16 %v689
    %v1998 = vunpack.c.h.b16 %v689
    %v1999 = vunpack.c.l.b16 %v690
    %v2000 = vunpack.c.h.b16 %v690
    %v2001 = vunpack.c.l.b16 %v691
    %v2002 = vunpack.c.h.b16 %v691
    %v2003 = vunpack.c.l.b16 %v692
    %v2004 = vunpack.c.h.b16 %v692
    %v2005 = vunpack.c.l.b16 %v693
    %v2006 = vunpack.c.h.b16 %v693
    %v2007 = vunpack.c.l.b16 %v694
    %v2008 = vunpack.c.h.b16 %v694
    %v2009 = vunpack.c.l.b16 %v695
    %v2010 = vunpack.c.h.b16 %v695
    %v2011 = vunpack.c.l.b16 %v696
    %v2012 = vunpack.c.h.b16 %v696
    %v2013 = vunpack.c.l.b16 %v697
    %v2014 = vunpack.c.h.b16 %v697
    %v2015 = vunpack.c.l.b16 %v698
    %v2016 = vunpack.c.h.b16 %v698
    %v2017 = vunpack.c.l.b16 %v699
    %v2018 = vunpack.c.h.b16 %v699
    %v2019 = vunpack.c.l.b16 %v700
    %v2020 = vunpack.c.h.b16 %v700
    %v2021 = vunpack.c.l.b16 %v701
    %v2022 = vunpack.c.h.b16 %v701
    %v2023 = vunpack.c.l.b16 %v702
    %v2024 = vunpack.c.h.b16 %v702
    %v2025 = vunpack.c.l.b16 %v703
    %v2026 = vunpack.c.h.b16 %v703
    %v2027 = vunpack.c.l.b16 %v704
    %v2028 = vunpack.c.h.b16 %v704
    %v2029 = vunpack.c.l.b16 %v705
    %v2030 = vunpack.c.h.b16 %v705
    %v2031 = vunpack.c.l.b16 %v706
    %v2032 = vunpack.c.h.b16 %v706
    %v2033 = vunpack.c.l.b16 %v707
    %v2034 = vunpack.c.h.b16 %v707
    %v2035 = vunpack.c.l.b16 %v708
    %v2036 = vunpack.c.h.b16 %v708
    %v2037 = vunpack.c.l.b16 %v709
    %v2038 = vunpack.c.h.b16 %v709
    %v2039 = vunpack.c.l.b16 %v710
    %v2040 = vunpack.c.h.b16 %v710
    %v2041 = vunpack.c.l.b16 %v711
    %v2042 = vunpack.c.h.b16 %v711
    %v2043 = vunpack.c.l.b16 %v712
    %v2044 = vunpack.c.h.b16 %v712
    %v2045 = vunpack.c.l.b16 %v713
    %v2046 = vunpack.c.h.b16 %v713
    %v2047 = vunpack.c.l.b16 %v714
    %v2048 = vunpack.c.h.b16 %v714
    %v2049 = vunpack.c.l.b16 %v715
    %v2050 = vunpack.c.h.b16 %v715
    %v2051 = vunpack.c.l.b16 %v716
    %v2052 = vunpack.c.h.b16 %v716
    %v2053 = vunpack.c.l.b16 %v717
    %v2054 = vunpack.c.h.b16 %v717
    %v2055 = vunpack.c.l.b16 %v718
    %v2056 = vunpack.c.h.b16 %v718
    %v2057 = vunpack.c.l.b16 %v719
    %v2058 = vunpack.c.h.b16 %v719
    %v2059 = vunpack.c.l.b16 %v720
    %v2060 = vunpack.c.h.b16 %v720
    %v2061 = vunpack.c.l.b16 %v721
    %v2062 = vunpack.c.h.b16 %v721
    %v2063 = vunpack.c.l.b16 %v722
    %v2064 = vunpack.c.h.b16 %v722
    %v2065 = vunpack.c.l.b16 %v723
    %v2066 = vunpack.c.h.b16 %v723
    %v2067 = vunpack.c.l.b16 %v724
    %v2068 = vunpack.c.h.b16 %v724
    %v2069 = vunpack.c.l.b16 %v725
    %v2070 = vunpack.c.h.b16 %v725
    %v2071 = vunpack.c.l.b16 %v726
    %v2072 = vunpack.c.h.b16 %v726
    %v2073 = vunpack.c.l.b16 %v727
    %v2074 = vunpack.c.h.b16 %v727
    %v2075 = vunpack.c.l.b16 %v728
    %v2076 = vunpack.c.h.b16 %v728
    %v2077 = vunpack.c.l.b16 %v729
    %v2078 = vunpack.c.h.b16 %v729
    %v2079 = vunpack.c.l.b16 %v730
    %v2080 = vunpack.c.h.b16 %v730
    %v2081 = vunpack.c.l.b16 %v731
    %v2082 = vunpack.c.h.b16 %v731
    %v2083 = vunpack.c.l.b16 %v732
    %v2084 = vunpack.c.h.b16 %v732
    %v2085 = vunpack.c.l.b16 %v733
    %v2086 = vunpack.c.h.b16 %v733
    %v2087 = vunpack.c.l.b16 %v734
    %v2088 = vunpack.c.h.b16 %v734
    %v2089 = vunpack.c.l.b16 %v735
    %v2090 = vunpack.c.h.b16 %v735
    %v2091 = vunpack.c.l.b16 %v736
    %v2092 = vunpack.c.h.b16 %v736
    %v2093 = vunpack.c.l.b16 %v737
    %v2094 = vunpack.c.h.b16 %v737
    %v2095 = vunpack.c.l.b16 %v738
    %v2096 = vunpack.c.h.b16 %v738
    %v2097 = vunpack.c.l.b16 %v739
    %v2098 = vunpack.c.h.b16 %v739
    %v2099 = vunpack.c.l.b16 %v740
    %v2100 = vunpack.c.h.b16 %v740
    %v2101 = vunpack.c.l.b16 %v741
    %v2102 = vunpack.c.h.b16 %v741
    %v2103 = vunpack.c.l.b16 %v742
    %v2104 = vunpack.c.h.b16 %v742
    %v2105 = vunpack.c.l.b16 %v743
    %v2106 = vunpack.c.h.b16 %v743
    %v2107 = vunpack.c.l.b16 %v744
    %v2108 = vunpack.c.h.b16 %v744
    %v2109 = vunpack.c.l.b16 %v745
    %v2110 = vunpack.c.h.b16 %v745
    %v2111 = vunpack.c.l.b16 %v746
    %v2112 = vunpack.c.h.b16 %v746
    %v2113 = vunpack.c.l.b16 %v747
    %v2114 = vunpack.c.h.b16 %v747
    %v2115 = vunpack.c.l.b16 %v748
    %v2116 = vunpack.c.h.b16 %v748
    %v2117 = vunpack.c.l.b16 %v749
    %v2118 = vunpack.c.h.b16 %v749
    %v2119 = vunpack.c.l.b16 %v750
    %v2120 = vunpack.c.h.b16 %v750
    %v2121 = vunpack.c.l.b16 %v751
    %v2122 = vunpack.c.h.b16 %v751
    %v2123 = vunpack.c.l.b16 %v752
    %v2124 = vunpack.c.h.b16 %v752
    %v2125 = vunpack.c.l.b16 %v753
    %v2126 = vunpack.c.h.b16 %v753
    %v2127 = vunpack.c.l.b16 %v754
    %v2128 = vunpack.c.h.b16 %v754
    %v2129 = vunpack.c.l.b16 %v755
    %v2130 = vunpack.c.h.b16 %v755
    %v2131 = vunpack.c.l.b16 %v756
    %v2132 = vunpack.c.h.b16 %v756
    %v2133 = vunpack.c.l.b16 %v757
    %v2134 = vunpack.c.h.b16 %v757
    %v2135 = vunpack.c.l.b16 %v758
    %v2136 = vunpack.c.h.b16 %v758
    %v2137 = vunpack.c.l.b16 %v759
    %v2138 = vunpack.c.h.b16 %v759
    %v2139 = vunpack.c.l.b16 %v760
    %v2140 = vunpack.c.h.b16 %v760
    %v2141 = vunpack.c.l.b16 %v761
    %v2142 = vunpack.c.h.b16 %v761
    %v2143 = vunpack.c.l.b16 %v762
    %v2144 = vunpack.c.h.b16 %v762
    %v2145 = vunpack.c.l.b16 %v763
    %v2146 = vunpack.c.h.b16 %v763
    %v2147 = vunpack.c.l.b16 %v764
    %v2148 = vunpack.c.h.b16 %v764
    %v2149 = vunpack.c.l.b16 %v765
    %v2150 = vunpack.c.h.b16 %v765
    %v2151 = vunpack.c.l.b16 %v766
    %v2152 = vunpack.c.h.b16 %v766
    %v2153 = vunpack.c.l.b16 %v767
    %v2154 = vunpack.c.h.b16 %v767
    %v2155 = vunpack.c.l.b16 %v768
    %v2156 = vunpack.c.h.b16 %v768
    %v2157 = vunpack.c.l.b16 %v769
    %v2158 = vunpack.c.h.b16 %v769
    %v2159 = vunpack.c.l.b16 %v770
    %v2160 = vunpack.c.h.b16 %v770
    %v2161 = vunpack.c.l.b16 %v771
    %v2162 = vunpack.c.h.b16 %v771
    %v2163 = vunpack.c.l.b16 %v772
    %v2164 = vunpack.c.h.b16 %v772
    %v2165 = vunpack.c.l.b16 %v773
    %v2166 = vunpack.c.h.b16 %v773
    %v2167 = vunpack.c.l.b16 %v774
    %v2168 = vunpack.c.h.b16 %v774
    %v2169 = vunpack.c.l.b16 %v775
    %v2170 = vunpack.c.h.b16 %v775
    %v2171 = vunpack.c.l.b16 %v776
    %v2172 = vunpack.c.h.b16 %v776
    %v2173 = vunpack.c.l.b16 %v777
    %v2174 = vunpack.c.h.b16 %v777
    %v2175 = vunpack.c.l.b16 %v778
    %v2176 = vunpack.c.h.b16 %v778
    %v2177 = vunpack.c.l.b16 %v779
    %v2178 = vunpack.c.h.b16 %v779
    %v2179 = vunpack.c.l.b16 %v780
    %v2180 = vunpack.c.h.b16 %v780
    %v2181 = vunpack.c.l.b16 %v781
    %v2182 = vunpack.c.h.b16 %v781
    %v2183 = vunpack.c.l.b16 %v782
    %v2184 = vunpack.c.h.b16 %v782
    %v2185 = vunpack.c.l.b16 %v783
    %v2186 = vunpack.c.h.b16 %v783
    %v2187 = vunpack.c.l.b16 %v784
    %v2188 = vunpack.c.h.b16 %v784
    %v2189 = vunpack.c.l.b16 %v785
    %v2190 = vunpack.c.h.b16 %v785
    %v2191 = vunpack.c.l.b16 %v786
    %v2192 = vunpack.c.h.b16 %v786
    %v2193 = vunpack.c.l.b16 %v787
    %v2194 = vunpack.c.h.b16 %v787
    %v2195 = vunpack.c.l.b16 %v788
    %v2196 = vunpack.c.h.b16 %v788
    %v2197 = vunpack.c.l.b16 %v789
    %v2198 = vunpack.c.h.b16 %v789
    %v2199 = vunpack.c.l.b16 %v790
    %v2200 = vunpack.c.h.b16 %v790
    %v2201 = vunpack.c.l.b16 %v791
    %v2202 = vunpack.c.h.b16 %v791
    %v2203 = vunpack.c.l.b16 %v792
    %v2204 = vunpack.c.h.b16 %v792
    %v2205 = vunpack.c.l.b16 %v793
    %v2206 = vunpack.c.h.b16 %v793
    %v2207 = vunpack.c.l.b16 %v794
    %v2208 = vunpack.c.h.b16 %v794
    %v2209 = vunpack.c.l.b16 %v795
    %v2210 = vunpack.c.h.b16 %v795
    %v2211 = vunpack.c.l.b16 %v796
    %v2212 = vunpack.c.h.b16 %v796
    %v2213 = vunpack.c.l.b16 %v797
    %v2214 = vunpack.c.h.b16 %v797
    %v2215 = vunpack.c.l.b16 %v798
    %v2216 = vunpack.c.h.b16 %v798
    %v2217 = vunpack.c.l.b16 %v799
    %v2218 = vunpack.c.h.b16 %v799
    %v2219 = vunpack.c.l.b16 %v800
    %v2220 = vunpack.c.h.b16 %v800
    %v2221 = vunpack.c.l.b16 %v801
    %v2222 = vunpack.c.h.b16 %v801
    %v2223 = vunpack.c.l.b16 %v802
    %v2224 = vunpack.c.h.b16 %v802
    %v2225 = vunpack.c.l.b16 %v803
    %v2226 = vunpack.c.h.b16 %v803
    %v2227 = vunpack.c.l.b16 %v804
    %v2228 = vunpack.c.h.b16 %v804
    %v2229 = vunpack.c.l.b16 %v805
    %v2230 = vunpack.c.h.b16 %v805
    %v2231 = vunpack.c.l.b16 %v806
    %v2232 = vunpack.c.h.b16 %v806
    %v2233 = vunpack.c.l.b16 %v807
    %v2234 = vunpack.c.h.b16 %v807
    %v2235 = vunpack.c.l.b16 %v808
    %v2236 = vunpack.c.h.b16 %v808
    %v2237 = vunpack.c.l.b16 %v809
    %v2238 = vunpack.c.h.b16 %v809
    %v2239 = vunpack.c.l.b16 %v810
    %v2240 = vunpack.c.h.b16 %v810
    %v2241 = vunpack.c.l.b16 %v811
    %v2242 = vunpack.c.h.b16 %v811
    %v2243 = vunpack.c.l.b16 %v812
    %v2244 = vunpack.c.h.b16 %v812
    %v2245 = vunpack.c.l.b16 %v813
    %v2246 = vunpack.c.h.b16 %v813
    %v2247 = vunpack.c.l.b16 %v814
    %v2248 = vunpack.c.h.b16 %v814
    %v2249 = vunpack.c.l.b16 %v815
    %v2250 = vunpack.c.h.b16 %v815
    %v2251 = vunpack.c.l.b16 %v816
    %v2252 = vunpack.c.h.b16 %v816
    %v2253 = vunpack.c.l.b16 %v817
    %v2254 = vunpack.c.h.b16 %v817
    %v2255 = vunpack.c.l.b16 %v818
    %v2256 = vunpack.c.h.b16 %v818
    %v2257 = vunpack.c.l.b16 %v819
    %v2258 = vunpack.c.h.b16 %v819
    %v2259 = vunpack.c.l.b16 %v820
    %v2260 = vunpack.c.h.b16 %v820
    %v2261 = vunpack.c.l.b16 %v821
    %v2262 = vunpack.c.h.b16 %v821
    %v2263 = vunpack.c.l.b16 %v822
    %v2264 = vunpack.c.h.b16 %v822
    %v2265 = vunpack.c.l.b16 %v823
    %v2266 = vunpack.c.h.b16 %v823
    %v2267 = vunpack.c.l.b16 %v824
    %v2268 = vunpack.c.h.b16 %v824
    %v2269 = vunpack.c.l.b16 %v825
    %v2270 = vunpack.c.h.b16 %v825
    %v2271 = vunpack.c.l.b16 %v826
    %v2272 = vunpack.c.h.b16 %v826
    %v2273 = vunpack.c.l.b16 %v827
    %v2274 = vunpack.c.h.b16 %v827
    %v2275 = vunpack.c.l.b16 %v828
    %v2276 = vunpack.c.h.b16 %v828
    %v2277 = vunpack.c.l.b16 %v829
    %v2278 = vunpack.c.h.b16 %v829
    %v2279 = vunpack.c.l.b16 %v830
    %v2280 = vunpack.c.h.b16 %v830
    %v2281 = vunpack.c.l.b16 %v831
    %v2282 = vunpack.c.h.b16 %v831
    %v2283 = vunpack.c.l.b16 %v832
    %v2284 = vunpack.c.h.b16 %v832
    %v2285 = vunpack.c.l.b16 %v833
    %v2286 = vunpack.c.h.b16 %v833
    %v2287 = vunpack.c.l.b16 %v834
    %v2288 = vunpack.c.h.b16 %v834
    %v2289 = vunpack.c.l.b16 %v835
    %v2290 = vunpack.c.h.b16 %v835
    %v2291 = vunpack.c.l.b16 %v836
    %v2292 = vunpack.c.h.b16 %v836
    %v2293 = vunpack.c.l.b16 %v837
    %v2294 = vunpack.c.h.b16 %v837
    %v2295 = vunpack.c.l.b16 %v838
    %v2296 = vunpack.c.h.b16 %v838
    %v2297 = vunpack.c.l.b16 %v839
    %v2298 = vunpack.c.h.b16 %v839
    %v2299 = vunpack.c.l.b16 %v840
    %v2300 = vunpack.c.h.b16 %v840
    %v2301 = vunpack.c.l.b16 %v841
    %v2302 = vunpack.c.h.b16 %v841
    %v2303 = vunpack.c.l.b16 %v842
    %v2304 = vunpack.c.h.b16 %v842
    %v2305 = vunpack.c.l.b16 %v843
    %v2306 = vunpack.c.h.b16 %v843
    %v2307 = vunpack.c.l.b16 %v844
    %v2308 = vunpack.c.h.b16 %v844
    %v2309 = vunpack.c.l.b16 %v845
    %v2310 = vunpack.c.h.b16 %v845
    %v2311 = vunpack.c.l.b16 %v846
    %v2312 = vunpack.c.h.b16 %v846
    %v2313 = vunpack.c.l.b16 %v847
    %v2314 = vunpack.c.h.b16 %v847
    %v2315 = vunpack.c.l.b16 %v848
    %v2316 = vunpack.c.h.b16 %v848
    %v2317 = vunpack.c.l.b16 %v849
    %v2318 = vunpack.c.h.b16 %v849
    %v2319 = vunpack.c.l.b16 %v850
    %v2320 = vunpack.c.h.b16 %v850
    %v2321 = vunpack.c.l.b16 %v851
    %v2322 = vunpack.c.h.b16 %v851
    %v2323 = vunpack.c.l.b16 %v852
    %v2324 = vunpack.c.h.b16 %v852
    %v2325 = vunpack.c.l.b16 %v853
    %v2326 = vunpack.c.h.b16 %v853
    %v2327 = vunpack.c.l.b16 %v854
    %v2328 = vunpack.c.h.b16 %v854
    %v2329 = vunpack.c.l.b16 %v855
    %v2330 = vunpack.c.h.b16 %v855
    %v2331 = vunpack.c.l.b16 %v856
    %v2332 = vunpack.c.h.b16 %v856
    %v2333 = vunpack.c.l.b16 %v857
    %v2334 = vunpack.c.h.b16 %v857
    %v2335 = vunpack.c.l.b16 %v858
    %v2336 = vunpack.c.h.b16 %v858
    %v2337 = vunpack.c.l.b16 %v859
    %v2338 = vunpack.c.h.b16 %v859
    %v2339 = vunpack.c.l.b16 %v860
    %v2340 = vunpack.c.h.b16 %v860
    %v2341 = vunpack.c.l.b16 %v861
    %v2342 = vunpack.c.h.b16 %v861
    %v2343 = vunpack.c.l.b16 %v862
    %v2344 = vunpack.c.h.b16 %v862
    %v2345 = vunpack.c.l.b16 %v863
    %v2346 = vunpack.c.h.b16 %v863
    %v2347 = vunpack.c.l.b16 %v864
    %v2348 = vunpack.c.h.b16 %v864
    %v2349 = vunpack.c.l.b16 %v865
    %v2350 = vunpack.c.h.b16 %v865
    %v2351 = vunpack.c.l.b16 %v866
    %v2352 = vunpack.c.h.b16 %v866
    %v2353 = vunpack.c.l.b16 %v867
    %v2354 = vunpack.c.h.b16 %v867
    %v2355 = vunpack.c.l.b16 %v868
    %v2356 = vunpack.c.h.b16 %v868
    %v2357 = vunpack.c.l.b16 %v869
    %v2358 = vunpack.c.h.b16 %v869
    %v2359 = vunpack.c.l.b16 %v870
    %v2360 = vunpack.c.h.b16 %v870
    %v2361 = vunpack.c.l.b16 %v871
    %v2362 = vunpack.c.h.b16 %v871
    %v2363 = vunpack.c.l.b16 %v872
    %v2364 = vunpack.c.h.b16 %v872
    %v2365 = vunpack.c.l.b16 %v873
    %v2366 = vunpack.c.h.b16 %v873
    %v2367 = vunpack.c.l.b16 %v874
    %v2368 = vunpack.c.h.b16 %v874
    %v2369 = vunpack.c.l.b16 %v875
    %v2370 = vunpack.c.h.b16 %v875
    %v2371 = vunpack.c.l.b16 %v876
    %v2372 = vunpack.c.h.b16 %v876
    %v2373 = vunpack.c.l.b16 %v877
    %v2374 = vunpack.c.h.b16 %v877
    %v2375 = vunpack.c.l.b16 %v878
    %v2376 = vunpack.c.h.b16 %v878
    %v2377 = vunpack.c.l.b16 %v879
    %v2378 = vunpack.c.h.b16 %v879
    %v2379 = vunpack.c.l.b16 %v880
    %v2380 = vunpack.c.h.b16 %v880
    %v2381 = vunpack.c.l.b16 %v881
    %v2382 = vunpack.c.h.b16 %v881
    %v2383 = vunpack.c.l.b16 %v882
    %v2384 = vunpack.c.h.b16 %v882
    %v2385 = vunpack.c.l.b16 %v883
    %v2386 = vunpack.c.h.b16 %v883
    %v2387 = vunpack.c.l.b16 %v884
    %v2388 = vunpack.c.h.b16 %v884
    %v2389 = vunpack.c.l.b16 %v885
    %v2390 = vunpack.c.h.b16 %v885
    %v2391 = vunpack.c.l.b16 %v886
    %v2392 = vunpack.c.h.b16 %v886
    %v2393 = vunpack.c.l.b16 %v887
    %v2394 = vunpack.c.h.b16 %v887
    %v2395 = vunpack.c.l.b16 %v888
    %v2396 = vunpack.c.h.b16 %v888
    %v2397 = vunpack.c.l.b16 %v889
    %v2398 = vunpack.c.h.b16 %v889
    %v2399 = vunpack.c.l.b16 %v890
    %v2400 = vunpack.c.h.b16 %v890
    %v2401 = vunpack.c.l.b16 %v891
    %v2402 = vunpack.c.h.b16 %v891
    %v2403 = vunpack.c.l.b16 %v892
    %v2404 = vunpack.c.h.b16 %v892
    %v2405 = vunpack.c.l.b16 %v893
    %v2406 = vunpack.c.h.b16 %v893
    %v2407 = vunpack.c.l.b16 %v894
    %v2408 = vunpack.c.h.b16 %v894
    %v2409 = vunpack.c.l.b16 %v895
    %v2410 = vunpack.c.h.b16 %v895
    %v2411 = vunpack.c.l.b16 %v896
    %v2412 = vunpack.c.h.b16 %v896
    %v2413 = vunpack.c.l.b16 %v897
    %v2414 = vunpack.c.h.b16 %v897
    %v2415 = vunpack.c.l.b16 %v898
    %v2416 = vunpack.c.h.b16 %v898
    %v2417 = vunpack.c.l.b16 %v899
    %v2418 = vunpack.c.h.b16 %v899
    %v2419 = vunpack.c.l.b16 %v900
    %v2420 = vunpack.c.h.b16 %v900
    %v2421 = vunpack.c.l.b16 %v901
    %v2422 = vunpack.c.h.b16 %v901
    %v2423 = vunpack.c.l.b16 %v902
    %v2424 = vunpack.c.h.b16 %v902
    %v2425 = vunpack.c.l.b16 %v903
    %v2426 = vunpack.c.h.b16 %v903
    %v2427 = vunpack.c.l.b16 %v904
    %v2428 = vunpack.c.h.b16 %v904
    %v2429 = vunpack.c.l.b16 %v905
    %v2430 = vunpack.c.h.b16 %v905
    %v2431 = vunpack.c.l.b16 %v906
    %v2432 = vunpack.c.h.b16 %v906
    %v2433 = vunpack.c.l.b16 %v907
    %v2434 = vunpack.c.h.b16 %v907
    %v2435 = vunpack.c.l.b16 %v908
    %v2436 = vunpack.c.h.b16 %v908
    %v2437 = vunpack.c.l.b16 %v909
    %v2438 = vunpack.c.h.b16 %v909
    %v2439 = vunpack.c.l.b16 %v910
    %v2440 = vunpack.c.h.b16 %v910
    %v2441 = vunpack.c.l.b16 %v911
    %v2442 = vunpack.c.h.b16 %v911
    %v2443 = vunpack.c.l.b16 %v912
    %v2444 = vunpack.c.h.b16 %v912
    %v2445 = vunpack.c.l.b16 %v913
    %v2446 = vunpack.c.h.b16 %v913
    %v2447 = vunpack.c.l.b16 %v914
    %v2448 = vunpack.c.h.b16 %v914
    %v2449 = vunpack.c.l.b16 %v915
    %v2450 = vunpack.c.h.b16 %v915
    %v2451 = vunpack.c.l.b16 %v916
    %v2452 = vunpack.c.h.b16 %v916
    %v2453 = vunpack.c.l.b16 %v917
    %v2454 = vunpack.c.h.b16 %v917
    %v2455 = vunpack.c.l.b16 %v918
    %v2456 = vunpack.c.h.b16 %v918
    %v2457 = vunpack.c.l.b16 %v919
    %v2458 = vunpack.c.h.b16 %v919
    %v2459 = vunpack.c.l.b16 %v920
    %v2460 = vunpack.c.h.b16 %v920
    %v2461 = vunpack.c.l.b16 %v921
    %v2462 = vunpack.c.h.b16 %v921
    %v2463 = vunpack.c.l.b16 %v922
    %v2464 = vunpack.c.h.b16 %v922
    %v2465 = vunpack.c.l.b16 %v923
    %v2466 = vunpack.c.h.b16 %v923
    %v2467 = vunpack.c.l.b16 %v924
    %v2468 = vunpack.c.h.b16 %v924
    %v2469 = vunpack.c.l.b16 %v925
    %v2470 = vunpack.c.h.b16 %v925
    %v2471 = vunpack.c.l.b16 %v926
    %v2472 = vunpack.c.h.b16 %v926
    %v2473 = vunpack.c.l.b16 %v927
    %v2474 = vunpack.c.h.b16 %v927
    %v2475 = vunpack.c.l.b16 %v928
    %v2476 = vunpack.c.h.b16 %v928
    %v2477 = vunpack.c.l.b16 %v929
    %v2478 = vunpack.c.h.b16 %v929
    %v2479 = vunpack.c.l.b16 %v930
    %v2480 = vunpack.c.h.b16 %v930
    %v2481 = vunpack.c.l.b16 %v931
    %v2482 = vunpack.c.h.b16 %v931
    %v2483 = vunpack.c.l.b16 %v932
    %v2484 = vunpack.c.h.b16 %v932
    %v2485 = vunpack.c.l.b16 %v933
    %v2486 = vunpack.c.h.b16 %v933
    %v2487 = vunpack.c.l.b16 %v934
    %v2488 = vunpack.c.h.b16 %v934
    %v2489 = vunpack.c.l.b16 %v935
    %v2490 = vunpack.c.h.b16 %v935
    %v2491 = vunpack.c.l.b16 %v936
    %v2492 = vunpack.c.h.b16 %v936
    %v2493 = vunpack.c.l.b16 %v937
    %v2494 = vunpack.c.h.b16 %v937
    %v2495 = vunpack.c.l.b16 %v938
    %v2496 = vunpack.c.h.b16 %v938
    %v2497 = vunpack.c.l.b16 %v939
    %v2498 = vunpack.c.h.b16 %v939
    %v2499 = vunpack.c.l.b16 %v940
    %v2500 = vunpack.c.h.b16 %v940
    %v2501 = vunpack.c.l.b16 %v941
    %v2502 = vunpack.c.h.b16 %v941
    %v2503 = vunpack.c.l.b16 %v942
    %v2504 = vunpack.c.h.b16 %v942
    %v2505 = vunpack.c.l.b16 %v943
    %v2506 = vunpack.c.h.b16 %v943
    %v2507 = vunpack.c.l.b16 %v944
    %v2508 = vunpack.c.h.b16 %v944
    %v2509 = vunpack.c.l.b16 %v945
    %v2510 = vunpack.c.h.b16 %v945
    %v2511 = vunpack.c.l.b16 %v946
    %v2512 = vunpack.c.h.b16 %v946
    %v2513 = vunpack.c.l.b16 %v947
    %v2514 = vunpack.c.h.b16 %v947
    %v2515 = vunpack.c.l.b16 %v948
    %v2516 = vunpack.c.h.b16 %v948
    %v2517 = vunpack.c.l.b16 %v949
    %v2518 = vunpack.c.h.b16 %v949
    %v2519 = vunpack.c.l.b16 %v950
    %v2520 = vunpack.c.h.b16 %v950
    %v2521 = vunpack.c.l.b16 %v951
    %v2522 = vunpack.c.h.b16 %v951
    %v2523 = vunpack.c.l.b16 %v952
    %v2524 = vunpack.c.h.b16 %v952
    %v2525 = vunpack.c.l.b16 %v953
    %v2526 = vunpack.c.h.b16 %v953
    %v2527 = vunpack.c.l.b16 %v954
    %v2528 = vunpack.c.h.b16 %v954
    %v2529 = vunpack.c.l.b16 %v955
    %v2530 = vunpack.c.h.b16 %v955
    %v2531 = vunpack.c.l.b16 %v956
    %v2532 = vunpack.c.h.b16 %v956
    %v2533 = vunpack.c.l.b16 %v957
    %v2534 = vunpack.c.h.b16 %v957
    %v2535 = vunpack.c.l.b16 %v958
    %v2536 = vunpack.c.h.b16 %v958
    %v2537 = vpack.c.b16 %v1521, %v1513
    %v2538 = vpack.c.b16 %v1522, %v1514
    %v2539 = vpack.c.b16 %v1523, %v1515
    %v2540 = vpack.c.b16 %v1524, %v1516
    %v2541 = vpack.c.b16 %v1525, %v1517
    %v2542 = vpack.c.b16 %v1526, %v1518
    %v2543 = vpack.c.b16 %v1527, %v1519
    %v2544 = vpack.c.b16 %v1528, %v1520
    %v2545 = vpack.c.b16 %v1537, %v1529
    %v2546 = vpack.c.b16 %v1538, %v1530
    %v2547 = vpack.c.b16 %v1539, %v1531
    %v2548 = vpack.c.b16 %v1540, %v1532
    %v2549 = vpack.c.b16 %v1541, %v1533
    %v2550 = vpack.c.b16 %v1542, %v1534
    %v2551 = vpack.c.b16 %v1543, %v1535
    %v2552 = vpack.c.b16 %v1544, %v1536
    %v2553 = vpack.c.b16 %v1553, %v1545
    %v2554 = vpack.c.b16 %v1554, %v1546
    %v2555 = vpack.c.b16 %v1555, %v1547
    %v2556 = vpack.c.b16 %v1556, %v1548
    %v2557 = vpack.c.b16 %v1557, %v1549
    %v2558 = vpack.c.b16 %v1558, %v1550
    %v2559 = vpack.c.b16 %v1559, %v1551
    %v2560 = vpack.c.b16 %v1560, %v1552
    %v2561 = vpack.c.b16 %v1569, %v1561
    %v2562 = vpack.c.b16 %v1570, %v1562
    %v2563 = vpack.c.b16 %v1571, %v1563
    %v2564 = vpack.c.b16 %v1572, %v1564
    %v2565 = vpack.c.b16 %v1573, %v1565
    %v2566 = vpack.c.b16 %v1574, %v1566
    %v2567 = vpack.c.b16 %v1575, %v1567
    %v2568 = vpack.c.b16 %v1576, %v1568
    %v2569 = vpack.c.b16 %v1585, %v1577
    %v2570 = vpack.c.b16 %v1586, %v1578
    %v2571 = vpack.c.b16 %v1587, %v1579
    %v2572 = vpack.c.b16 %v1588, %v1580
    %v2573 = vpack.c.b16 %v1589, %v1581
    %v2574 = vpack.c.b16 %v1590, %v1582
    %v2575 = vpack.c.b16 %v1591, %v1583
    %v2576 = vpack.c.b16 %v1592, %v1584
    %v2577 = vpack.c.b16 %v1601, %v1593
    %v2578 = vpack.c.b16 %v1602, %v1594
    %v2579 = vpack.c.b16 %v1603, %v1595
    %v2580 = vpack.c.b16 %v1604, %v1596
    %v2581 = vpack.c.b16 %v1605, %v1597
    %v2582 = vpack.c.b16 %v1606, %v1598
    %v2583 = vpack.c.b16 %v1607, %v1599
    %v2584 = vpack.c.b16 %v1608, %v1600
    %v2585 = vpack.c.b16 %v1617, %v1609
    %v2586 = vpack.c.b16 %v1618, %v1610
    %v2587 = vpack.c.b16 %v1619, %v1611
    %v2588 = vpack.c.b16 %v1620, %v1612
    %v2589 = vpack.c.b16 %v1621, %v1613
    %v2590 = vpack.c.b16 %v1622, %v1614
    %v2591 = vpack.c.b16 %v1623, %v1615
    %v2592 = vpack.c.b16 %v1624, %v1616
    %v2593 = vpack.c.b16 %v1633, %v1625
    %v2594 = vpack.c.b16 %v1634, %v1626
    %v2595 = vpack.c.b16 %v1635, %v1627
    %v2596 = vpack.c.b16 %v1636, %v1628
    %v2597 = vpack.c.b16 %v1637, %v1629
    %v2598 = vpack.c.b16 %v1638, %v1630
    %v2599 = vpack.c.b16 %v1639, %v1631
    %v2600 = vpack.c.b16 %v1640, %v1632
    %v2601 = vpack.c.b16 %v1649, %v1641
    %v2602 = vpack.c.b16 %v1650, %v1642
    %v2603 = vpack.c.b16 %v1651, %v1643
    %v2604 = vpack.c.b16 %v1652, %v1644
    %v2605 = vpack.c.b16 %v1653, %v1645
    %v2606 = vpack.c.b16 %v1654, %v1646
    %v2607 = vpack.c.b16 %v1655, %v1647
    %v2608 = vpack.c.b16 %v1656, %v1648
    %v2609 = vpack.c.b16 %v1665, %v1657
    %v2610 = vpack.c.b16 %v1666, %v1658
    %v2611 = vpack.c.b16 %v1667, %v1659
    %v2612 = vpack.c.b16 %v1668, %v1660
    %v2613 = vpack.c.b16 %v1669, %v1661
    %v2614 = vpack.c.b16 %v1670, %v1662
    %v2615 = vpack.c.b16 %v1671, %v1663
    %v2616 = vpack.c.b16 %v1672, %v1664
    %v2617 = vpack.c.b16 %v1681, %v1673
    %v2618 = vpack.c.b16 %v1682, %v1674
    %v2619 = vpack.c.b16 %v1683, %v1675
    %v2620 = vpack.c.b16 %v1684, %v1676
    %v2621 = vpack.c.b16 %v1685, %v1677
    %v2622 = vpack.c.b16 %v1686, %v1678
    %v2623 = vpack.c.b16 %v1687, %v1679
    %v2624 = vpack.c.b16 %v1688, %v1680
    %v2625 = vpack.c.b16 %v1697, %v1689
    %v2626 = vpack.c.b16 %v1698, %v1690
    %v2627 = vpack.c.b16 %v1699, %v1691
    %v2628 = vpack.c.b16 %v1700, %v1692
    %v2629 = vpack.c.b16 %v1701, %v1693
    %v2630 = vpack.c.b16 %v1702, %v1694
    %v2631 = vpack.c.b16 %v1703, %v1695
    %v2632 = vpack.c.b16 %v1704, %v1696
    %v2633 = vpack.c.b16 %v1713, %v1705
    %v2634 = vpack.c.b16 %v1714, %v1706
    %v2635 = vpack.c.b16 %v1715, %v1707
    %v2636 = vpack.c.b16 %v1716, %v1708
    %v2637 = vpack.c.b16 %v1717, %v1709
    %v2638 = vpack.c.b16 %v1718, %v1710
    %v2639 = vpack.c.b16 %v1719, %v1711
    %v2640 = vpack.c.b16 %v1720, %v1712
    %v2641 = vpack.c.b16 %v1729, %v1721
    %v2642 = vpack.c.b16 %v1730, %v1722
    %v2643 = vpack.c.b16 %v1731, %v1723
    %v2644 = vpack.c.b16 %v1732, %v1724
    %v2645 = vpack.c.b16 %v1733, %v1725
    %v2646 = vpack.c.b16 %v1734, %v1726
    %v2647 = vpack.c.b16 %v1735, %v1727
    %v2648 = vpack.c.b16 %v1736, %v1728
    %v2649 = vpack.c.b16 %v1745, %v1737
    %v2650 = vpack.c.b16 %v1746, %v1738
    %v2651 = vpack.c.b16 %v1747, %v1739
    %v2652 = vpack.c.b16 %v1748, %v1740
    %v2653 = vpack.c.b16 %v1749, %v1741
    %v2654 = vpack.c.b16 %v1750, %v1742
    %v2655 = vpack.c.b16 %v1751, %v1743
    %v2656 = vpack.c.b16 %v1752, %v1744
    %v2657 = vpack.c.b16 %v1761, %v1753
    %v2658 = vpack.c.b16 %v1762, %v1754
    %v2659 = vpack.c.b16 %v1763, %v1755
    %v2660 = vpack.c.b16 %v1764, %v1756
    %v2661 = vpack.c.b16 %v1765, %v1757
    %v2662 = vpack.c.b16 %v1766, %v1758
    %v2663 = vpack.c.b16 %v1767, %v1759
    %v2664 = vpack.c.b16 %v1768, %v1760
    %v2665 = vpack.c.b16 %v1777, %v1769
    %v2666 = vpack.c.b16 %v1778, %v1770
    %v2667 = vpack.c.b16 %v1779, %v1771
    %v2668 = vpack.c.b16 %v1780, %v1772
    %v2669 = vpack.c.b16 %v1781, %v1773
    %v2670 = vpack.c.b16 %v1782, %v1774
    %v2671 = vpack.c.b16 %v1783, %v1775
    %v2672 = vpack.c.b16 %v1784, %v1776
    %v2673 = vpack.c.b16 %v1793, %v1785
    %v2674 = vpack.c.b16 %v1794, %v1786
    %v2675 = vpack.c.b16 %v1795, %v1787
    %v2676 = vpack.c.b16 %v1796, %v1788
    %v2677 = vpack.c.b16 %v1797, %v1789
    %v2678 = vpack.c.b16 %v1798, %v1790
    %v2679 = vpack.c.b16 %v1799, %v1791
    %v2680 = vpack.c.b16 %v1800, %v1792
    %v2681 = vpack.c.b16 %v1809, %v1801
    %v2682 = vpack.c.b16 %v1810, %v1802
    %v2683 = vpack.c.b16 %v1811, %v1803
    %v2684 = vpack.c.b16 %v1812, %v1804
    %v2685 = vpack.c.b16 %v1813, %v1805
    %v2686 = vpack.c.b16 %v1814, %v1806
    %v2687 = vpack.c.b16 %v1815, %v1807
    %v2688 = vpack.c.b16 %v1816, %v1808
    %v2689 = vpack.c.b16 %v1825, %v1817
    %v2690 = vpack.c.b16 %v1826, %v1818
    %v2691 = vpack.c.b16 %v1827, %v1819
    %v2692 = vpack.c.b16 %v1828, %v1820
    %v2693 = vpack.c.b16 %v1829, %v1821
    %v2694 = vpack.c.b16 %v1830, %v1822
    %v2695 = vpack.c.b16 %v1831, %v1823
    %v2696 = vpack.c.b16 %v1832, %v1824
    %v2697 = vpack.c.b16 %v1841, %v1833
    %v2698 = vpack.c.b16 %v1842, %v1834
    %v2699 = vpack.c.b16 %v1843, %v1835
    %v2700 = vpack.c.b16 %v1844, %v1836
    %v2701 = vpack.c.b16 %v1845, %v1837
    %v2702 = vpack.c.b16 %v1846, %v1838
    %v2703 = vpack.c.b16 %v1847, %v1839
    %v2704 = vpack.c.b16 %v1848, %v1840
    %v2705 = vpack.c.b16 %v1857, %v1849
    %v2706 = vpack.c.b16 %v1858, %v1850
    %v2707 = vpack.c.b16 %v1859, %v1851
    %v2708 = vpack.c.b16 %v1860, %v1852
    %v2709 = vpack.c.b16 %v1861, %v1853
    %v2710 = vpack.c.b16 %v1862, %v1854
    %v2711 = vpack.c.b16 %v1863, %v1855
    %v2712 = vpack.c.b16 %v1864, %v1856
    %v2713 = vpack.c.b16 %v1873, %v1865
    %v2714 = vpack.c.b16 %v1874, %v1866
    %v2715 = vpack.c.b16 %v1875, %v1867
    %v2716 = vpack.c.b16 %v1876, %v1868
    %v2717 = vpack.c.b16 %v1877, %v1869
    %v2718 = vpack.c.b16 %v1878, %v1870
    %v2719 = vpack.c.b16 %v1879, %v1871
    %v2720 = vpack.c.b16 %v1880, %v1872
    %v2721 = vpack.c.b16 %v1889, %v1881
    %v2722 = vpack.c.b16 %v1890, %v1882
    %v2723 = vpack.c.b16 %v1891, %v1883
    %v2724 = vpack.c.b16 %v1892, %v1884
    %v2725 = vpack.c.b16 %v1893, %v1885
    %v2726 = vpack.c.b16 %v1894, %v1886
    %v2727 = vpack.c.b16 %v1895, %v1887
    %v2728 = vpack.c.b16 %v1896, %v1888
    %v2729 = vpack.c.b16 %v1905, %v1897
    %v2730 = vpack.c.b16 %v1906, %v1898
    %v2731 = vpack.c.b16 %v1907, %v1899
    %v2732 = vpack.c.b16 %v1908, %v1900
    %v2733 = vpack.c.b16 %v1909, %v1901
    %v2734 = vpack.c.b16 %v1910, %v1902
    %v2735 = vpack.c.b16 %v1911, %v1903
    %v2736 = vpack.c.b16 %v1912, %v1904
    %v2737 = vpack.c.b16 %v1921, %v1913
    %v2738 = vpack.c.b16 %v1922, %v1914
    %v2739 = vpack.c.b16 %v1923, %v1915
    %v2740 = vpack.c.b16 %v1924, %v1916
    %v2741 = vpack.c.b16 %v1925, %v1917
    %v2742 = vpack.c.b16 %v1926, %v1918
    %v2743 = vpack.c.b16 %v1927, %v1919
    %v2744 = vpack.c.b16 %v1928, %v1920
    %v2745 = vpack.c.b16 %v1937, %v1929
    %v2746 = vpack.c.b16 %v1938, %v1930
    %v2747 = vpack.c.b16 %v1939, %v1931
    %v2748 = vpack.c.b16 %v1940, %v1932
    %v2749 = vpack.c.b16 %v1941, %v1933
    %v2750 = vpack.c.b16 %v1942, %v1934
    %v2751 = vpack.c.b16 %v1943, %v1935
    %v2752 = vpack.c.b16 %v1944, %v1936
    %v2753 = vpack.c.b16 %v1953, %v1945
    %v2754 = vpack.c.b16 %v1954, %v1946
    %v2755 = vpack.c.b16 %v1955, %v1947
    %v2756 = vpack.c.b16 %v1956, %v1948
    %v2757 = vpack.c.b16 %v1957, %v1949
    %v2758 = vpack.c.b16 %v1958, %v1950
    %v2759 = vpack.c.b16 %v1959, %v1951
    %v2760 = vpack.c.b16 %v1960, %v1952
    %v2761 = vpack.c.b16 %v1969, %v1961
    %v2762 = vpack.c.b16 %v1970, %v1962
    %v2763 = vpack.c.b16 %v1971, %v1963
    %v2764 = vpack.c.b16 %v1972, %v1964
    %v2765 = vpack.c.b16 %v1973, %v1965
    %v2766 = vpack.c.b16 %v1974, %v1966
    %v2767 = vpack.c.b16 %v1975, %v1967
    %v2768 = vpack.c.b16 %v1976, %v1968
    %v2769 = vpack.c.b16 %v1985, %v1977
    %v2770 = vpack.c.b16 %v1986, %v1978
    %v2771 = vpack.c.b16 %v1987, %v1979
    %v2772 = vpack.c.b16 %v1988, %v1980
    %v2773 = vpack.c.b16 %v1989, %v1981
    %v2774 = vpack.c.b16 %v1990, %v1982
    %v2775 = vpack.c.b16 %v1991, %v1983
    %v2776 = vpack.c.b16 %v1992, %v1984
    %v2777 = vpack.c.b16 %v2001, %v1993
    %v2778 = vpack.c.b16 %v2002, %v1994
    %v2779 = vpack.c.b16 %v2003, %v1995
    %v2780 = vpack.c.b16 %v2004, %v1996
    %v2781 = vpack.c.b16 %v2005, %v1997
    %v2782 = vpack.c.b16 %v2006, %v1998
    %v2783 = vpack.c.b16 %v2007, %v1999
    %v2784 = vpack.c.b16 %v2008, %v2000
    %v2785 = vpack.c.b16 %v2017, %v2009
    %v2786 = vpack.c.b16 %v2018, %v2010
    %v2787 = vpack.c.b16 %v2019, %v2011
    %v2788 = vpack.c.b16 %v2020, %v2012
    %v2789 = vpack.c.b16 %v2021, %v2013
    %v2790 = vpack.c.b16 %v2022, %v2014
    %v2791 = vpack.c.b16 %v2023, %v2015
    %v2792 = vpack.c.b16 %v2024, %v2016
    %v2793 = vpack.c.b16 %v2033, %v2025
    %v2794 = vpack.c.b16 %v2034, %v2026
    %v2795 = vpack.c.b16 %v2035, %v2027
    %v2796 = vpack.c.b16 %v2036, %v2028
    %v2797 = vpack.c.b16 %v2037, %v2029
    %v2798 = vpack.c.b16 %v2038, %v2030
    %v2799 = vpack.c.b16 %v2039, %v2031
    %v2800 = vpack.c.b16 %v2040, %v2032
    %v2801 = vpack.c.b16 %v2049, %v2041
    %v2802 = vpack.c.b16 %v2050, %v2042
    %v2803 = vpack.c.b16 %v2051, %v2043
    %v2804 = vpack.c.b16 %v2052, %v2044
    %v2805 = vpack.c.b16 %v2053, %v2045
    %v2806 = vpack.c.b16 %v2054, %v2046
    %v2807 = vpack.c.b16 %v2055, %v2047
    %v2808 = vpack.c.b16 %v2056, %v2048
    %v2809 = vpack.c.b16 %v2065, %v2057
    %v2810 = vpack.c.b16 %v2066, %v2058
    %v2811 = vpack.c.b16 %v2067, %v2059
    %v2812 = vpack.c.b16 %v2068, %v2060
    %v2813 = vpack.c.b16 %v2069, %v2061
    %v2814 = vpack.c.b16 %v2070, %v2062
    %v2815 = vpack.c.b16 %v2071, %v2063
    %v2816 = vpack.c.b16 %v2072, %v2064
    %v2817 = vpack.c.b16 %v2081, %v2073
    %v2818 = vpack.c.b16 %v2082, %v2074
    %v2819 = vpack.c.b16 %v2083, %v2075
    %v2820 = vpack.c.b16 %v2084, %v2076
    %v2821 = vpack.c.b16 %v2085, %v2077
    %v2822 = vpack.c.b16 %v2086, %v2078
    %v2823 = vpack.c.b16 %v2087, %v2079
    %v2824 = vpack.c.b16 %v2088, %v2080
    %v2825 = vpack.c.b16 %v2097, %v2089
    %v2826 = vpack.c.b16 %v2098, %v2090
    %v2827 = vpack.c.b16 %v2099, %v2091
    %v2828 = vpack.c.b16 %v2100, %v2092
    %v2829 = vpack.c.b16 %v2101, %v2093
    %v2830 = vpack.c.b16 %v2102, %v2094
    %v2831 = vpack.c.b16 %v2103, %v2095
    %v2832 = vpack.c.b16 %v2104, %v2096
    %v2833 = vpack.c.b16 %v2113, %v2105
    %v2834 = vpack.c.b16 %v2114, %v2106
    %v2835 = vpack.c.b16 %v2115, %v2107
    %v2836 = vpack.c.b16 %v2116, %v2108
    %v2837 = vpack.c.b16 %v2117, %v2109
    %v2838 = vpack.c.b16 %v2118, %v2110
    %v2839 = vpack.c.b16 %v2119, %v2111
    %v2840 = vpack.c.b16 %v2120, %v2112
    %v2841 = vpack.c.b16 %v2129, %v2121
    %v2842 = vpack.c.b16 %v2130, %v2122
    %v2843 = vpack.c.b16 %v2131, %v2123
    %v2844 = vpack.c.b16 %v2132, %v2124
    %v2845 = vpack.c.b16 %v2133, %v2125
    %v2846 = vpack.c.b16 %v2134, %v2126
    %v2847 = vpack.c.b16 %v2135, %v2127
    %v2848 = vpack.c.b16 %v2136, %v2128
    %v2849 = vpack.c.b16 %v2145, %v2137
    %v2850 = vpack.c.b16 %v2146, %v2138
    %v2851 = vpack.c.b16 %v2147, %v2139
    %v2852 = vpack.c.b16 %v2148, %v2140
    %v2853 = vpack.c.b16 %v2149, %v2141
    %v2854 = vpack.c.b16 %v2150, %v2142
    %v2855 = vpack.c.b16 %v2151, %v2143
    %v2856 = vpack.c.b16 %v2152, %v2144
    %v2857 = vpack.c.b16 %v2161, %v2153
    %v2858 = vpack.c.b16 %v2162, %v2154
    %v2859 = vpack.c.b16 %v2163, %v2155
    %v2860 = vpack.c.b16 %v2164, %v2156
    %v2861 = vpack.c.b16 %v2165, %v2157
    %v2862 = vpack.c.b16 %v2166, %v2158
    %v2863 = vpack.c.b16 %v2167, %v2159
    %v2864 = vpack.c.b16 %v2168, %v2160
    %v2865 = vpack.c.b16 %v2177, %v2169
    %v2866 = vpack.c.b16 %v2178, %v2170
    %v2867 = vpack.c.b16 %v2179, %v2171
    %v2868 = vpack.c.b16 %v2180, %v2172
    %v2869 = vpack.c.b16 %v2181, %v2173
    %v2870 = vpack.c.b16 %v2182, %v2174
    %v2871 = vpack.c.b16 %v2183, %v2175
    %v2872 = vpack.c.b16 %v2184, %v2176
    %v2873 = vpack.c.b16 %v2193, %v2185
    %v2874 = vpack.c.b16 %v2194, %v2186
    %v2875 = vpack.c.b16 %v2195, %v2187
    %v2876 = vpack.c.b16 %v2196, %v2188
    %v2877 = vpack.c.b16 %v2197, %v2189
    %v2878 = vpack.c.b16 %v2198, %v2190
    %v2879 = vpack.c.b16 %v2199, %v2191
    %v2880 = vpack.c.b16 %v2200, %v2192
    %v2881 = vpack.c.b16 %v2209, %v2201
    %v2882 = vpack.c.b16 %v2210, %v2202
    %v2883 = vpack.c.b16 %v2211, %v2203
    %v2884 = vpack.c.b16 %v2212, %v2204
    %v2885 = vpack.c.b16 %v2213, %v2205
    %v2886 = vpack.c.b16 %v2214, %v2206
    %v2887 = vpack.c.b16 %v2215, %v2207
    %v2888 = vpack.c.b16 %v2216, %v2208
    %v2889 = vpack.c.b16 %v2225, %v2217
    %v2890 = vpack.c.b16 %v2226, %v2218
    %v2891 = vpack.c.b16 %v2227, %v2219
    %v2892 = vpack.c.b16 %v2228, %v2220
    %v2893 = vpack.c.b16 %v2229, %v2221
    %v2894 = vpack.c.b16 %v2230, %v2222
    %v2895 = vpack.c.b16 %v2231, %v2223
    %v2896 = vpack.c.b16 %v2232, %v2224
    %v2897 = vpack.c.b16 %v2241, %v2233
    %v2898 = vpack.c.b16 %v2242, %v2234
    %v2899 = vpack.c.b16 %v2243, %v2235
    %v2900 = vpack.c.b16 %v2244, %v2236
    %v2901 = vpack.c.b16 %v2245, %v2237
    %v2902 = vpack.c.b16 %v2246, %v2238
    %v2903 = vpack.c.b16 %v2247, %v2239
    %v2904 = vpack.c.b16 %v2248, %v2240
    %v2905 = vpack.c.b16 %v2257, %v2249
    %v2906 = vpack.c.b16 %v2258, %v2250
    %v2907 = vpack.c.b16 %v2259, %v2251
    %v2908 = vpack.c.b16 %v2260, %v2252
    %v2909 = vpack.c.b16 %v2261, %v2253
    %v2910 = vpack.c.b16 %v2262, %v2254
    %v2911 = vpack.c.b16 %v2263, %v2255
    %v2912 = vpack.c.b16 %v2264, %v2256
    %v2913 = vpack.c.b16 %v2273, %v2265
    %v2914 = vpack.c.b16 %v2274, %v2266
    %v2915 = vpack.c.b16 %v2275, %v2267
    %v2916 = vpack.c.b16 %v2276, %v2268
    %v2917 = vpack.c.b16 %v2277, %v2269
    %v2918 = vpack.c.b16 %v2278, %v2270
    %v2919 = vpack.c.b16 %v2279, %v2271
    %v2920 = vpack.c.b16 %v2280, %v2272
    %v2921 = vpack.c.b16 %v2289, %v2281
    %v2922 = vpack.c.b16 %v2290, %v2282
    %v2923 = vpack.c.b16 %v2291, %v2283
    %v2924 = vpack.c.b16 %v2292, %v2284
    %v2925 = vpack.c.b16 %v2293, %v2285
    %v2926 = vpack.c.b16 %v2294, %v2286
    %v2927 = vpack.c.b16 %v2295, %v2287
    %v2928 = vpack.c.b16 %v2296, %v2288
    %v2929 = vpack.c.b16 %v2305, %v2297
    %v2930 = vpack.c.b16 %v2306, %v2298
    %v2931 = vpack.c.b16 %v2307, %v2299
    %v2932 = vpack.c.b16 %v2308, %v2300
    %v2933 = vpack.c.b16 %v2309, %v2301
    %v2934 = vpack.c.b16 %v2310, %v2302
    %v2935 = vpack.c.b16 %v2311, %v2303
    %v2936 = vpack.c.b16 %v2312, %v2304
    %v2937 = vpack.c.b16 %v2321, %v2313
    %v2938 = vpack.c.b16 %v2322, %v2314
    %v2939 = vpack.c.b16 %v2323, %v2315
    %v2940 = vpack.c.b16 %v2324, %v2316
    %v2941 = vpack.c.b16 %v2325, %v2317
    %v2942 = vpack.c.b16 %v2326, %v2318
    %v2943 = vpack.c.b16 %v2327, %v2319
    %v2944 = vpack.c.b16 %v2328, %v2320
    %v2945 = vpack.c.b16 %v2337, %v2329
    %v2946 = vpack.c.b16 %v2338, %v2330
    %v2947 = vpack.c.b16 %v2339, %v2331
    %v2948 = vpack.c.b16 %v2340, %v2332
    %v2949 = vpack.c.b16 %v2341, %v2333
    %v2950 = vpack.c.b16 %v2342, %v2334
    %v2951 = vpack.c.b16 %v2343, %v2335
    %v2952 = vpack.c.b16 %v2344, %v2336
    %v2953 = vpack.c.b16 %v2353, %v2345
    %v2954 = vpack.c.b16 %v2354, %v2346
    %v2955 = vpack.c.b16 %v2355, %v2347
    %v2956 = vpack.c.b16 %v2356, %v2348
    %v2957 = vpack.c.b16 %v2357, %v2349
    %v2958 = vpack.c.b16 %v2358, %v2350
    %v2959 = vpack.c.b16 %v2359, %v2351
    %v2960 = vpack.c.b16 %v2360, %v2352
    %v2961 = vpack.c.b16 %v2369, %v2361
    %v2962 = vpack.c.b16 %v2370, %v2362
    %v2963 = vpack.c.b16 %v2371, %v2363
    %v2964 = vpack.c.b16 %v2372, %v2364
    %v2965 = vpack.c.b16 %v2373, %v2365
    %v2966 = vpack.c.b16 %v2374, %v2366
    %v2967 = vpack.c.b16 %v2375, %v2367
    %v2968 = vpack.c.b16 %v2376, %v2368
    %v2969 = vpack.c.b16 %v2385, %v2377
    %v2970 = vpack.c.b16 %v2386, %v2378
    %v2971 = vpack.c.b16 %v2387, %v2379
    %v2972 = vpack.c.b16 %v2388, %v2380
    %v2973 = vpack.c.b16 %v2389, %v2381
    %v2974 = vpack.c.b16 %v2390, %v2382
    %v2975 = vpack.c.b16 %v2391, %v2383
    %v2976 = vpack.c.b16 %v2392, %v2384
    %v2977 = vpack.c.b16 %v2401, %v2393
    %v2978 = vpack.c.b16 %v2402, %v2394
    %v2979 = vpack.c.b16 %v2403, %v2395
    %v2980 = vpack.c.b16 %v2404, %v2396
    %v2981 = vpack.c.b16 %v2405, %v2397
    %v2982 = vpack.c.b16 %v2406, %v2398
    %v2983 = vpack.c.b16 %v2407, %v2399
    %v2984 = vpack.c.b16 %v2408, %v2400
    %v2985 = vpack.c.b16 %v2417, %v2409
    %v2986 = vpack.c.b16 %v2418, %v2410
    %v2987 = vpack.c.b16 %v2419, %v2411
    %v2988 = vpack.c.b16 %v2420, %v2412
    %v2989 = vpack.c.b16 %v2421, %v2413
    %v2990 = vpack.c.b16 %v2422, %v2414
    %v2991 = vpack.c.b16 %v2423, %v2415
    %v2992 = vpack.c.b16 %v2424, %v2416
    %v2993 = vpack.c.b16 %v2433, %v2425
    %v2994 = vpack.c.b16 %v2434, %v2426
    %v2995 = vpack.c.b16 %v2435, %v2427
    %v2996 = vpack.c.b16 %v2436, %v2428
    %v2997 = vpack.c.b16 %v2437, %v2429
    %v2998 = vpack.c.b16 %v2438, %v2430
    %v2999 = vpack.c.b16 %v2439, %v2431
    %v3000 = vpack.c.b16 %v2440, %v2432
    %v3001 = vpack.c.b16 %v2449, %v2441
    %v3002 = vpack.c.b16 %v2450, %v2442
    %v3003 = vpack.c.b16 %v2451, %v2443
    %v3004 = vpack.c.b16 %v2452, %v2444
    %v3005 = vpack.c.b16 %v2453, %v2445
    %v3006 = vpack.c.b16 %v2454, %v2446
    %v3007 = vpack.c.b16 %v2455, %v2447
    %v3008 = vpack.c.b16 %v2456, %v2448
    %v3009 = vpack.c.b16 %v2465, %v2457
    %v3010 = vpack.c.b16 %v2466, %v2458
    %v3011 = vpack.c.b16 %v2467, %v2459
    %v3012 = vpack.c.b16 %v2468, %v2460
    %v3013 = vpack.c.b16 %v2469, %v2461
    %v3014 = vpack.c.b16 %v2470, %v2462
    %v3015 = vpack.c.b16 %v2471, %v2463
    %v3016 = vpack.c.b16 %v2472, %v2464
    %v3017 = vpack.c.b16 %v2481, %v2473
    %v3018 = vpack.c.b16 %v2482, %v2474
    %v3019 = vpack.c.b16 %v2483, %v2475
    %v3020 = vpack.c.b16 %v2484, %v2476
    %v3021 = vpack.c.b16 %v2485, %v2477
    %v3022 = vpack.c.b16 %v2486, %v2478
    %v3023 = vpack.c.b16 %v2487, %v2479
    %v3024 = vpack.c.b16 %v2488, %v2480
    %v3025 = vpack.c.b16 %v2497, %v2489
    %v3026 = vpack.c.b16 %v2498, %v2490
    %v3027 = vpack.c.b16 %v2499, %v2491
    %v3028 = vpack.c.b16 %v2500, %v2492
    %v3029 = vpack.c.b16 %v2501, %v2493
    %v3030 = vpack.c.b16 %v2502, %v2494
    %v3031 = vpack.c.b16 %v2503, %v2495
    %v3032 = vpack.c.b16 %v2504, %v2496
    %v3033 = vpack.c.b16 %v2513, %v2505
    %v3034 = vpack.c.b16 %v2514, %v2506
    %v3035 = vpack.c.b16 %v2515, %v2507
    %v3036 = vpack.c.b16 %v2516, %v2508
    %v3037 = vpack.c.b16 %v2517, %v2509
    %v3038 = vpack.c.b16 %v2518, %v2510
    %v3039 = vpack.c.b16 %v2519, %v2511
    %v3040 = vpack.c.b16 %v2520, %v2512
    %v3041 = vpack.c.b16 %v2529, %v2521
    %v3042 = vpack.c.b16 %v2530, %v2522
    %v3043 = vpack.c.b16 %v2531, %v2523
    %v3044 = vpack.c.b16 %v2532, %v2524
    %v3045 = vpack.c.b16 %v2533, %v2525
    %v3046 = vpack.c.b16 %v2534, %v2526
    %v3047 = vpack.c.b16 %v2535, %v2527
    %v3048 = vpack.c.b16 %v2536, %v2528
    %3561 = vmatprep.subr.bf16.mxu0 %v2538
    %3562 = vmatpush1.bf16.msra.mxu0 %v2537
    %3563 = vmatprep.subr.bf16.mxu0 %v2546
    %3564 = vmatpush1.bf16.msra.mxu0 %v2545
    %3565 = vmatprep.subr.bf16.mxu0 %v2554
    %3566 = vmatpush1.bf16.msra.mxu0 %v2553
    %3567 = vmatprep.subr.bf16.mxu0 %v2562
    %3568 = vmatpush1.bf16.msra.mxu0 %v2561
    %3569 = vmatprep.subr.bf16.mxu0 %v2570
    %3570 = vmatpush1.bf16.msra.mxu0 %v2569
    %3571 = vmatprep.subr.bf16.mxu0 %v2578
    %3572 = vmatpush1.bf16.msra.mxu0 %v2577
    %3573 = vmatprep.subr.bf16.mxu0 %v2586
    %3574 = vmatpush1.bf16.msra.mxu0 %v2585
    %3575 = vmatprep.subr.bf16.mxu0 %v2594
    %3576 = vmatpush1.bf16.msra.mxu0 %v2593
    %3577 = vmatprep.subr.bf16.mxu0 %v2602
    %3578 = vmatpush1.bf16.msra.mxu0 %v2601
    %3579 = vmatprep.subr.bf16.mxu0 %v2610
    %3580 = vmatpush1.bf16.msra.mxu0 %v2609
    %3581 = vmatprep.subr.bf16.mxu0 %v2618
    %3582 = vmatpush1.bf16.msra.mxu0 %v2617
    %3583 = vmatprep.subr.bf16.mxu0 %v2626
    %3584 = vmatpush1.bf16.msra.mxu0 %v2625
    %3585 = vmatprep.subr.bf16.mxu0 %v2634
    %3586 = vmatpush1.bf16.msra.mxu0 %v2633
    %3587 = vmatprep.subr.bf16.mxu0 %v2642
    %3588 = vmatpush1.bf16.msra.mxu0 %v2641
    %3589 = vmatprep.subr.bf16.mxu0 %v2650
    %3590 = vmatpush1.bf16.msra.mxu0 %v2649
    %3591 = vmatprep.subr.bf16.mxu0 %v2658
    %3592 = vmatpush1.bf16.msra.mxu0 %v2657
    %3593 = vmatprep.mubr.bf16.mxu0 %v440
    %3594 = vmatmul.mubr.bf16.gmra.mrb[0].mxu0 %v439
    %v3595 = vpop.f32.mrb[0].mxu0
    %v3596 = vadd.f32 %v964, %v3595
    %v3597 = vpop.f32.mrb[0].mxu0
    %v3598 = vadd.f32 %v968, %v3597
    %v3599 = vpop.f32.mrb[0].mxu0
    %v3600 = vpop.f32.mrb[0].mxu0
    %3601 = vdwg.mxu0
    %3602 = vmatprep.subr.bf16.mxu0 %v2666
    %3603 = vmatpush1.bf16.msra.mxu0 %v2665
    %3604 = vmatprep.subr.bf16.mxu0 %v2674
    %3605 = vmatpush1.bf16.msra.mxu0 %v2673
    %3606 = vmatprep.subr.bf16.mxu0 %v2682
    %3607 = vmatpush1.bf16.msra.mxu0 %v2681
    %3608 = vmatprep.subr.bf16.mxu0 %v2690
    %3609 = vmatpush1.bf16.msra.mxu0 %v2689
    %3610 = vmatprep.subr.bf16.mxu0 %v2698
    %3611 = vmatpush1.bf16.msra.mxu0 %v2697
    %3612 = vmatprep.subr.bf16.mxu0 %v2706
    %3613 = vmatpush1.bf16.msra.mxu0 %v2705
    %3614 = vmatprep.subr.bf16.mxu0 %v2714
    %3615 = vmatpush1.bf16.msra.mxu0 %v2713
    %3616 = vmatprep.subr.bf16.mxu0 %v2722
    %3617 = vmatpush1.bf16.msra.mxu0 %v2721
    %3618 = vmatprep.subr.bf16.mxu0 %v2730
    %3619 = vmatpush1.bf16.msra.mxu0 %v2729
    %3620 = vmatprep.subr.bf16.mxu0 %v2738
    %3621 = vmatpush1.bf16.msra.mxu0 %v2737
    %3622 = vmatprep.subr.bf16.mxu0 %v2746
    %3623 = vmatpush1.bf16.msra.mxu0 %v2745
    %3624 = vmatprep.subr.bf16.mxu0 %v2754
    %3625 = vmatpush1.bf16.msra.mxu0 %v2753
    %3626 = vmatprep.subr.bf16.mxu0 %v2762
    %3627 = vmatpush1.bf16.msra.mxu0 %v2761
    %3628 = vmatprep.subr.bf16.mxu0 %v2770
    %3629 = vmatpush1.bf16.msra.mxu0 %v2769
    %3630 = vmatprep.subr.bf16.mxu0 %v2778
    %3631 = vmatpush1.bf16.msra.mxu0 %v2777
    %3632 = vmatprep.subr.bf16.mxu0 %v2786
    %3633 = vmatpush1.bf16.msra.mxu0 %v2785
    %3634 = vmatprep.mubr.bf16.mxu0 %v442
    %3635 = vmatmul.mubr.bf16.gmra.mrb[0].mxu0 %v441
    %v3636 = vpop.f32.mrb[0].mxu0
    %v3637 = vadd.f32 %v3596, %v3636
    %v3638 = vpop.f32.mrb[0].mxu0
    %v3639 = vadd.f32 %v3598, %v3638
    %v3640 = vpop.f32.mrb[0].mxu0
    %v3641 = vpop.f32.mrb[0].mxu0
    %3642 = vdwg.mxu0
    %3643 = vmatprep.subr.bf16.mxu0 %v2794
    %3644 = vmatpush1.bf16.msra.mxu0 %v2793
    %3645 = vmatprep.subr.bf16.mxu0 %v2802
    %3646 = vmatpush1.bf16.msra.mxu0 %v2801
    %3647 = vmatprep.subr.bf16.mxu0 %v2810
    %3648 = vmatpush1.bf16.msra.mxu0 %v2809
    %3649 = vmatprep.subr.bf16.mxu0 %v2818
    %3650 = vmatpush1.bf16.msra.mxu0 %v2817
    %3651 = vmatprep.subr.bf16.mxu0 %v2826
    %3652 = vmatpush1.bf16.msra.mxu0 %v2825
    %3653 = vmatprep.subr.bf16.mxu0 %v2834
    %3654 = vmatpush1.bf16.msra.mxu0 %v2833
    %3655 = vmatprep.subr.bf16.mxu0 %v2842
    %3656 = vmatpush1.bf16.msra.mxu0 %v2841
    %3657 = vmatprep.subr.bf16.mxu0 %v2850
    %3658 = vmatpush1.bf16.msra.mxu0 %v2849
    %3659 = vmatprep.subr.bf16.mxu0 %v2858
    %3660 = vmatpush1.bf16.msra.mxu0 %v2857
    %3661 = vmatprep.subr.bf16.mxu0 %v2866
    %3662 = vmatpush1.bf16.msra.mxu0 %v2865
    %3663 = vmatprep.subr.bf16.mxu0 %v2874
    %3664 = vmatpush1.bf16.msra.mxu0 %v2873
    %3665 = vmatprep.subr.bf16.mxu0 %v2882
    %3666 = vmatpush1.bf16.msra.mxu0 %v2881
    %3667 = vmatprep.subr.bf16.mxu0 %v2890
    %3668 = vmatpush1.bf16.msra.mxu0 %v2889
    %3669 = vmatprep.subr.bf16.mxu0 %v2898
    %3670 = vmatpush1.bf16.msra.mxu0 %v2897
    %3671 = vmatprep.subr.bf16.mxu0 %v2906
    %3672 = vmatpush1.bf16.msra.mxu0 %v2905
    %3673 = vmatprep.subr.bf16.mxu0 %v2914
    %3674 = vmatpush1.bf16.msra.mxu0 %v2913
    %3675 = vmatprep.mubr.bf16.mxu0 %v444
    %3676 = vmatmul.mubr.bf16.gmra.mrb[0].mxu0 %v443
    %v3677 = vpop.f32.mrb[0].mxu0
    %v3678 = vadd.f32 %v3637, %v3677
    %v3679 = vpop.f32.mrb[0].mxu0
    %v3680 = vadd.f32 %v3639, %v3679
    %v3681 = vpop.f32.mrb[0].mxu0
    %v3682 = vpop.f32.mrb[0].mxu0
    %3683 = vdwg.mxu0
    %3684 = vmatprep.subr.bf16.mxu0 %v2922
    %3685 = vmatpush1.bf16.msra.mxu0 %v2921
    %3686 = vmatprep.subr.bf16.mxu0 %v2930
    %3687 = vmatpush1.bf16.msra.mxu0 %v2929
    %3688 = vmatprep.subr.bf16.mxu0 %v2938
    %3689 = vmatpush1.bf16.msra.mxu0 %v2937
    %3690 = vmatprep.subr.bf16.mxu0 %v2946
    %3691 = vmatpush1.bf16.msra.mxu0 %v2945
    %3692 = vmatprep.subr.bf16.mxu0 %v2954
    %3693 = vmatpush1.bf16.msra.mxu0 %v2953
    %3694 = vmatprep.subr.bf16.mxu0 %v2962
    %3695 = vmatpush1.bf16.msra.mxu0 %v2961
    %3696 = vmatprep.subr.bf16.mxu0 %v2970
    %3697 = vmatpush1.bf16.msra.mxu0 %v2969
    %3698 = vmatprep.subr.bf16.mxu0 %v2978
    %3699 = vmatpush1.bf16.msra.mxu0 %v2977
    %3700 = vmatprep.subr.bf16.mxu0 %v2986
    %3701 = vmatpush1.bf16.msra.mxu0 %v2985
    %3702 = vmatprep.subr.bf16.mxu0 %v2994
    %3703 = vmatpush1.bf16.msra.mxu0 %v2993
    %3704 = vmatprep.subr.bf16.mxu0 %v3002
    %3705 = vmatpush1.bf16.msra.mxu0 %v3001
    %3706 = vmatprep.subr.bf16.mxu0 %v3010
    %3707 = vmatpush1.bf16.msra.mxu0 %v3009
    %3708 = vmatprep.subr.bf16.mxu0 %v3018
    %3709 = vmatpush1.bf16.msra.mxu0 %v3017
    %3710 = vmatprep.subr.bf16.mxu0 %v3026
    %3711 = vmatpush1.bf16.msra.mxu0 %v3025
    %3712 = vmatprep.subr.bf16.mxu0 %v3034
    %3713 = vmatpush1.bf16.msra.mxu0 %v3033
    %3714 = vmatprep.subr.bf16.mxu0 %v3042
    %3715 = vmatpush1.bf16.msra.mxu0 %v3041
    %3716 = vmatprep.mubr.bf16.mxu0 %v446
    %3717 = vmatmul.mubr.bf16.gmra.mrb[0].mxu0 %v445
    %v3718 = vpop.f32.mrb[0].mxu0
    %v3719 = vadd.f32 %v3678, %v3718
    %v3720 = vpop.f32.mrb[0].mxu0
    %v3721 = vadd.f32 %v3680, %v3720
    %v3722 = vpop.f32.mrb[0].mxu0
    %v3723 = vpop.f32.mrb[0].mxu0
    %3724 = vdwg.mxu0
    %3725 = vmatprep.subr.bf16.mxu0 %v2540
    %3726 = vmatpush1.bf16.msra.mxu0 %v2539
    %3727 = vmatprep.subr.bf16.mxu0 %v2548
    %3728 = vmatpush1.bf16.msra.mxu0 %v2547
    %3729 = vmatprep.subr.bf16.mxu0 %v2556
    %3730 = vmatpush1.bf16.msra.mxu0 %v2555
    %3731 = vmatprep.subr.bf16.mxu0 %v2564
    %3732 = vmatpush1.bf16.msra.mxu0 %v2563
    %3733 = vmatprep.subr.bf16.mxu0 %v2572
    %3734 = vmatpush1.bf16.msra.mxu0 %v2571
    %3735 = vmatprep.subr.bf16.mxu0 %v2580
    %3736 = vmatpush1.bf16.msra.mxu0 %v2579
    %3737 = vmatprep.subr.bf16.mxu0 %v2588
    %3738 = vmatpush1.bf16.msra.mxu0 %v2587
    %3739 = vmatprep.subr.bf16.mxu0 %v2596
    %3740 = vmatpush1.bf16.msra.mxu0 %v2595
    %3741 = vmatprep.subr.bf16.mxu0 %v2604
    %3742 = vmatpush1.bf16.msra.mxu0 %v2603
    %3743 = vmatprep.subr.bf16.mxu0 %v2612
    %3744 = vmatpush1.bf16.msra.mxu0 %v2611
    %3745 = vmatprep.subr.bf16.mxu0 %v2620
    %3746 = vmatpush1.bf16.msra.mxu0 %v2619
    %3747 = vmatprep.subr.bf16.mxu0 %v2628
    %3748 = vmatpush1.bf16.msra.mxu0 %v2627
    %3749 = vmatprep.subr.bf16.mxu0 %v2636
    %3750 = vmatpush1.bf16.msra.mxu0 %v2635
    %3751 = vmatprep.subr.bf16.mxu0 %v2644
    %3752 = vmatpush1.bf16.msra.mxu0 %v2643
    %3753 = vmatprep.subr.bf16.mxu0 %v2652
    %3754 = vmatpush1.bf16.msra.mxu0 %v2651
    %3755 = vmatprep.subr.bf16.mxu0 %v2660
    %3756 = vmatpush1.bf16.msra.mxu0 %v2659
    %3757 = vmatprep.mubr.bf16.mxu0 %v440
    %3758 = vmatmul.mubr.bf16.gmra.mrb[0].mxu0 %v439
    %v3759 = vpop.f32.mrb[0].mxu0
    %v3760 = vadd.f32 %v972, %v3759
    %v3761 = vpop.f32.mrb[0].mxu0
    %v3762 = vadd.f32 %v976, %v3761
    %v3763 = vpop.f32.mrb[0].mxu0
    %v3764 = vpop.f32.mrb[0].mxu0
    %3765 = vdwg.mxu0
    %3766 = vmatprep.subr.bf16.mxu0 %v2668
    %3767 = vmatpush1.bf16.msra.mxu0 %v2667
    %3768 = vmatprep.subr.bf16.mxu0 %v2676
    %3769 = vmatpush1.bf16.msra.mxu0 %v2675
    %3770 = vmatprep.subr.bf16.mxu0 %v2684
    %3771 = vmatpush1.bf16.msra.mxu0 %v2683
    %3772 = vmatprep.subr.bf16.mxu0 %v2692
    %3773 = vmatpush1.bf16.msra.mxu0 %v2691
    %3774 = vmatprep.subr.bf16.mxu0 %v2700
    %3775 = vmatpush1.bf16.msra.mxu0 %v2699
    %3776 = vmatprep.subr.bf16.mxu0 %v2708
    %3777 = vmatpush1.bf16.msra.mxu0 %v2707
    %3778 = vmatprep.subr.bf16.mxu0 %v2716
    %3779 = vmatpush1.bf16.msra.mxu0 %v2715
    %3780 = vmatprep.subr.bf16.mxu0 %v2724
    %3781 = vmatpush1.bf16.msra.mxu0 %v2723
    %3782 = vmatprep.subr.bf16.mxu0 %v2732
    %3783 = vmatpush1.bf16.msra.mxu0 %v2731
    %3784 = vmatprep.subr.bf16.mxu0 %v2740
    %3785 = vmatpush1.bf16.msra.mxu0 %v2739
    %3786 = vmatprep.subr.bf16.mxu0 %v2748
    %3787 = vmatpush1.bf16.msra.mxu0 %v2747
    %3788 = vmatprep.subr.bf16.mxu0 %v2756
    %3789 = vmatpush1.bf16.msra.mxu0 %v2755
    %3790 = vmatprep.subr.bf16.mxu0 %v2764
    %3791 = vmatpush1.bf16.msra.mxu0 %v2763
    %3792 = vmatprep.subr.bf16.mxu0 %v2772
    %3793 = vmatpush1.bf16.msra.mxu0 %v2771
    %3794 = vmatprep.subr.bf16.mxu0 %v2780
    %3795 = vmatpush1.bf16.msra.mxu0 %v2779
    %3796 = vmatprep.subr.bf16.mxu0 %v2788
    %3797 = vmatpush1.bf16.msra.mxu0 %v2787
    %3798 = vmatprep.mubr.bf16.mxu0 %v442
    %3799 = vmatmul.mubr.bf16.gmra.mrb[0].mxu0 %v441
    %v3800 = vpop.f32.mrb[0].mxu0
    %v3801 = vadd.f32 %v3760, %v3800
    %v3802 = vpop.f32.mrb[0].mxu0
    %v3803 = vadd.f32 %v3762, %v3802
    %v3804 = vpop.f32.mrb[0].mxu0
    %v3805 = vpop.f32.mrb[0].mxu0
    %3806 = vdwg.mxu0
    %3807 = vmatprep.subr.bf16.mxu0 %v2796
    %3808 = vmatpush1.bf16.msra.mxu0 %v2795
    %3809 = vmatprep.subr.bf16.mxu0 %v2804
    %3810 = vmatpush1.bf16.msra.mxu0 %v2803
    %3811 = vmatprep.subr.bf16.mxu0 %v2812
    %3812 = vmatpush1.bf16.msra.mxu0 %v2811
    %3813 = vmatprep.subr.bf16.mxu0 %v2820
    %3814 = vmatpush1.bf16.msra.mxu0 %v2819
    %3815 = vmatprep.subr.bf16.mxu0 %v2828
    %3816 = vmatpush1.bf16.msra.mxu0 %v2827
    %3817 = vmatprep.subr.bf16.mxu0 %v2836
    %3818 = vmatpush1.bf16.msra.mxu0 %v2835
    %3819 = vmatprep.subr.bf16.mxu0 %v2844
    %3820 = vmatpush1.bf16.msra.mxu0 %v2843
    %3821 = vmatprep.subr.bf16.mxu0 %v2852
    %3822 = vmatpush1.bf16.msra.mxu0 %v2851
    %3823 = vmatprep.subr.bf16.mxu0 %v2860
    %3824 = vmatpush1.bf16.msra.mxu0 %v2859
    %3825 = vmatprep.subr.bf16.mxu0 %v2868
    %3826 = vmatpush1.bf16.msra.mxu0 %v2867
    %3827 = vmatprep.subr.bf16.mxu0 %v2876
    %3828 = vmatpush1.bf16.msra.mxu0 %v2875
    %3829 = vmatprep.subr.bf16.mxu0 %v2884
    %3830 = vmatpush1.bf16.msra.mxu0 %v2883
    %3831 = vmatprep.subr.bf16.mxu0 %v2892
    %3832 = vmatpush1.bf16.msra.mxu0 %v2891
    %3833 = vmatprep.subr.bf16.mxu0 %v2900
    %3834 = vmatpush1.bf16.msra.mxu0 %v2899
    %3835 = vmatprep.subr.bf16.mxu0 %v2908
    %3836 = vmatpush1.bf16.msra.mxu0 %v2907
    %3837 = vmatprep.subr.bf16.mxu0 %v2916
    %3838 = vmatpush1.bf16.msra.mxu0 %v2915
    %3839 = vmatprep.mubr.bf16.mxu0 %v444
    %3840 = vmatmul.mubr.bf16.gmra.mrb[0].mxu0 %v443
    %v3841 = vpop.f32.mrb[0].mxu0
    %v3842 = vadd.f32 %v3801, %v3841
    %v3843 = vpop.f32.mrb[0].mxu0
    %v3844 = vadd.f32 %v3803, %v3843
    %v3845 = vpop.f32.mrb[0].mxu0
    %v3846 = vpop.f32.mrb[0].mxu0
    %3847 = vdwg.mxu0
    %3848 = vmatprep.subr.bf16.mxu0 %v2924
    %3849 = vmatpush1.bf16.msra.mxu0 %v2923
    %3850 = vmatprep.subr.bf16.mxu0 %v2932
    %3851 = vmatpush1.bf16.msra.mxu0 %v2931
    %3852 = vmatprep.subr.bf16.mxu0 %v2940
    %3853 = vmatpush1.bf16.msra.mxu0 %v2939
    %3854 = vmatprep.subr.bf16.mxu0 %v2948
    %3855 = vmatpush1.bf16.msra.mxu0 %v2947
    %3856 = vmatprep.subr.bf16.mxu0 %v2956
    %3857 = vmatpush1.bf16.msra.mxu0 %v2955
    %3858 = vmatprep.subr.bf16.mxu0 %v2964
    %3859 = vmatpush1.bf16.msra.mxu0 %v2963
    %3860 = vmatprep.subr.bf16.mxu0 %v2972
    %3861 = vmatpush1.bf16.msra.mxu0 %v2971
    %3862 = vmatprep.subr.bf16.mxu0 %v2980
    %3863 = vmatpush1.bf16.msra.mxu0 %v2979
    %3864 = vmatprep.subr.bf16.mxu0 %v2988
    %3865 = vmatpush1.bf16.msra.mxu0 %v2987
    %3866 = vmatprep.subr.bf16.mxu0 %v2996
    %3867 = vmatpush1.bf16.msra.mxu0 %v2995
    %3868 = vmatprep.subr.bf16.mxu0 %v3004
    %3869 = vmatpush1.bf16.msra.mxu0 %v3003
    %3870 = vmatprep.subr.bf16.mxu0 %v3012
    %3871 = vmatpush1.bf16.msra.mxu0 %v3011
    %3872 = vmatprep.subr.bf16.mxu0 %v3020
    %3873 = vmatpush1.bf16.msra.mxu0 %v3019
    %3874 = vmatprep.subr.bf16.mxu0 %v3028
    %3875 = vmatpush1.bf16.msra.mxu0 %v3027
    %3876 = vmatprep.subr.bf16.mxu0 %v3036
    %3877 = vmatpush1.bf16.msra.mxu0 %v3035
    %3878 = vmatprep.subr.bf16.mxu0 %v3044
    %3879 = vmatpush1.bf16.msra.mxu0 %v3043
    %3880 = vmatprep.mubr.bf16.mxu0 %v446
    %3881 = vmatmul.mubr.bf16.gmra.mrb[0].mxu0 %v445
    %v3882 = vpop.f32.mrb[0].mxu0
    %v3883 = vadd.f32 %v3842, %v3882
    %v3884 = vpop.f32.mrb[0].mxu0
    %v3885 = vadd.f32 %v3844, %v3884
    %v3886 = vpop.f32.mrb[0].mxu0
    %v3887 = vpop.f32.mrb[0].mxu0
    %3888 = vdwg.mxu0
    %3889 = vmatprep.subr.bf16.mxu0 %v2542
    %3890 = vmatpush1.bf16.msra.mxu0 %v2541
    %3891 = vmatprep.subr.bf16.mxu0 %v2550
    %3892 = vmatpush1.bf16.msra.mxu0 %v2549
    %3893 = vmatprep.subr.bf16.mxu0 %v2558
    %3894 = vmatpush1.bf16.msra.mxu0 %v2557
    %3895 = vmatprep.subr.bf16.mxu0 %v2566
    %3896 = vmatpush1.bf16.msra.mxu0 %v2565
    %3897 = vmatprep.subr.bf16.mxu0 %v2574
    %3898 = vmatpush1.bf16.msra.mxu0 %v2573
    %3899 = vmatprep.subr.bf16.mxu0 %v2582
    %3900 = vmatpush1.bf16.msra.mxu0 %v2581
    %3901 = vmatprep.subr.bf16.mxu0 %v2590
    %3902 = vmatpush1.bf16.msra.mxu0 %v2589
    %3903 = vmatprep.subr.bf16.mxu0 %v2598
    %3904 = vmatpush1.bf16.msra.mxu0 %v2597
    %3905 = vmatprep.subr.bf16.mxu0 %v2606
    %3906 = vmatpush1.bf16.msra.mxu0 %v2605
    %3907 = vmatprep.subr.bf16.mxu0 %v2614
    %3908 = vmatpush1.bf16.msra.mxu0 %v2613
    %3909 = vmatprep.subr.bf16.mxu0 %v2622
    %3910 = vmatpush1.bf16.msra.mxu0 %v2621
    %3911 = vmatprep.subr.bf16.mxu0 %v2630
    %3912 = vmatpush1.bf16.msra.mxu0 %v2629
    %3913 = vmatprep.subr.bf16.mxu0 %v2638
    %3914 = vmatpush1.bf16.msra.mxu0 %v2637
    %3915 = vmatprep.subr.bf16.mxu0 %v2646
    %3916 = vmatpush1.bf16.msra.mxu0 %v2645
    %3917 = vmatprep.subr.bf16.mxu0 %v2654
    %3918 = vmatpush1.bf16.msra.mxu0 %v2653
    %3919 = vmatprep.subr.bf16.mxu0 %v2662
    %3920 = vmatpush1.bf16.msra.mxu0 %v2661
    %3921 = vmatprep.mubr.bf16.mxu0 %v440
    %3922 = vmatmul.mubr.bf16.gmra.mrb[0].mxu0 %v439
    %v3923 = vpop.f32.mrb[0].mxu0
    %v3924 = vadd.f32 %v980, %v3923
    %v3925 = vpop.f32.mrb[0].mxu0
    %v3926 = vadd.f32 %v984, %v3925
    %v3927 = vpop.f32.mrb[0].mxu0
    %v3928 = vpop.f32.mrb[0].mxu0
    %3929 = vdwg.mxu0
    %3930 = vmatprep.subr.bf16.mxu0 %v2670
    %3931 = vmatpush1.bf16.msra.mxu0 %v2669
    %3932 = vmatprep.subr.bf16.mxu0 %v2678
    %3933 = vmatpush1.bf16.msra.mxu0 %v2677
    %3934 = vmatprep.subr.bf16.mxu0 %v2686
    %3935 = vmatpush1.bf16.msra.mxu0 %v2685
    %3936 = vmatprep.subr.bf16.mxu0 %v2694
    %3937 = vmatpush1.bf16.msra.mxu0 %v2693
    %3938 = vmatprep.subr.bf16.mxu0 %v2702
    %3939 = vmatpush1.bf16.msra.mxu0 %v2701
    %3940 = vmatprep.subr.bf16.mxu0 %v2710
    %3941 = vmatpush1.bf16.msra.mxu0 %v2709
    %3942 = vmatprep.subr.bf16.mxu0 %v2718
    %3943 = vmatpush1.bf16.msra.mxu0 %v2717
    %3944 = vmatprep.subr.bf16.mxu0 %v2726
    %3945 = vmatpush1.bf16.msra.mxu0 %v2725
    %3946 = vmatprep.subr.bf16.mxu0 %v2734
    %3947 = vmatpush1.bf16.msra.mxu0 %v2733
    %3948 = vmatprep.subr.bf16.mxu0 %v2742
    %3949 = vmatpush1.bf16.msra.mxu0 %v2741
    %3950 = vmatprep.subr.bf16.mxu0 %v2750
    %3951 = vmatpush1.bf16.msra.mxu0 %v2749
    %3952 = vmatprep.subr.bf16.mxu0 %v2758
    %3953 = vmatpush1.bf16.msra.mxu0 %v2757
    %3954 = vmatprep.subr.bf16.mxu0 %v2766
    %3955 = vmatpush1.bf16.msra.mxu0 %v2765
    %3956 = vmatprep.subr.bf16.mxu0 %v2774
    %3957 = vmatpush1.bf16.msra.mxu0 %v2773
    %3958 = vmatprep.subr.bf16.mxu0 %v2782
    %3959 = vmatpush1.bf16.msra.mxu0 %v2781
    %3960 = vmatprep.subr.bf16.mxu0 %v2790
    %3961 = vmatpush1.bf16.msra.mxu0 %v2789
    %3962 = vmatprep.mubr.bf16.mxu0 %v442
    %3963 = vmatmul.mubr.bf16.gmra.mrb[0].mxu0 %v441
    %v3964 = vpop.f32.mrb[0].mxu0
    %v3965 = vadd.f32 %v3924, %v3964
    %v3966 = vpop.f32.mrb[0].mxu0
    %v3967 = vadd.f32 %v3926, %v3966
    %v3968 = vpop.f32.mrb[0].mxu0
    %v3969 = vpop.f32.mrb[0].mxu0
    %3970 = vdwg.mxu0
    %3971 = vmatprep.subr.bf16.mxu0 %v2798
    %3972 = vmatpush1.bf16.msra.mxu0 %v2797
    %3973 = vmatprep.subr.bf16.mxu0 %v2806
    %3974 = vmatpush1.bf16.msra.mxu0 %v2805
    %3975 = vmatprep.subr.bf16.mxu0 %v2814
    %3976 = vmatpush1.bf16.msra.mxu0 %v2813
    %3977 = vmatprep.subr.bf16.mxu0 %v2822
    %3978 = vmatpush1.bf16.msra.mxu0 %v2821
    %3979 = vmatprep.subr.bf16.mxu0 %v2830
    %3980 = vmatpush1.bf16.msra.mxu0 %v2829
    %3981 = vmatprep.subr.bf16.mxu0 %v2838
    %3982 = vmatpush1.bf16.msra.mxu0 %v2837
    %3983 = vmatprep.subr.bf16.mxu0 %v2846
    %3984 = vmatpush1.bf16.msra.mxu0 %v2845
    %3985 = vmatprep.subr.bf16.mxu0 %v2854
    %3986 = vmatpush1.bf16.msra.mxu0 %v2853
    %3987 = vmatprep.subr.bf16.mxu0 %v2862
    %3988 = vmatpush1.bf16.msra.mxu0 %v2861
    %3989 = vmatprep.subr.bf16.mxu0 %v2870
    %3990 = vmatpush1.bf16.msra.mxu0 %v2869
    %3991 = vmatprep.subr.bf16.mxu0 %v2878
    %3992 = vmatpush1.bf16.msra.mxu0 %v2877
    %3993 = vmatprep.subr.bf16.mxu0 %v2886
    %3994 = vmatpush1.bf16.msra.mxu0 %v2885
    %3995 = vmatprep.subr.bf16.mxu0 %v2894
    %3996 = vmatpush1.bf16.msra.mxu0 %v2893
    %3997 = vmatprep.subr.bf16.mxu0 %v2902
    %3998 = vmatpush1.bf16.msra.mxu0 %v2901
    %3999 = vmatprep.subr.bf16.mxu0 %v2910
    %4000 = vmatpush1.bf16.msra.mxu0 %v2909
    %4001 = vmatprep.subr.bf16.mxu0 %v2918
    %4002 = vmatpush1.bf16.msra.mxu0 %v2917
    %4003 = vmatprep.mubr.bf16.mxu0 %v444
    %4004 = vmatmul.mubr.bf16.gmra.mrb[0].mxu0 %v443
    %v4005 = vpop.f32.mrb[0].mxu0
    %v4006 = vadd.f32 %v3965, %v4005
    %v4007 = vpop.f32.mrb[0].mxu0
    %v4008 = vadd.f32 %v3967, %v4007
    %v4009 = vpop.f32.mrb[0].mxu0
    %v4010 = vpop.f32.mrb[0].mxu0
    %4011 = vdwg.mxu0
    %4012 = vmatprep.subr.bf16.mxu0 %v2926
    %4013 = vmatpush1.bf16.msra.mxu0 %v2925
    %4014 = vmatprep.subr.bf16.mxu0 %v2934
    %4015 = vmatpush1.bf16.msra.mxu0 %v2933
    %4016 = vmatprep.subr.bf16.mxu0 %v2942
    %4017 = vmatpush1.bf16.msra.mxu0 %v2941
    %4018 = vmatprep.subr.bf16.mxu0 %v2950
    %4019 = vmatpush1.bf16.msra.mxu0 %v2949
    %4020 = vmatprep.subr.bf16.mxu0 %v2958
    %4021 = vmatpush1.bf16.msra.mxu0 %v2957
    %4022 = vmatprep.subr.bf16.mxu0 %v2966
    %4023 = vmatpush1.bf16.msra.mxu0 %v2965
    %4024 = vmatprep.subr.bf16.mxu0 %v2974
    %4025 = vmatpush1.bf16.msra.mxu0 %v2973
    %4026 = vmatprep.subr.bf16.mxu0 %v2982
    %4027 = vmatpush1.bf16.msra.mxu0 %v2981
    %4028 = vmatprep.subr.bf16.mxu0 %v2990
    %4029 = vmatpush1.bf16.msra.mxu0 %v2989
    %4030 = vmatprep.subr.bf16.mxu0 %v2998
    %4031 = vmatpush1.bf16.msra.mxu0 %v2997
    %4032 = vmatprep.subr.bf16.mxu0 %v3006
    %4033 = vmatpush1.bf16.msra.mxu0 %v3005
    %4034 = vmatprep.subr.bf16.mxu0 %v3014
    %4035 = vmatpush1.bf16.msra.mxu0 %v3013
    %4036 = vmatprep.subr.bf16.mxu0 %v3022
    %4037 = vmatpush1.bf16.msra.mxu0 %v3021
    %4038 = vmatprep.subr.bf16.mxu0 %v3030
    %4039 = vmatpush1.bf16.msra.mxu0 %v3029
    %4040 = vmatprep.subr.bf16.mxu0 %v3038
    %4041 = vmatpush1.bf16.msra.mxu0 %v3037
    %4042 = vmatprep.subr.bf16.mxu0 %v3046
    %4043 = vmatpush1.bf16.msra.mxu0 %v3045
    %4044 = vmatprep.mubr.bf16.mxu0 %v446
    %4045 = vmatmul.mubr.bf16.gmra.mrb[0].mxu0 %v445
    %v4046 = vpop.f32.mrb[0].mxu0
    %v4047 = vadd.f32 %v4006, %v4046
    %v4048 = vpop.f32.mrb[0].mxu0
    %v4049 = vadd.f32 %v4008, %v4048
    %v4050 = vpop.f32.mrb[0].mxu0
    %v4051 = vpop.f32.mrb[0].mxu0
    %4052 = vdwg.mxu0
    %4053 = vmatprep.subr.bf16.mxu0 %v2544
    %4054 = vmatpush1.bf16.msra.mxu0 %v2543
    %4055 = vmatprep.subr.bf16.mxu0 %v2552
    %4056 = vmatpush1.bf16.msra.mxu0 %v2551
    %4057 = vmatprep.subr.bf16.mxu0 %v2560
    %4058 = vmatpush1.bf16.msra.mxu0 %v2559
    %4059 = vmatprep.subr.bf16.mxu0 %v2568
    %4060 = vmatpush1.bf16.msra.mxu0 %v2567
    %4061 = vmatprep.subr.bf16.mxu0 %v2576
    %4062 = vmatpush1.bf16.msra.mxu0 %v2575
    %4063 = vmatprep.subr.bf16.mxu0 %v2584
    %4064 = vmatpush1.bf16.msra.mxu0 %v2583
    %4065 = vmatprep.subr.bf16.mxu0 %v2592
    %4066 = vmatpush1.bf16.msra.mxu0 %v2591
    %4067 = vmatprep.subr.bf16.mxu0 %v2600
    %4068 = vmatpush1.bf16.msra.mxu0 %v2599
    %4069 = vmatprep.subr.bf16.mxu0 %v2608
    %4070 = vmatpush1.bf16.msra.mxu0 %v2607
    %4071 = vmatprep.subr.bf16.mxu0 %v2616
    %4072 = vmatpush1.bf16.msra.mxu0 %v2615
    %4073 = vmatprep.subr.bf16.mxu0 %v2624
    %4074 = vmatpush1.bf16.msra.mxu0 %v2623
    %4075 = vmatprep.subr.bf16.mxu0 %v2632
    %4076 = vmatpush1.bf16.msra.mxu0 %v2631
    %4077 = vmatprep.subr.bf16.mxu0 %v2640
    %4078 = vmatpush1.bf16.msra.mxu0 %v2639
    %4079 = vmatprep.subr.bf16.mxu0 %v2648
    %4080 = vmatpush1.bf16.msra.mxu0 %v2647
    %4081 = vmatprep.subr.bf16.mxu0 %v2656
    %4082 = vmatpush1.bf16.msra.mxu0 %v2655
    %4083 = vmatprep.subr.bf16.mxu0 %v2664
    %4084 = vmatpush1.bf16.msra.mxu0 %v2663
    %4085 = vmatprep.mubr.bf16.mxu0 %v440
    %4086 = vmatmul.mubr.bf16.gmra.mrb[0].mxu0 %v439
    %v4087 = vpop.f32.mrb[0].mxu0
    %v4088 = vadd.f32 %v988, %v4087
    %v4089 = vpop.f32.mrb[0].mxu0
    %v4090 = vadd.f32 %v992, %v4089
    %v4091 = vpop.f32.mrb[0].mxu0
    %v4092 = vpop.f32.mrb[0].mxu0
    %4093 = vdwg.mxu0
    %4094 = vmatprep.subr.bf16.mxu0 %v2672
    %4095 = vmatpush1.bf16.msra.mxu0 %v2671
    %4096 = vmatprep.subr.bf16.mxu0 %v2680
    %4097 = vmatpush1.bf16.msra.mxu0 %v2679
    %4098 = vmatprep.subr.bf16.mxu0 %v2688
    %4099 = vmatpush1.bf16.msra.mxu0 %v2687
    %4100 = vmatprep.subr.bf16.mxu0 %v2696
    %4101 = vmatpush1.bf16.msra.mxu0 %v2695
    %4102 = vmatprep.subr.bf16.mxu0 %v2704
    %4103 = vmatpush1.bf16.msra.mxu0 %v2703
    %4104 = vmatprep.subr.bf16.mxu0 %v2712
    %4105 = vmatpush1.bf16.msra.mxu0 %v2711
    %4106 = vmatprep.subr.bf16.mxu0 %v2720
    %4107 = vmatpush1.bf16.msra.mxu0 %v2719
    %4108 = vmatprep.subr.bf16.mxu0 %v2728
    %4109 = vmatpush1.bf16.msra.mxu0 %v2727
    %4110 = vmatprep.subr.bf16.mxu0 %v2736
    %4111 = vmatpush1.bf16.msra.mxu0 %v2735
    %4112 = vmatprep.subr.bf16.mxu0 %v2744
    %4113 = vmatpush1.bf16.msra.mxu0 %v2743
    %4114 = vmatprep.subr.bf16.mxu0 %v2752
    %4115 = vmatpush1.bf16.msra.mxu0 %v2751
    %4116 = vmatprep.subr.bf16.mxu0 %v2760
    %4117 = vmatpush1.bf16.msra.mxu0 %v2759
    %4118 = vmatprep.subr.bf16.mxu0 %v2768
    %4119 = vmatpush1.bf16.msra.mxu0 %v2767
    %4120 = vmatprep.subr.bf16.mxu0 %v2776
    %4121 = vmatpush1.bf16.msra.mxu0 %v2775
    %4122 = vmatprep.subr.bf16.mxu0 %v2784
    %4123 = vmatpush1.bf16.msra.mxu0 %v2783
    %4124 = vmatprep.subr.bf16.mxu0 %v2792
    %4125 = vmatpush1.bf16.msra.mxu0 %v2791
    %4126 = vmatprep.mubr.bf16.mxu0 %v442
    %4127 = vmatmul.mubr.bf16.gmra.mrb[0].mxu0 %v441
    %v4128 = vpop.f32.mrb[0].mxu0
    %v4129 = vadd.f32 %v4088, %v4128
    %v4130 = vpop.f32.mrb[0].mxu0
    %v4131 = vadd.f32 %v4090, %v4130
    %v4132 = vpop.f32.mrb[0].mxu0
    %v4133 = vpop.f32.mrb[0].mxu0
    %4134 = vdwg.mxu0
    %4135 = vmatprep.subr.bf16.mxu0 %v2800
    %4136 = vmatpush1.bf16.msra.mxu0 %v2799
    %4137 = vmatprep.subr.bf16.mxu0 %v2808
    %4138 = vmatpush1.bf16.msra.mxu0 %v2807
    %4139 = vmatprep.subr.bf16.mxu0 %v2816
    %4140 = vmatpush1.bf16.msra.mxu0 %v2815
    %4141 = vmatprep.subr.bf16.mxu0 %v2824
    %4142 = vmatpush1.bf16.msra.mxu0 %v2823
    %4143 = vmatprep.subr.bf16.mxu0 %v2832
    %4144 = vmatpush1.bf16.msra.mxu0 %v2831
    %4145 = vmatprep.subr.bf16.mxu0 %v2840
    %4146 = vmatpush1.bf16.msra.mxu0 %v2839
    %4147 = vmatprep.subr.bf16.mxu0 %v2848
    %4148 = vmatpush1.bf16.msra.mxu0 %v2847
    %4149 = vmatprep.subr.bf16.mxu0 %v2856
    %4150 = vmatpush1.bf16.msra.mxu0 %v2855
    %4151 = vmatprep.subr.bf16.mxu0 %v2864
    %4152 = vmatpush1.bf16.msra.mxu0 %v2863
    %4153 = vmatprep.subr.bf16.mxu0 %v2872
    %4154 = vmatpush1.bf16.msra.mxu0 %v2871
    %4155 = vmatprep.subr.bf16.mxu0 %v2880
    %4156 = vmatpush1.bf16.msra.mxu0 %v2879
    %4157 = vmatprep.subr.bf16.mxu0 %v2888
    %4158 = vmatpush1.bf16.msra.mxu0 %v2887
    %4159 = vmatprep.subr.bf16.mxu0 %v2896
    %4160 = vmatpush1.bf16.msra.mxu0 %v2895
    %4161 = vmatprep.subr.bf16.mxu0 %v2904
    %4162 = vmatpush1.bf16.msra.mxu0 %v2903
    %4163 = vmatprep.subr.bf16.mxu0 %v2912
    %4164 = vmatpush1.bf16.msra.mxu0 %v2911
    %4165 = vmatprep.subr.bf16.mxu0 %v2920
    %4166 = vmatpush1.bf16.msra.mxu0 %v2919
    %4167 = vmatprep.mubr.bf16.mxu0 %v444
    %4168 = vmatmul.mubr.bf16.gmra.mrb[0].mxu0 %v443
    %v4169 = vpop.f32.mrb[0].mxu0
    %v4170 = vadd.f32 %v4129, %v4169
    %v4171 = vpop.f32.mrb[0].mxu0
    %v4172 = vadd.f32 %v4131, %v4171
    %v4173 = vpop.f32.mrb[0].mxu0
    %v4174 = vpop.f32.mrb[0].mxu0
    %4175 = vdwg.mxu0
    %4176 = vmatprep.subr.bf16.mxu0 %v2928
    %4177 = vmatpush1.bf16.msra.mxu0 %v2927
    %4178 = vmatprep.subr.bf16.mxu0 %v2936
    %4179 = vmatpush1.bf16.msra.mxu0 %v2935
    %4180 = vmatprep.subr.bf16.mxu0 %v2944
    %4181 = vmatpush1.bf16.msra.mxu0 %v2943
    %4182 = vmatprep.subr.bf16.mxu0 %v2952
    %4183 = vmatpush1.bf16.msra.mxu0 %v2951
    %4184 = vmatprep.subr.bf16.mxu0 %v2960
    %4185 = vmatpush1.bf16.msra.mxu0 %v2959
    %4186 = vmatprep.subr.bf16.mxu0 %v2968
    %4187 = vmatpush1.bf16.msra.mxu0 %v2967
    %4188 = vmatprep.subr.bf16.mxu0 %v2976
    %4189 = vmatpush1.bf16.msra.mxu0 %v2975
    %4190 = vmatprep.subr.bf16.mxu0 %v2984
    %4191 = vmatpush1.bf16.msra.mxu0 %v2983
    %4192 = vmatprep.subr.bf16.mxu0 %v2992
    %4193 = vmatpush1.bf16.msra.mxu0 %v2991
    %4194 = vmatprep.subr.bf16.mxu0 %v3000
    %4195 = vmatpush1.bf16.msra.mxu0 %v2999
    %4196 = vmatprep.subr.bf16.mxu0 %v3008
    %4197 = vmatpush1.bf16.msra.mxu0 %v3007
    %4198 = vmatprep.subr.bf16.mxu0 %v3016
    %4199 = vmatpush1.bf16.msra.mxu0 %v3015
    %4200 = vmatprep.subr.bf16.mxu0 %v3024
    %4201 = vmatpush1.bf16.msra.mxu0 %v3023
    %4202 = vmatprep.subr.bf16.mxu0 %v3032
    %4203 = vmatpush1.bf16.msra.mxu0 %v3031
    %4204 = vmatprep.subr.bf16.mxu0 %v3040
    %4205 = vmatpush1.bf16.msra.mxu0 %v3039
    %4206 = vmatprep.subr.bf16.mxu0 %v3048
    %4207 = vmatpush1.bf16.msra.mxu0 %v3047
    %4208 = vmatprep.mubr.bf16.mxu0 %v446
    %4209 = vmatmul.mubr.bf16.gmra.mrb[0].mxu0 %v445
    %v4210 = vpop.f32.mrb[0].mxu0
    %v4211 = vadd.f32 %v4170, %v4210
    %v4212 = vpop.f32.mrb[0].mxu0
    %v4213 = vadd.f32 %v4172, %v4212
    %v4214 = vpop.f32.mrb[0].mxu0
    %v4215 = vpop.f32.mrb[0].mxu0
    %4216 = vdwg.mxu0
    %v4217 = vpack.c.bf16 %v3719, %v3719
    %v4218 = vpack.c.bf16 %v3721, %v3721
    %v4219 = vpack.c.bf16 %v3883, %v3883
    %v4220 = vpack.c.bf16 %v3885, %v3885
    %v4221 = vpack.c.bf16 %v4047, %v4047
    %v4222 = vpack.c.bf16 %v4049, %v4049
    %v4223 = vpack.c.bf16 %v4211, %v4211
    %v4224 = vpack.c.bf16 %v4213, %v4213
    %v4225 = vld [vmem:[#allocation10] sm:$0xf]
    %v4226 = vld [vmem:[#allocation10 + $0x4] sm:$0xf]
    %v4227 = vld [vmem:[#allocation10 + $0x8] sm:$0xf]
    %v4228 = vld [vmem:[#allocation10 + $0xc] sm:$0xf]
    %v4229 = vld [vmem:[#allocation10 + $0x10] sm:$0xf]
    %v4230 = vld [vmem:[#allocation10 + $0x14] sm:$0xf]
    %v4231 = vld [vmem:[#allocation10 + $0x18] sm:$0xf]
    %v4232 = vld [vmem:[#allocation10 + $0x1c] sm:$0xf]
    %v4233 = vld [vmem:[#allocation10 + $0x20] sm:$0xf]
    %v4234 = vld [vmem:[#allocation10 + $0x24] sm:$0xf]
    %v4235 = vld [vmem:[#allocation10 + $0x28] sm:$0xf]
    %v4236 = vld [vmem:[#allocation10 + $0x2c] sm:$0xf]
    %v4237 = vld [vmem:[#allocation10 + $0x30] sm:$0xf]
    %v4238 = vld [vmem:[#allocation10 + $0x34] sm:$0xf]
    %v4239 = vld [vmem:[#allocation10 + $0x38] sm:$0xf]
    %v4240 = vld [vmem:[#allocation10 + $0x3c] sm:$0xf]
    %v4241 = vld [vmem:[#allocation10 + $0x40] sm:$0xf]
    %v4242 = vld [vmem:[#allocation10 + $0x44] sm:$0xf]
    %v4243 = vld [vmem:[#allocation10 + $0x48] sm:$0xf]
    %v4244 = vld [vmem:[#allocation10 + $0x4c] sm:$0xf]
    %v4245 = vld [vmem:[#allocation10 + $0x50] sm:$0xf]
    %v4246 = vld [vmem:[#allocation10 + $0x54] sm:$0xf]
    %v4247 = vld [vmem:[#allocation10 + $0x58] sm:$0xf]
    %v4248 = vld [vmem:[#allocation10 + $0x5c] sm:$0xf]
    %v4249 = vld [vmem:[#allocation10 + $0x60] sm:$0xf]
    %v4250 = vld [vmem:[#allocation10 + $0x64] sm:$0xf]
    %v4251 = vld [vmem:[#allocation10 + $0x68] sm:$0xf]
    %v4252 = vld [vmem:[#allocation10 + $0x6c] sm:$0xf]
    %v4253 = vld [vmem:[#allocation10 + $0x70] sm:$0xf]
    %v4254 = vld [vmem:[#allocation10 + $0x74] sm:$0xf]
    %v4255 = vld [vmem:[#allocation10 + $0x78] sm:$0xf]
    %v4256 = vld [vmem:[#allocation10 + $0x7c] sm:$0xf]
    %v4257 = vld [vmem:[#allocation10 + $0x80] sm:$0xf]
    %v4258 = vld [vmem:[#allocation10 + $0x84] sm:$0xf]
    %v4259 = vld [vmem:[#allocation10 + $0x88] sm:$0xf]
    %v4260 = vld [vmem:[#allocation10 + $0x8c] sm:$0xf]
    %v4261 = vld [vmem:[#allocation10 + $0x90] sm:$0xf]
    %v4262 = vld [vmem:[#allocation10 + $0x94] sm:$0xf]
    %v4263 = vld [vmem:[#allocation10 + $0x98] sm:$0xf]
    %v4264 = vld [vmem:[#allocation10 + $0x9c] sm:$0xf]
    %v4265 = vld [vmem:[#allocation10 + $0xa0] sm:$0xf]
    %v4266 = vld [vmem:[#allocation10 + $0xa4] sm:$0xf]
    %v4267 = vld [vmem:[#allocation10 + $0xa8] sm:$0xf]
    %v4268 = vld [vmem:[#allocation10 + $0xac] sm:$0xf]
    %v4269 = vld [vmem:[#allocation10 + $0xb0] sm:$0xf]
    %v4270 = vld [vmem:[#allocation10 + $0xb4] sm:$0xf]
    %v4271 = vld [vmem:[#allocation10 + $0xb8] sm:$0xf]
    %v4272 = vld [vmem:[#allocation10 + $0xbc] sm:$0xf]
    %v4273 = vld [vmem:[#allocation10 + $0xc0] sm:$0xf]
    %v4274 = vld [vmem:[#allocation10 + $0xc4] sm:$0xf]
    %v4275 = vld [vmem:[#allocation10 + $0xc8] sm:$0xf]
    %v4276 = vld [vmem:[#allocation10 + $0xcc] sm:$0xf]
    %v4277 = vld [vmem:[#allocation10 + $0xd0] sm:$0xf]
    %v4278 = vld [vmem:[#allocation10 + $0xd4] sm:$0xf]
    %v4279 = vld [vmem:[#allocation10 + $0xd8] sm:$0xf]
    %v4280 = vld [vmem:[#allocation10 + $0xdc] sm:$0xf]
    %v4281 = vld [vmem:[#allocation10 + $0xe0] sm:$0xf]
    %v4282 = vld [vmem:[#allocation10 + $0xe4] sm:$0xf]
    %v4283 = vld [vmem:[#allocation10 + $0xe8] sm:$0xf]
    %v4284 = vld [vmem:[#allocation10 + $0xec] sm:$0xf]
    %v4285 = vld [vmem:[#allocation10 + $0xf0] sm:$0xf]
    %v4286 = vld [vmem:[#allocation10 + $0xf4] sm:$0xf]
    %v4287 = vld [vmem:[#allocation10 + $0xf8] sm:$0xf]
    %v4288 = vld [vmem:[#allocation10 + $0xfc] sm:$0xf]
    %v4289 = vld [vmem:[#allocation10 + $0x100] sm:$0xf]
    %v4290 = vld [vmem:[#allocation10 + $0x104] sm:$0xf]
    %v4291 = vld [vmem:[#allocation10 + $0x108] sm:$0xf]
    %v4292 = vld [vmem:[#allocation10 + $0x10c] sm:$0xf]
    %v4293 = vld [vmem:[#allocation10 + $0x110] sm:$0xf]
    %v4294 = vld [vmem:[#allocation10 + $0x114] sm:$0xf]
    %v4295 = vld [vmem:[#allocation10 + $0x118] sm:$0xf]
    %v4296 = vld [vmem:[#allocation10 + $0x11c] sm:$0xf]
    %v4297 = vld [vmem:[#allocation10 + $0x120] sm:$0xf]
    %v4298 = vld [vmem:[#allocation10 + $0x124] sm:$0xf]
    %v4299 = vld [vmem:[#allocation10 + $0x128] sm:$0xf]
    %v4300 = vld [vmem:[#allocation10 + $0x12c] sm:$0xf]
    %v4301 = vld [vmem:[#allocation10 + $0x130] sm:$0xf]
    %v4302 = vld [vmem:[#allocation10 + $0x134] sm:$0xf]
    %v4303 = vld [vmem:[#allocation10 + $0x138] sm:$0xf]
    %v4304 = vld [vmem:[#allocation10 + $0x13c] sm:$0xf]
    %v4305 = vld [vmem:[#allocation10 + $0x140] sm:$0xf]
    %v4306 = vld [vmem:[#allocation10 + $0x144] sm:$0xf]
    %v4307 = vld [vmem:[#allocation10 + $0x148] sm:$0xf]
    %v4308 = vld [vmem:[#allocation10 + $0x14c] sm:$0xf]
    %v4309 = vld [vmem:[#allocation10 + $0x150] sm:$0xf]
    %v4310 = vld [vmem:[#allocation10 + $0x154] sm:$0xf]
    %v4311 = vld [vmem:[#allocation10 + $0x158] sm:$0xf]
    %v4312 = vld [vmem:[#allocation10 + $0x15c] sm:$0xf]
    %v4313 = vld [vmem:[#allocation10 + $0x160] sm:$0xf]
    %v4314 = vld [vmem:[#allocation10 + $0x164] sm:$0xf]
    %v4315 = vld [vmem:[#allocation10 + $0x168] sm:$0xf]
    %v4316 = vld [vmem:[#allocation10 + $0x16c] sm:$0xf]
    %v4317 = vld [vmem:[#allocation10 + $0x170] sm:$0xf]
    %v4318 = vld [vmem:[#allocation10 + $0x174] sm:$0xf]
    %v4319 = vld [vmem:[#allocation10 + $0x178] sm:$0xf]
    %v4320 = vld [vmem:[#allocation10 + $0x17c] sm:$0xf]
    %v4321 = vld [vmem:[#allocation10 + $0x180] sm:$0xf]
    %v4322 = vld [vmem:[#allocation10 + $0x184] sm:$0xf]
    %v4323 = vld [vmem:[#allocation10 + $0x188] sm:$0xf]
    %v4324 = vld [vmem:[#allocation10 + $0x18c] sm:$0xf]
    %v4325 = vld [vmem:[#allocation10 + $0x190] sm:$0xf]
    %v4326 = vld [vmem:[#allocation10 + $0x194] sm:$0xf]
    %v4327 = vld [vmem:[#allocation10 + $0x198] sm:$0xf]
    %v4328 = vld [vmem:[#allocation10 + $0x19c] sm:$0xf]
    %v4329 = vld [vmem:[#allocation10 + $0x1a0] sm:$0xf]
    %v4330 = vld [vmem:[#allocation10 + $0x1a4] sm:$0xf]
    %v4331 = vld [vmem:[#allocation10 + $0x1a8] sm:$0xf]
    %v4332 = vld [vmem:[#allocation10 + $0x1ac] sm:$0xf]
    %v4333 = vld [vmem:[#allocation10 + $0x1b0] sm:$0xf]
    %v4334 = vld [vmem:[#allocation10 + $0x1b4] sm:$0xf]
    %v4335 = vld [vmem:[#allocation10 + $0x1b8] sm:$0xf]
    %v4336 = vld [vmem:[#allocation10 + $0x1bc] sm:$0xf]
    %v4337 = vld [vmem:[#allocation10 + $0x1c0] sm:$0xf]
    %v4338 = vld [vmem:[#allocation10 + $0x1c4] sm:$0xf]
    %v4339 = vld [vmem:[#allocation10 + $0x1c8] sm:$0xf]
    %v4340 = vld [vmem:[#allocation10 + $0x1cc] sm:$0xf]
    %v4341 = vld [vmem:[#allocation10 + $0x1d0] sm:$0xf]
    %v4342 = vld [vmem:[#allocation10 + $0x1d4] sm:$0xf]
    %v4343 = vld [vmem:[#allocation10 + $0x1d8] sm:$0xf]
    %v4344 = vld [vmem:[#allocation10 + $0x1dc] sm:$0xf]
    %v4345 = vld [vmem:[#allocation10 + $0x1e0] sm:$0xf]
    %v4346 = vld [vmem:[#allocation10 + $0x1e4] sm:$0xf]
    %v4347 = vld [vmem:[#allocation10 + $0x1e8] sm:$0xf]
    %v4348 = vld [vmem:[#allocation10 + $0x1ec] sm:$0xf]
    %v4349 = vld [vmem:[#allocation10 + $0x1f0] sm:$0xf]
    %v4350 = vld [vmem:[#allocation10 + $0x1f4] sm:$0xf]
    %v4351 = vld [vmem:[#allocation10 + $0x1f8] sm:$0xf]
    %v4352 = vld [vmem:[#allocation10 + $0x1fc] sm:$0xf]
    %v4353 = vld [vmem:[#allocation12] sm:$0x1]
    %v4355 = vlaneseq
    %v4356 = vshrl.u32 %v4355, 7
    %v4357 = vsub.s32 0, %v4356
    %v4358 = vrot.slane %v4353, %v4357
    %v4488 = vunpack.c.l.b16 %v4225
    %v4489 = vunpack.c.l.b16 %v4226
    %v4490 = vunpack.c.l.b16 %v4227
    %v4491 = vunpack.c.l.b16 %v4228
    %v4492 = vunpack.c.l.b16 %v4229
    %v4493 = vunpack.c.l.b16 %v4230
    %v4494 = vunpack.c.l.b16 %v4231
    %v4495 = vunpack.c.l.b16 %v4232
    %v4496 = vunpack.c.l.b16 %v4233
    %v4497 = vunpack.c.l.b16 %v4234
    %v4498 = vunpack.c.l.b16 %v4235
    %v4499 = vunpack.c.l.b16 %v4236
    %v4500 = vunpack.c.l.b16 %v4237
    %v4501 = vunpack.c.l.b16 %v4238
    %v4502 = vunpack.c.l.b16 %v4239
    %v4503 = vunpack.c.l.b16 %v4240
    %v4504 = vunpack.c.l.b16 %v4241
    %v4505 = vunpack.c.l.b16 %v4242
    %v4506 = vunpack.c.l.b16 %v4243
    %v4507 = vunpack.c.l.b16 %v4244
    %v4508 = vunpack.c.l.b16 %v4245
    %v4509 = vunpack.c.l.b16 %v4246
    %v4510 = vunpack.c.l.b16 %v4247
    %v4511 = vunpack.c.l.b16 %v4248
    %v4512 = vunpack.c.l.b16 %v4249
    %v4513 = vunpack.c.l.b16 %v4250
    %v4514 = vunpack.c.l.b16 %v4251
    %v4515 = vunpack.c.l.b16 %v4252
    %v4516 = vunpack.c.l.b16 %v4253
    %v4517 = vunpack.c.l.b16 %v4254
    %v4518 = vunpack.c.l.b16 %v4255
    %v4519 = vunpack.c.l.b16 %v4256
    %v4520 = vunpack.c.l.b16 %v4257
    %v4521 = vunpack.c.l.b16 %v4258
    %v4522 = vunpack.c.l.b16 %v4259
    %v4523 = vunpack.c.l.b16 %v4260
    %v4524 = vunpack.c.l.b16 %v4261
    %v4525 = vunpack.c.l.b16 %v4262
    %v4526 = vunpack.c.l.b16 %v4263
    %v4527 = vunpack.c.l.b16 %v4264
    %v4528 = vunpack.c.l.b16 %v4265
    %v4529 = vunpack.c.l.b16 %v4266
    %v4530 = vunpack.c.l.b16 %v4267
    %v4531 = vunpack.c.l.b16 %v4268
    %v4532 = vunpack.c.l.b16 %v4269
    %v4533 = vunpack.c.l.b16 %v4270
    %v4534 = vunpack.c.l.b16 %v4271
    %v4535 = vunpack.c.l.b16 %v4272
    %v4536 = vunpack.c.l.b16 %v4273
    %v4537 = vunpack.c.l.b16 %v4274
    %v4538 = vunpack.c.l.b16 %v4275
    %v4539 = vunpack.c.l.b16 %v4276
    %v4540 = vunpack.c.l.b16 %v4277
    %v4541 = vunpack.c.l.b16 %v4278
    %v4542 = vunpack.c.l.b16 %v4279
    %v4543 = vunpack.c.l.b16 %v4280
    %v4544 = vunpack.c.l.b16 %v4281
    %v4545 = vunpack.c.l.b16 %v4282
    %v4546 = vunpack.c.l.b16 %v4283
    %v4547 = vunpack.c.l.b16 %v4284
    %v4548 = vunpack.c.l.b16 %v4285
    %v4549 = vunpack.c.l.b16 %v4286
    %v4550 = vunpack.c.l.b16 %v4287
    %v4551 = vunpack.c.l.b16 %v4288
    %v4552 = vunpack.c.l.b16 %v4289
    %v4553 = vunpack.c.l.b16 %v4290
    %v4554 = vunpack.c.l.b16 %v4291
    %v4555 = vunpack.c.l.b16 %v4292
    %v4556 = vunpack.c.l.b16 %v4293
    %v4557 = vunpack.c.l.b16 %v4294
    %v4558 = vunpack.c.l.b16 %v4295
    %v4559 = vunpack.c.l.b16 %v4296
    %v4560 = vunpack.c.l.b16 %v4297
    %v4561 = vunpack.c.l.b16 %v4298
    %v4562 = vunpack.c.l.b16 %v4299
    %v4563 = vunpack.c.l.b16 %v4300
    %v4564 = vunpack.c.l.b16 %v4301
    %v4565 = vunpack.c.l.b16 %v4302
    %v4566 = vunpack.c.l.b16 %v4303
    %v4567 = vunpack.c.l.b16 %v4304
    %v4568 = vunpack.c.l.b16 %v4305
    %v4569 = vunpack.c.l.b16 %v4306
    %v4570 = vunpack.c.l.b16 %v4307
    %v4571 = vunpack.c.l.b16 %v4308
    %v4572 = vunpack.c.l.b16 %v4309
    %v4573 = vunpack.c.l.b16 %v4310
    %v4574 = vunpack.c.l.b16 %v4311
    %v4575 = vunpack.c.l.b16 %v4312
    %v4576 = vunpack.c.l.b16 %v4313
    %v4577 = vunpack.c.l.b16 %v4314
    %v4578 = vunpack.c.l.b16 %v4315
    %v4579 = vunpack.c.l.b16 %v4316
    %v4580 = vunpack.c.l.b16 %v4317
    %v4581 = vunpack.c.l.b16 %v4318
    %v4582 = vunpack.c.l.b16 %v4319
    %v4583 = vunpack.c.l.b16 %v4320
    %v4584 = vunpack.c.l.b16 %v4321
    %v4585 = vunpack.c.l.b16 %v4322
    %v4586 = vunpack.c.l.b16 %v4323
    %v4587 = vunpack.c.l.b16 %v4324
    %v4588 = vunpack.c.l.b16 %v4325
    %v4589 = vunpack.c.l.b16 %v4326
    %v4590 = vunpack.c.l.b16 %v4327
    %v4591 = vunpack.c.l.b16 %v4328
    %v4592 = vunpack.c.l.b16 %v4329
    %v4593 = vunpack.c.l.b16 %v4330
    %v4594 = vunpack.c.l.b16 %v4331
    %v4595 = vunpack.c.l.b16 %v4332
    %v4596 = vunpack.c.l.b16 %v4333
    %v4597 = vunpack.c.l.b16 %v4334
    %v4598 = vunpack.c.l.b16 %v4335
    %v4599 = vunpack.c.l.b16 %v4336
    %v4600 = vunpack.c.l.b16 %v4337
    %v4601 = vunpack.c.l.b16 %v4338
    %v4602 = vunpack.c.l.b16 %v4339
    %v4603 = vunpack.c.l.b16 %v4340
    %v4604 = vunpack.c.l.b16 %v4341
    %v4605 = vunpack.c.l.b16 %v4342
    %v4606 = vunpack.c.l.b16 %v4343
    %v4607 = vunpack.c.l.b16 %v4344
    %v4608 = vunpack.c.l.b16 %v4345
    %v4609 = vunpack.c.l.b16 %v4346
    %v4610 = vunpack.c.l.b16 %v4347
    %v4611 = vunpack.c.l.b16 %v4348
    %v4612 = vunpack.c.l.b16 %v4349
    %v4613 = vunpack.c.l.b16 %v4350
    %v4614 = vunpack.c.l.b16 %v4351
    %v4615 = vunpack.c.l.b16 %v4352
    %v4616 = vpack.c.b16 %v4489, %v4488
    %v4617 = vpack.c.b16 %v4491, %v4490
    %v4618 = vpack.c.b16 %v4493, %v4492
    %v4619 = vpack.c.b16 %v4495, %v4494
    %v4620 = vpack.c.b16 %v4497, %v4496
    %v4621 = vpack.c.b16 %v4499, %v4498
    %v4622 = vpack.c.b16 %v4501, %v4500
    %v4623 = vpack.c.b16 %v4503, %v4502
    %v4624 = vpack.c.b16 %v4505, %v4504
    %v4625 = vpack.c.b16 %v4507, %v4506
    %v4626 = vpack.c.b16 %v4509, %v4508
    %v4627 = vpack.c.b16 %v4511, %v4510
    %v4628 = vpack.c.b16 %v4513, %v4512
    %v4629 = vpack.c.b16 %v4515, %v4514
    %v4630 = vpack.c.b16 %v4517, %v4516
    %v4631 = vpack.c.b16 %v4519, %v4518
    %v4632 = vpack.c.b16 %v4521, %v4520
    %v4633 = vpack.c.b16 %v4523, %v4522
    %v4634 = vpack.c.b16 %v4525, %v4524
    %v4635 = vpack.c.b16 %v4527, %v4526
    %v4636 = vpack.c.b16 %v4529, %v4528
    %v4637 = vpack.c.b16 %v4531, %v4530
    %v4638 = vpack.c.b16 %v4533, %v4532
    %v4639 = vpack.c.b16 %v4535, %v4534
    %v4640 = vpack.c.b16 %v4537, %v4536
    %v4641 = vpack.c.b16 %v4539, %v4538
    %v4642 = vpack.c.b16 %v4541, %v4540
    %v4643 = vpack.c.b16 %v4543, %v4542
    %v4644 = vpack.c.b16 %v4545, %v4544
    %v4645 = vpack.c.b16 %v4547, %v4546
    %v4646 = vpack.c.b16 %v4549, %v4548
    %v4647 = vpack.c.b16 %v4551, %v4550
    %v4648 = vpack.c.b16 %v4553, %v4552
    %v4649 = vpack.c.b16 %v4555, %v4554
    %v4650 = vpack.c.b16 %v4557, %v4556
    %v4651 = vpack.c.b16 %v4559, %v4558
    %v4652 = vpack.c.b16 %v4561, %v4560
    %v4653 = vpack.c.b16 %v4563, %v4562
    %v4654 = vpack.c.b16 %v4565, %v4564
    %v4655 = vpack.c.b16 %v4567, %v4566
    %v4656 = vpack.c.b16 %v4569, %v4568
    %v4657 = vpack.c.b16 %v4571, %v4570
    %v4658 = vpack.c.b16 %v4573, %v4572
    %v4659 = vpack.c.b16 %v4575, %v4574
    %v4660 = vpack.c.b16 %v4577, %v4576
    %v4661 = vpack.c.b16 %v4579, %v4578
    %v4662 = vpack.c.b16 %v4581, %v4580
    %v4663 = vpack.c.b16 %v4583, %v4582
    %v4664 = vpack.c.b16 %v4585, %v4584
    %v4665 = vpack.c.b16 %v4587, %v4586
    %v4666 = vpack.c.b16 %v4589, %v4588
    %v4667 = vpack.c.b16 %v4591, %v4590
    %v4668 = vpack.c.b16 %v4593, %v4592
    %v4669 = vpack.c.b16 %v4595, %v4594
    %v4670 = vpack.c.b16 %v4597, %v4596
    %v4671 = vpack.c.b16 %v4599, %v4598
    %v4672 = vpack.c.b16 %v4601, %v4600
    %v4673 = vpack.c.b16 %v4603, %v4602
    %v4674 = vpack.c.b16 %v4605, %v4604
    %v4675 = vpack.c.b16 %v4607, %v4606
    %v4676 = vpack.c.b16 %v4609, %v4608
    %v4677 = vpack.c.b16 %v4611, %v4610
    %v4678 = vpack.c.b16 %v4613, %v4612
    %v4679 = vpack.c.b16 %v4615, %v4614
    %4744 = vmatprep.subr.bf16.mxu0 0
    %4745 = vmatpush1.bf16.msra.mxu0 %v4616
    %4746 = vmatprep.subr.bf16.mxu0 0
    %4747 = vmatpush1.bf16.msra.mxu0 %v4617
    %4748 = vmatprep.subr.bf16.mxu0 0
    %4749 = vmatpush1.bf16.msra.mxu0 %v4618
    %4750 = vmatprep.subr.bf16.mxu0 0
    %4751 = vmatpush1.bf16.msra.mxu0 %v4619
    %4752 = vmatprep.subr.bf16.mxu0 0
    %4753 = vmatpush1.bf16.msra.mxu0 %v4620
    %4754 = vmatprep.subr.bf16.mxu0 0
    %4755 = vmatpush1.bf16.msra.mxu0 %v4621
    %4756 = vmatprep.subr.bf16.mxu0 0
    %4757 = vmatpush1.bf16.msra.mxu0 %v4622
    %4758 = vmatprep.subr.bf16.mxu0 0
    %4759 = vmatpush1.bf16.msra.mxu0 %v4623
    %4760 = vmatprep.subr.bf16.mxu0 0
    %4761 = vmatpush1.bf16.msra.mxu0 %v4624
    %4762 = vmatprep.subr.bf16.mxu0 0
    %4763 = vmatpush1.bf16.msra.mxu0 %v4625
    %4764 = vmatprep.subr.bf16.mxu0 0
    %4765 = vmatpush1.bf16.msra.mxu0 %v4626
    %4766 = vmatprep.subr.bf16.mxu0 0
    %4767 = vmatpush1.bf16.msra.mxu0 %v4627
    %4768 = vmatprep.subr.bf16.mxu0 0
    %4769 = vmatpush1.bf16.msra.mxu0 %v4628
    %4770 = vmatprep.subr.bf16.mxu0 0
    %4771 = vmatpush1.bf16.msra.mxu0 %v4629
    %4772 = vmatprep.subr.bf16.mxu0 0
    %4773 = vmatpush1.bf16.msra.mxu0 %v4630
    %4774 = vmatprep.subr.bf16.mxu0 0
    %4775 = vmatpush1.bf16.msra.mxu0 %v4631
    %4776 = vmatprep.mubr.bf16.mxu0 %v4218
    %4777 = vmatmul.mubr.bf16.gmra.mrb[0].mxu0 %v4217
    %v4778 = vpop.f32.mrb[0].mxu0
    %v4779 = vadd.f32 %v4358, %v4778
    %v4780 = vpop.f32.mrb[0].mxu0
    %v4781 = vpop.f32.mrb[0].mxu0
    %v4782 = vpop.f32.mrb[0].mxu0
    %4783 = vdwg.mxu0
    %4784 = vmatprep.subr.bf16.mxu0 0
    %4785 = vmatpush1.bf16.msra.mxu0 %v4632
    %4786 = vmatprep.subr.bf16.mxu0 0
    %4787 = vmatpush1.bf16.msra.mxu0 %v4633
    %4788 = vmatprep.subr.bf16.mxu0 0
    %4789 = vmatpush1.bf16.msra.mxu0 %v4634
    %4790 = vmatprep.subr.bf16.mxu0 0
    %4791 = vmatpush1.bf16.msra.mxu0 %v4635
    %4792 = vmatprep.subr.bf16.mxu0 0
    %4793 = vmatpush1.bf16.msra.mxu0 %v4636
    %4794 = vmatprep.subr.bf16.mxu0 0
    %4795 = vmatpush1.bf16.msra.mxu0 %v4637
    %4796 = vmatprep.subr.bf16.mxu0 0
    %4797 = vmatpush1.bf16.msra.mxu0 %v4638
    %4798 = vmatprep.subr.bf16.mxu0 0
    %4799 = vmatpush1.bf16.msra.mxu0 %v4639
    %4800 = vmatprep.subr.bf16.mxu0 0
    %4801 = vmatpush1.bf16.msra.mxu0 %v4640
    %4802 = vmatprep.subr.bf16.mxu0 0
    %4803 = vmatpush1.bf16.msra.mxu0 %v4641
    %4804 = vmatprep.subr.bf16.mxu0 0
    %4805 = vmatpush1.bf16.msra.mxu0 %v4642
    %4806 = vmatprep.subr.bf16.mxu0 0
    %4807 = vmatpush1.bf16.msra.mxu0 %v4643
    %4808 = vmatprep.subr.bf16.mxu0 0
    %4809 = vmatpush1.bf16.msra.mxu0 %v4644
    %4810 = vmatprep.subr.bf16.mxu0 0
    %4811 = vmatpush1.bf16.msra.mxu0 %v4645
    %4812 = vmatprep.subr.bf16.mxu0 0
    %4813 = vmatpush1.bf16.msra.mxu0 %v4646
    %4814 = vmatprep.subr.bf16.mxu0 0
    %4815 = vmatpush1.bf16.msra.mxu0 %v4647
    %4816 = vmatprep.mubr.bf16.mxu0 %v4220
    %4817 = vmatmul.mubr.bf16.gmra.mrb[0].mxu0 %v4219
    %v4818 = vpop.f32.mrb[0].mxu0
    %v4819 = vadd.f32 %v4779, %v4818
    %v4820 = vpop.f32.mrb[0].mxu0
    %v4821 = vpop.f32.mrb[0].mxu0
    %v4822 = vpop.f32.mrb[0].mxu0
    %4823 = vdwg.mxu0
    %4824 = vmatprep.subr.bf16.mxu0 0
    %4825 = vmatpush1.bf16.msra.mxu0 %v4648
    %4826 = vmatprep.subr.bf16.mxu0 0
    %4827 = vmatpush1.bf16.msra.mxu0 %v4649
    %4828 = vmatprep.subr.bf16.mxu0 0
    %4829 = vmatpush1.bf16.msra.mxu0 %v4650
    %4830 = vmatprep.subr.bf16.mxu0 0
    %4831 = vmatpush1.bf16.msra.mxu0 %v4651
    %4832 = vmatprep.subr.bf16.mxu0 0
    %4833 = vmatpush1.bf16.msra.mxu0 %v4652
    %4834 = vmatprep.subr.bf16.mxu0 0
    %4835 = vmatpush1.bf16.msra.mxu0 %v4653
    %4836 = vmatprep.subr.bf16.mxu0 0
    %4837 = vmatpush1.bf16.msra.mxu0 %v4654
    %4838 = vmatprep.subr.bf16.mxu0 0
    %4839 = vmatpush1.bf16.msra.mxu0 %v4655
    %4840 = vmatprep.subr.bf16.mxu0 0
    %4841 = vmatpush1.bf16.msra.mxu0 %v4656
    %4842 = vmatprep.subr.bf16.mxu0 0
    %4843 = vmatpush1.bf16.msra.mxu0 %v4657
    %4844 = vmatprep.subr.bf16.mxu0 0
    %4845 = vmatpush1.bf16.msra.mxu0 %v4658
    %4846 = vmatprep.subr.bf16.mxu0 0
    %4847 = vmatpush1.bf16.msra.mxu0 %v4659
    %4848 = vmatprep.subr.bf16.mxu0 0
    %4849 = vmatpush1.bf16.msra.mxu0 %v4660
    %4850 = vmatprep.subr.bf16.mxu0 0
    %4851 = vmatpush1.bf16.msra.mxu0 %v4661
    %4852 = vmatprep.subr.bf16.mxu0 0
    %4853 = vmatpush1.bf16.msra.mxu0 %v4662
    %4854 = vmatprep.subr.bf16.mxu0 0
    %4855 = vmatpush1.bf16.msra.mxu0 %v4663
    %4856 = vmatprep.mubr.bf16.mxu0 %v4222
    %4857 = vmatmul.mubr.bf16.gmra.mrb[0].mxu0 %v4221
    %v4858 = vpop.f32.mrb[0].mxu0
    %v4859 = vadd.f32 %v4819, %v4858
    %v4860 = vpop.f32.mrb[0].mxu0
    %v4861 = vpop.f32.mrb[0].mxu0
    %v4862 = vpop.f32.mrb[0].mxu0
    %4863 = vdwg.mxu0
    %4864 = vmatprep.subr.bf16.mxu0 0
    %4865 = vmatpush1.bf16.msra.mxu0 %v4664
    %4866 = vmatprep.subr.bf16.mxu0 0
    %4867 = vmatpush1.bf16.msra.mxu0 %v4665
    %4868 = vmatprep.subr.bf16.mxu0 0
    %4869 = vmatpush1.bf16.msra.mxu0 %v4666
    %4870 = vmatprep.subr.bf16.mxu0 0
    %4871 = vmatpush1.bf16.msra.mxu0 %v4667
    %4872 = vmatprep.subr.bf16.mxu0 0
    %4873 = vmatpush1.bf16.msra.mxu0 %v4668
    %4874 = vmatprep.subr.bf16.mxu0 0
    %4875 = vmatpush1.bf16.msra.mxu0 %v4669
    %4876 = vmatprep.subr.bf16.mxu0 0
    %4877 = vmatpush1.bf16.msra.mxu0 %v4670
    %4878 = vmatprep.subr.bf16.mxu0 0
    %4879 = vmatpush1.bf16.msra.mxu0 %v4671
    %4880 = vmatprep.subr.bf16.mxu0 0
    %4881 = vmatpush1.bf16.msra.mxu0 %v4672
    %4882 = vmatprep.subr.bf16.mxu0 0
    %4883 = vmatpush1.bf16.msra.mxu0 %v4673
    %4884 = vmatprep.subr.bf16.mxu0 0
    %4885 = vmatpush1.bf16.msra.mxu0 %v4674
    %4886 = vmatprep.subr.bf16.mxu0 0
    %4887 = vmatpush1.bf16.msra.mxu0 %v4675
    %4888 = vmatprep.subr.bf16.mxu0 0
    %4889 = vmatpush1.bf16.msra.mxu0 %v4676
    %4890 = vmatprep.subr.bf16.mxu0 0
    %4891 = vmatpush1.bf16.msra.mxu0 %v4677
    %4892 = vmatprep.subr.bf16.mxu0 0
    %4893 = vmatpush1.bf16.msra.mxu0 %v4678
    %4894 = vmatprep.subr.bf16.mxu0 0
    %4895 = vmatpush1.bf16.msra.mxu0 %v4679
    %4896 = vmatprep.mubr.bf16.mxu0 %v4224
    %4897 = vmatmul.mubr.bf16.gmra.mrb[0].mxu0 %v4223
    %v4898 = vpop.f32.mrb[0].mxu0
    %v4899 = vadd.f32 %v4859, %v4898
    %v4900 = vpop.f32.mrb[0].mxu0
    %v4901 = vpop.f32.mrb[0].mxu0
    %v4902 = vpop.f32.mrb[0].mxu0
    %4903 = vdwg.mxu0
    %v4904 = vmax.f32 %v4899, 0.0
    %4905 = vst [vmem:[%s7] sm:$0xff] %v4904
    // Predicated region
    $region58: #{testmodel2_forward.1} parent=1 // pred_check
      _
    $region59: #{testmodel2_forward.1} parent=1 // pred_check_branch
      %4907 = sbr.rel (0) target = $region61
    $region60: #{testmodel2_forward.1} parent=1 // pred_region
      _
    $region61: #{testmodel2_forward.1} parent=1 // pred_fallthru
      _
    // Predicated region
    $region62: #{testmodel2_forward.1} parent=1 // pred_check
      _
    $region63: #{testmodel2_forward.1} parent=1 // pred_check_branch
      %4909 = sbr.rel (0) target = $region65
    $region64: #{testmodel2_forward.1} parent=1 // pred_region
      _
    $region65: #{testmodel2_forward.1} parent=1 // pred_fallthru
      _
    %4910 = vsyncpa [#allocation3], 1
    %4911 = vsyncpa [#allocation5], 1
    %4912 = vsyncpa [#allocation8], 1
    %4913 = vsyncpa [#allocation11], 1

</llo_original>
